<compile_context>
chip_gen: v7x
topology: tpu7x:2x2x1
jax: 0.10.0
libtpu: 0.0.40
codegen_flags: <defaults>
</compile_context>

<pallas_src>
import math

import jax
import jax.numpy as jnp
from jax import lax
from jax.experimental import pallas as pl
from jax.experimental.pallas import tpu as pltpu

EMBED = 768
NUM_HEADS = 8
HEAD_DIM = 64
KQV = NUM_HEADS * HEAD_DIM               # 512
INV_SCALE = math.sqrt(0.25 / HEAD_DIM)   # 0.0625 (exact)
SCALE = 1.0 / INV_SCALE                  # 16.0   (exact power of two)

ROW_TILE = 256                           # attention rows per grid step
N_STEPS = KQV // ROW_TILE                # 2
COL_CHUNK = 128                          # softmax column chunk (vreg budget)
N_COL_CHUNKS = KQV // COL_CHUNK          # 4


def _attn_kernel(q_ref, wqkv_ref, bqkv_ref, wproj_ref, bproj_ref, out_ref,
                 a_sc, b_sc, vo_sc):
    # q_ref:     [1, EMBED]      f32  (the `query` parameter, flattened)
    # wqkv_ref:  [EMBED, 3*KQV]  bf16 (first 1536 cols of qkv.weight^T)
    # bqkv_ref:  [1, 3*KQV]      f32
    # wproj_ref: [ROW_TILE, EMBED] bf16 (row-tile of proj_out.weight^T)
    # bproj_ref: [1, EMBED]      f32
    # out_ref:   [1, EMBED]      f32  (accumulated across the grid steps)
    # a_sc/b_sc/vo_sc: [2, KQV] f32 scratch, persistent across grid steps
    step = pl.program_id(0)

    @pl.when(step == 0)
    def _init():
        q_bf = q_ref[...].astype(jnp.bfloat16)                            # [1,768]
        qkv = jnp.dot(q_bf, wqkv_ref[...],
                      preferred_element_type=jnp.float32) + bqkv_ref[...]  # [1,1536]
        q_s = qkv[:, 0 * KQV:1 * KQV] * SCALE                             # [1,512]
        k = qkv[:, 1 * KQV:2 * KQV]                                       # [1,512]
        v = qkv[:, 2 * KQV:3 * KQV]                                       # [1,512]

        # Rank-1 logits: scaled[i,j] = q_s[i]*k[j]; per-row max is
        # q_s[i]*max(k) when q_s[i] >= 0 else q_s[i]*min(k).
        kmax = jnp.max(k, axis=-1, keepdims=True)                         # [1,1]
        kmin = jnp.min(k, axis=-1, keepdims=True)                         # [1,1]
        m = jnp.where(q_s >= 0.0, q_s * kmax, q_s * kmin)                 # [1,512]

        ones = jnp.ones((1, KQV), jnp.float32)
        # Direct row writes (no concatenate temporaries).
        a_sc[0:1, :] = q_s
        a_sc[1:2, :] = -m
        b_sc[0:1, :] = k
        b_sc[1:2, :] = ones
        vo_sc[0:1, :] = v
        vo_sc[1:2, :] = ones

        out_ref[...] = bproj_ref[...]                                     # init acc

    r0 = pl.multiple_of(step * ROW_TILE, ROW_TILE)
    a_tile = a_sc[:, pl.ds(r0, ROW_TILE)]                                 # [2,256]

    # Deferred-normalization softmax, chunked over the 512 key columns so the
    # live exp tile stays at [ROW_TILE, COL_CHUNK] f32 = 32 vregs (no spills).
    nd = jnp.zeros((2, ROW_TILE), jnp.float32)
    for c in range(N_COL_CHUNKS):
        c0 = c * COL_CHUNK
        b_chunk = b_sc[:, c0:c0 + COL_CHUNK]                              # [2,128]
        vo_chunk = vo_sc[:, c0:c0 + COL_CHUNK]                            # [2,128]
        # shifted[r,j] = q_s[r0+r]*k[c0+j] - m[r0+r]: outer product and max
        # subtraction in one K=2 MXU contraction.
        shifted = lax.dot_general(a_tile, b_chunk,
                                  (((0,), (0,)), ((), ())),
                                  preferred_element_type=jnp.float32)     # [256,128]
        e = jnp.exp(shifted)                                              # [256,128]
        # nd[0,r] += sum_j v[j]*e[r,j] (numerator); nd[1,r] += sum_j e[r,j].
        nd = nd + lax.dot_general(vo_chunk, e,
                                  (((1,), (1,)), ((), ())),
                                  preferred_element_type=jnp.float32)     # [2,256]

    out_row = nd[0:1, :] * pl.reciprocal(nd[1:2, :], approx=True)         # [1,256]

    # TODO(synk): dropout(p=0.1, training=True) treated as identity.

    out_ref[...] += jnp.dot(out_row.astype(jnp.bfloat16), wproj_ref[...],
                            preferred_element_type=jnp.float32)           # [1,768]


@jax.jit
def model_forward(query, key_p, value_p, wqkv_bf, bqkv, wproj_bf, bproj):
    """query/key_p/value_p: [1,1,EMBED] f32 parameters (as in the torch module).
    wqkv_bf: [EMBED, 4*KQV] bf16; bqkv: [4*KQV] f32;
    wproj_bf: [KQV, EMBED] bf16; bproj: [EMBED] f32."""
    q2d = query.reshape(1, EMBED)
    bqkv2d = bqkv.reshape(1, 4 * KQV)
    bproj2d = bproj.reshape(1, EMBED)
    result = pl.pallas_call(
        _attn_kernel,
        out_shape=jax.ShapeDtypeStruct((1, EMBED), jnp.float32),
        grid_spec=pltpu.PrefetchScalarGridSpec(
            num_scalar_prefetch=0,
            grid=(N_STEPS,),
            in_specs=[
                pl.BlockSpec((1, EMBED), lambda i: (0, 0)),
                # Only the first 3*KQV columns of the qkv weight/bias are ever
                # used; the block never touches the 4th 512-column group.
                pl.BlockSpec((EMBED, 3 * KQV), lambda i: (0, 0)),
                pl.BlockSpec((1, 3 * KQV), lambda i: (0, 0)),
                # proj_out weight streamed in ROW_TILE-row tiles so its DMA
                # overlaps the per-tile exp compute.
                pl.BlockSpec((ROW_TILE, EMBED), lambda i: (i, 0)),
                pl.BlockSpec((1, EMBED), lambda i: (0, 0)),
            ],
            out_specs=pl.BlockSpec((1, EMBED), lambda i: (0, 0)),
            scratch_shapes=[
                pltpu.VMEM((2, KQV), jnp.float32),   # [q*scale ; -m]
                pltpu.VMEM((2, KQV), jnp.float32),   # [k ; ones]
                pltpu.VMEM((2, KQV), jnp.float32),   # [v ; ones]
            ],
        ),
        compiler_params=pltpu.CompilerParams(
            dimension_semantics=("arbitrary",),
            vmem_limit_bytes=32 * 1024 * 1024,
        ),
    )(q2d, wqkv_bf, bqkv2d, wproj_bf, bproj2d)
    # torch: result has shape [1, 768]; the parameters are returned unchanged.
    return result, query, key_p, value_p


def _reference(query, wqkv_t, bqkv, wproj_t, bproj):
    """Pure-JAX f32 reference (standard softmax formulation) for validation."""
    q2d = query.reshape(1, EMBED)
    qkv = q2d @ wqkv_t + bqkv
    q, k, v = qkv[:, :KQV], qkv[:, KQV:2 * KQV], qkv[:, 2 * KQV:3 * KQV]
    scaled = (q.T @ k) / INV_SCALE
    attn = jax.nn.softmax(scaled, axis=-1)
    out = attn @ v.T                      # [512, 1]
    return out.T @ wproj_t + bproj        # [1, 768]


if __name__ == "__main__":
    keys = jax.random.split(jax.random.PRNGKey(0), 7)

    # Parameters (deterministic, mimicking torch defaults):
    #   query/key/value ~ U[0,1);  Linear weights/bias ~ U(-1/sqrt(fan_in), +)
    query = jax.random.uniform(keys[0], (1, 1, EMBED), jnp.float32)
    key_p = jax.random.uniform(keys[1], (1, 1, EMBED), jnp.float32)
    value_p = jax.random.uniform(keys[2], (1, 1, EMBED), jnp.float32)

    b_qkv = 1.0 / math.sqrt(EMBED)
    wqkv_t = jax.random.uniform(keys[3], (EMBED, 4 * KQV), jnp.float32,
                                minval=-b_qkv, maxval=b_qkv)
    bqkv = jax.random.uniform(keys[4], (4 * KQV,), jnp.float32,
                              minval=-b_qkv, maxval=b_qkv)

    b_proj = 1.0 / math.sqrt(KQV)
    wproj_t = jax.random.uniform(keys[5], (KQV, EMBED), jnp.float32,
                                 minval=-b_proj, maxval=b_proj)
    bproj = jax.random.uniform(keys[6], (EMBED,), jnp.float32,
                               minval=-b_proj, maxval=b_proj)

    # Weights are *stored* in bf16 (cast once, outside the forward pass).
    wqkv_bf = wqkv_t.astype(jnp.bfloat16)
    wproj_bf = wproj_t.astype(jnp.bfloat16)

    result, q_out, k_out, v_out = model_forward(
        query, key_p, value_p, wqkv_bf, bqkv, wproj_bf, bproj)
    jax.block_until_ready((result, q_out, k_out, v_out))

    # Reference computed in f32 from the bf16-rounded weights (so the check
    # validates the kernel math; residual diff is query/out_row bf16 rounding
    # inside the kernel and the approx reciprocal).
    ref = _reference(query,
                     wqkv_bf.astype(jnp.float32), bqkv,
                     wproj_bf.astype(jnp.float32), bproj)
    assert result.shape == (1, EMBED)
    assert jnp.allclose(result, ref, rtol=2e-2, atol=2e-2), "mismatch vs reference"

    print("KERNEL_OK")
</pallas_src>

<mosaic_0001>
module attributes {stable_mosaic.version = 11 : i64} {
  func.func @_attn_kernel(%arg0: i32, %arg1: memref<1x768xf32, #tpu.memory_space<vmem>>, %arg2: memref<768x1536xbf16, #tpu.memory_space<vmem>>, %arg3: memref<1x1536xf32, #tpu.memory_space<vmem>>, %arg4: memref<256x768xbf16, #tpu.memory_space<vmem>>, %arg5: memref<1x768xf32, #tpu.memory_space<vmem>>, %arg6: memref<1x768xf32, #tpu.memory_space<vmem>>, %arg7: memref<2x512xf32, #tpu.memory_space<vmem>>, %arg8: memref<2x512xf32, #tpu.memory_space<vmem>>, %arg9: memref<2x512xf32, #tpu.memory_space<vmem>>) attributes {dimension_semantics = [#tpu.dimension_semantics<arbitrary>], iteration_bounds = array<i64: 2>, scalar_prefetch = 0 : i64, scratch_operands = 3 : i64, tpu.core_type = #tpu.core_type<tc>, window_params = [{pipeline_mode = #tpu.pipeline_mode<synchronous>, transform_indices = @transform_0, window_bounds = array<i64: 1, 768>}, {transform_indices = @transform_1, window_bounds = array<i64: 768, 1536>}, {transform_indices = @transform_2, window_bounds = array<i64: 1, 1536>}, {transform_indices = @transform_3, window_bounds = array<i64: 256, 768>}, {pipeline_mode = #tpu.pipeline_mode<synchronous>, transform_indices = @transform_4, window_bounds = array<i64: 1, 768>}, {pipeline_mode = #tpu.pipeline_mode<synchronous>, transform_indices = @transform_5, window_bounds = array<i64: 1, 768>}]} {
    %c0_i32 = arith.constant 0 : i32
    %0 = arith.cmpi eq, %arg0, %c0_i32 : i32
    %1 = arith.extui %0 : i1 to i32
    %c0_i32_0 = arith.constant 0 : i32
    %2 = arith.cmpi ne, %1, %c0_i32_0 : i32
    scf.if %2 {
      %c0_29 = arith.constant 0 : index
      %c0_30 = arith.constant 0 : index
      %42 = vector.load %arg1[%c0_29, %c0_30] : memref<1x768xf32, #tpu.memory_space<vmem>>, vector<1x768xf32>
      %43 = arith.truncf %42 : vector<1x768xf32> to vector<1x768xbf16>
      %c0_31 = arith.constant 0 : index
      %c0_32 = arith.constant 0 : index
      %44 = vector.load %arg2[%c0_31, %c0_32] : memref<768x1536xbf16, #tpu.memory_space<vmem>>, vector<768x1536xbf16>
      %cst_33 = arith.constant dense<0.000000e+00> : vector<1x1536xf32>
      %45 = tpu.matmul %43, %44, %cst_33 {dimension_numbers = #tpu.dot_dimension_numbers<[1], [0], [0], [1], [0, 0, 1, 1], [], []>} : vector<1x768xbf16>, vector<768x1536xbf16>, vector<1x1536xf32> -> vector<1x1536xf32>
      %c0_34 = arith.constant 0 : index
      %c0_35 = arith.constant 0 : index
      %46 = vector.load %arg3[%c0_34, %c0_35] : memref<1x1536xf32, #tpu.memory_space<vmem>>, vector<1x1536xf32>
      %47 = arith.addf %45, %46 : vector<1x1536xf32>
      %48 = vector.extract_strided_slice %47 {offsets = [0, 0], sizes = [1, 512], strides = [1, 1]} : vector<1x1536xf32> to vector<1x512xf32>
      %cst_36 = arith.constant 1.600000e+01 : f32
      %49 = vector.broadcast %cst_36 : f32 to vector<1x512xf32>
      %50 = arith.mulf %48, %49 : vector<1x512xf32>
      %51 = vector.extract_strided_slice %47 {offsets = [0, 512], sizes = [1, 512], strides = [1, 1]} : vector<1x1536xf32> to vector<1x512xf32>
      %52 = vector.extract_strided_slice %47 {offsets = [0, 1024], sizes = [1, 512], strides = [1, 1]} : vector<1x1536xf32> to vector<1x512xf32>
      %cst_37 = arith.constant dense<0xFF800000> : vector<1xf32>
      %53 = vector.multi_reduction <maximumf>, %51, %cst_37 [1] : vector<1x512xf32> to vector<1xf32>
      %54 = vector.shape_cast %53 : vector<1xf32> to vector<1x1xf32>
      %cst_38 = arith.constant dense<0x7F800000> : vector<1xf32>
      %55 = vector.multi_reduction <minimumf>, %51, %cst_38 [1] : vector<1x512xf32> to vector<1xf32>
      %56 = vector.shape_cast %55 : vector<1xf32> to vector<1x1xf32>
      %cst_39 = arith.constant 0.000000e+00 : f32
      %57 = vector.broadcast %cst_39 : f32 to vector<1x512xf32>
      %58 = arith.cmpf oge, %50, %57 : vector<1x512xf32>
      %59 = vector.broadcast %54 : vector<1x1xf32> to vector<1x512xf32>
      %60 = arith.mulf %50, %59 : vector<1x512xf32>
      %61 = vector.broadcast %56 : vector<1x1xf32> to vector<1x512xf32>
      %62 = arith.mulf %50, %61 : vector<1x512xf32>
      %63 = arith.select %58, %60, %62 : vector<1x512xi1>, vector<1x512xf32>
      %cst_40 = arith.constant 1.000000e+00 : f32
      %64 = vector.broadcast %cst_40 : f32 to vector<1x512xf32>
      %c0_41 = arith.constant 0 : index
      %c0_42 = arith.constant 0 : index
      %65 = vector.load %arg7[%c0_41, %c0_42] : memref<2x512xf32, #tpu.memory_space<vmem>>, vector<1x512xf32>
      tpu.vector_store %arg7[%c0_41, %c0_42], %50 {strides = array<i32>} : memref<2x512xf32, #tpu.memory_space<vmem>>, vector<1x512xf32>,
      %cst_43 = arith.constant 0.000000e+00 : f32
      %66 = vector.broadcast %cst_43 : f32 to vector<1x512xf32>
      %67 = arith.subf %66, %63 : vector<1x512xf32>
      %c1 = arith.constant 1 : index
      %c0_44 = arith.constant 0 : index
      %68 = vector.load %arg7[%c1, %c0_44] : memref<2x512xf32, #tpu.memory_space<vmem>>, vector<1x512xf32>
      tpu.vector_store %arg7[%c1, %c0_44], %67 {strides = array<i32>} : memref<2x512xf32, #tpu.memory_space<vmem>>, vector<1x512xf32>,
      %c0_45 = arith.constant 0 : index
      %c0_46 = arith.constant 0 : index
      %69 = vector.load %arg8[%c0_45, %c0_46] : memref<2x512xf32, #tpu.memory_space<vmem>>, vector<1x512xf32>
      tpu.vector_store %arg8[%c0_45, %c0_46], %51 {strides = array<i32>} : memref<2x512xf32, #tpu.memory_space<vmem>>, vector<1x512xf32>,
      %c1_47 = arith.constant 1 : index
      %c0_48 = arith.constant 0 : index
      %70 = vector.load %arg8[%c1_47, %c0_48] : memref<2x512xf32, #tpu.memory_space<vmem>>, vector<1x512xf32>
      tpu.vector_store %arg8[%c1_47, %c0_48], %64 {strides = array<i32>} : memref<2x512xf32, #tpu.memory_space<vmem>>, vector<1x512xf32>,
      %c0_49 = arith.constant 0 : index
      %c0_50 = arith.constant 0 : index
      %71 = vector.load %arg9[%c0_49, %c0_50] : memref<2x512xf32, #tpu.memory_space<vmem>>, vector<1x512xf32>
      tpu.vector_store %arg9[%c0_49, %c0_50], %52 {strides = array<i32>} : memref<2x512xf32, #tpu.memory_space<vmem>>, vector<1x512xf32>,
      %c1_51 = arith.constant 1 : index
      %c0_52 = arith.constant 0 : index
      %72 = vector.load %arg9[%c1_51, %c0_52] : memref<2x512xf32, #tpu.memory_space<vmem>>, vector<1x512xf32>
      tpu.vector_store %arg9[%c1_51, %c0_52], %64 {strides = array<i32>} : memref<2x512xf32, #tpu.memory_space<vmem>>, vector<1x512xf32>,
      %c0_53 = arith.constant 0 : index
      %c0_54 = arith.constant 0 : index
      %73 = vector.load %arg5[%c0_53, %c0_54] : memref<1x768xf32, #tpu.memory_space<vmem>>, vector<1x768xf32>
      %c0_55 = arith.constant 0 : index
      %c0_56 = arith.constant 0 : index
      %74 = vector.load %arg6[%c0_55, %c0_56] : memref<1x768xf32, #tpu.memory_space<vmem>>, vector<1x768xf32>
      tpu.vector_store %arg6[%c0_55, %c0_56], %73 {strides = array<i32>} : memref<1x768xf32, #tpu.memory_space<vmem>>, vector<1x768xf32>,
    } else {
    }
    %c256_i32 = arith.constant 256 : i32
    %3 = arith.muli %arg0, %c256_i32 : i32
    %4 = tpu.assume_multiple %3, 256 : i32
    %c0 = arith.constant 0 : index
    %5 = arith.index_cast %4 : i32 to index
    %6 = vector.load %arg7[%c0, %5] : memref<2x512xf32, #tpu.memory_space<vmem>>, vector<2x256xf32>
    %cst = arith.constant 0.000000e+00 : f32
    %7 = vector.broadcast %cst : f32 to vector<2x256xf32>
    %c0_1 = arith.constant 0 : index
    %c0_2 = arith.constant 0 : index
    %8 = vector.load %arg8[%c0_1, %c0_2] : memref<2x512xf32, #tpu.memory_space<vmem>>, vector<2x128xf32>
    %c0_3 = arith.constant 0 : index
    %c0_4 = arith.constant 0 : index
    %9 = vector.load %arg9[%c0_3, %c0_4] : memref<2x512xf32, #tpu.memory_space<vmem>>, vector<2x128xf32>
    %cst_5 = arith.constant dense<0.000000e+00> : vector<256x128xf32>
    %10 = tpu.matmul %6, %8, %cst_5 {dimension_numbers = #tpu.dot_dimension_numbers<[0], [0], [1], [1], [0, 1, 1, 1], [], []>} : vector<2x256xf32>, vector<2x128xf32>, vector<256x128xf32> -> vector<256x128xf32>
    %11 = math.exp %10 : vector<256x128xf32>
    %cst_6 = arith.constant dense<0.000000e+00> : vector<2x256xf32>
    %12 = tpu.matmul %9, %11, %cst_6 {dimension_numbers = #tpu.dot_dimension_numbers<[1], [1], [0], [0], [0, 0, 1, 0], [], []>} : vector<2x128xf32>, vector<256x128xf32>, vector<2x256xf32> -> vector<2x256xf32>
    %13 = arith.addf %7, %12 : vector<2x256xf32>
    %c0_7 = arith.constant 0 : index
    %c128 = arith.constant 128 : index
    %14 = vector.load %arg8[%c0_7, %c128] : memref<2x512xf32, #tpu.memory_space<vmem>>, vector<2x128xf32>
    %c0_8 = arith.constant 0 : index
    %c128_9 = arith.constant 128 : index
    %15 = vector.load %arg9[%c0_8, %c128_9] : memref<2x512xf32, #tpu.memory_space<vmem>>, vector<2x128xf32>
    %cst_10 = arith.constant dense<0.000000e+00> : vector<256x128xf32>
    %16 = tpu.matmul %6, %14, %cst_10 {dimension_numbers = #tpu.dot_dimension_numbers<[0], [0], [1], [1], [0, 1, 1, 1], [], []>} : vector<2x256xf32>, vector<2x128xf32>, vector<256x128xf32> -> vector<256x128xf32>
    %17 = math.exp %16 : vector<256x128xf32>
    %cst_11 = arith.constant dense<0.000000e+00> : vector<2x256xf32>
    %18 = tpu.matmul %15, %17, %cst_11 {dimension_numbers = #tpu.dot_dimension_numbers<[1], [1], [0], [0], [0, 0, 1, 0], [], []>} : vector<2x128xf32>, vector<256x128xf32>, vector<2x256xf32> -> vector<2x256xf32>
    %19 = arith.addf %13, %18 : vector<2x256xf32>
    %c0_12 = arith.constant 0 : index
    %c256 = arith.constant 256 : index
    %20 = vector.load %arg8[%c0_12, %c256] : memref<2x512xf32, #tpu.memory_space<vmem>>, vector<2x128xf32>
    %c0_13 = arith.constant 0 : index
    %c256_14 = arith.constant 256 : index
    %21 = vector.load %arg9[%c0_13, %c256_14] : memref<2x512xf32, #tpu.memory_space<vmem>>, vector<2x128xf32>
    %cst_15 = arith.constant dense<0.000000e+00> : vector<256x128xf32>
    %22 = tpu.matmul %6, %20, %cst_15 {dimension_numbers = #tpu.dot_dimension_numbers<[0], [0], [1], [1], [0, 1, 1, 1], [], []>} : vector<2x256xf32>, vector<2x128xf32>, vector<256x128xf32> -> vector<256x128xf32>
    %23 = math.exp %22 : vector<256x128xf32>
    %cst_16 = arith.constant dense<0.000000e+00> : vector<2x256xf32>
    %24 = tpu.matmul %21, %23, %cst_16 {dimension_numbers = #tpu.dot_dimension_numbers<[1], [1], [0], [0], [0, 0, 1, 0], [], []>} : vector<2x128xf32>, vector<256x128xf32>, vector<2x256xf32> -> vector<2x256xf32>
    %25 = arith.addf %19, %24 : vector<2x256xf32>
    %c0_17 = arith.constant 0 : index
    %c384 = arith.constant 384 : index
    %26 = vector.load %arg8[%c0_17, %c384] : memref<2x512xf32, #tpu.memory_space<vmem>>, vector<2x128xf32>
    %c0_18 = arith.constant 0 : index
    %c384_19 = arith.constant 384 : index
    %27 = vector.load %arg9[%c0_18, %c384_19] : memref<2x512xf32, #tpu.memory_space<vmem>>, vector<2x128xf32>
    %cst_20 = arith.constant dense<0.000000e+00> : vector<256x128xf32>
    %28 = tpu.matmul %6, %26, %cst_20 {dimension_numbers = #tpu.dot_dimension_numbers<[0], [0], [1], [1], [0, 1, 1, 1], [], []>} : vector<2x256xf32>, vector<2x128xf32>, vector<256x128xf32> -> vector<256x128xf32>
    %29 = math.exp %28 : vector<256x128xf32>
    %cst_21 = arith.constant dense<0.000000e+00> : vector<2x256xf32>
    %30 = tpu.matmul %27, %29, %cst_21 {dimension_numbers = #tpu.dot_dimension_numbers<[1], [1], [0], [0], [0, 0, 1, 0], [], []>} : vector<2x128xf32>, vector<256x128xf32>, vector<2x256xf32> -> vector<2x256xf32>
    %31 = arith.addf %25, %30 : vector<2x256xf32>
    %32 = vector.extract_strided_slice %31 {offsets = [0, 0], sizes = [1, 256], strides = [1, 1]} : vector<2x256xf32> to vector<1x256xf32>
    %33 = vector.extract_strided_slice %31 {offsets = [1, 0], sizes = [1, 256], strides = [1, 1]} : vector<2x256xf32> to vector<1x256xf32>
    %34 = tpu.reciprocal %33 {approx = true} : vector<1x256xf32> -> vector<1x256xf32>
    %35 = arith.mulf %32, %34 : vector<1x256xf32>
    %c0_22 = arith.constant 0 : index
    %c0_23 = arith.constant 0 : index
    %36 = vector.load %arg6[%c0_22, %c0_23] : memref<1x768xf32, #tpu.memory_space<vmem>>, vector<1x768xf32>
    %37 = arith.truncf %35 : vector<1x256xf32> to vector<1x256xbf16>
    %c0_24 = arith.constant 0 : index
    %c0_25 = arith.constant 0 : index
    %38 = vector.load %arg4[%c0_24, %c0_25] : memref<256x768xbf16, #tpu.memory_space<vmem>>, vector<256x768xbf16>
    %cst_26 = arith.constant dense<0.000000e+00> : vector<1x768xf32>
    %39 = tpu.matmul %37, %38, %cst_26 {dimension_numbers = #tpu.dot_dimension_numbers<[1], [0], [0], [1], [0, 0, 1, 1], [], []>} : vector<1x256xbf16>, vector<256x768xbf16>, vector<1x768xf32> -> vector<1x768xf32>
    %40 = arith.addf %36, %39 : vector<1x768xf32>
    %c0_27 = arith.constant 0 : index
    %c0_28 = arith.constant 0 : index
    %41 = vector.load %arg6[%c0_27, %c0_28] : memref<1x768xf32, #tpu.memory_space<vmem>>, vector<1x768xf32>
    tpu.vector_store %arg6[%c0_27, %c0_28], %40 {strides = array<i32>} : memref<1x768xf32, #tpu.memory_space<vmem>>, vector<1x768xf32>,
    return
  }
  func.func @transform_0(%arg0: i32) -> (i32, i32) {
    %c0_i32 = arith.constant 0 : i32
    %c0_i32_0 = arith.constant 0 : i32
    %c0_i32_1 = arith.constant 0 : i32
    return %c0_i32, %c0_i32_0 : i32, i32
  }
  func.func @transform_1(%arg0: i32) -> (i32, i32) {
    %c0_i32 = arith.constant 0 : i32
    %c0_i32_0 = arith.constant 0 : i32
    %c0_i32_1 = arith.constant 0 : i32
    return %c0_i32, %c0_i32_0 : i32, i32
  }
  func.func @transform_2(%arg0: i32) -> (i32, i32) {
    %c0_i32 = arith.constant 0 : i32
    %c0_i32_0 = arith.constant 0 : i32
    %c0_i32_1 = arith.constant 0 : i32
    return %c0_i32, %c0_i32_0 : i32, i32
  }
  func.func @transform_3(%arg0: i32) -> (i32, i32) {
    %c0_i32 = arith.constant 0 : i32
    %c0_i32_0 = arith.constant 0 : i32
    return %arg0, %c0_i32 : i32, i32
  }
  func.func @transform_4(%arg0: i32) -> (i32, i32) {
    %c0_i32 = arith.constant 0 : i32
    %c0_i32_0 = arith.constant 0 : i32
    %c0_i32_1 = arith.constant 0 : i32
    return %c0_i32, %c0_i32_0 : i32, i32
  }
  func.func @transform_5(%arg0: i32) -> (i32, i32) {
    %c0_i32 = arith.constant 0 : i32
    %c0_i32_0 = arith.constant 0 : i32
    %c0_i32_1 = arith.constant 0 : i32
    return %c0_i32, %c0_i32_0 : i32, i32
  }
}

</mosaic_0001>

<llo_original>
// kernel: model_forward.1
$region0: #{model_forward.1}
  #allocation0 [shape = 'u32[]', space=smem, size = 0x4, offset = 0x4, fixed_abs, tag = 'smem constant byte address 0x4 - core index']
  #allocation1 [shape = 'u32[144,128]{1,0:T(1,128)}', space=vmem, size = 0x12000, scoped, tag = 'internal scratch']
  #allocation2 [shape = 'f32[2,512]{1,0:T(2,128)}', space=vmem, size = 0x1000, scoped, tag = 'scratch operand']
  #allocation3 [shape = 'f32[2,512]{1,0:T(2,128)}', space=vmem, size = 0x1000, scoped, tag = 'scratch operand']
  #allocation4 [shape = 'f32[2,512]{1,0:T(2,128)}', space=vmem, size = 0x1000, scoped, tag = 'scratch operand']
  %s0 = inlined_call_operand.hbm [shape: f32[1,768], index: 0, kind: input, shape index: {}]
  %s1 = inlined_call_operand.hbm [shape: bf16[768,2048], index: 1, kind: input, shape index: {}]
  %s2 = inlined_call_operand.hbm [shape: f32[1,2048], index: 2, kind: input, shape index: {}]
  %s3 = inlined_call_operand.hbm [shape: bf16[512,768], index: 3, kind: input, shape index: {}]
  %s4 = inlined_call_operand.vmem [shape: f32[1,768], index: 4, kind: input, shape index: {}]
  %s5 = inlined_call_operand.hbm [shape: f32[1,768], index: 5, kind: output, shape index: {}]
  %s6 = sld [smem:[#allocation0]]
  $region73: #{model_forward.1} parent=0
    _
  %s8 = ssub.s32 1, %s6
  %s9 = scalar_select 0, %s8, %s6
  $region1: #{model_forward.1} parent=0
    #allocation5 [shape = 'u8[3072]{0}', space=vmem, size = 0xc00, scoped, tag = 'input window, operand 0, single buffered']
    #allocation6 [shape = 's32[2]{0}', space=sflag, size = 0x8, scoped, tag = 'scoped memory for model_forward.1']
    #allocation7 [shape = 's32[2]{0}', space=sflag, size = 0x8, scoped, tag = 'scoped memory for model_forward.1']
    #allocation8 [shape = 'u8[2359296]{0}', space=vmem, size = 0x240000, scoped, tag = 'input window, operand 1, single buffered']
    #allocation9 [shape = 's32[1]{0}', space=sflag, size = 0x4, scoped, tag = 'scoped memory for model_forward.1']
    #allocation10 [shape = 'u8[6144]{0}', space=vmem, size = 0x1800, scoped, tag = 'input window, operand 2, single buffered']
    #allocation11 [shape = 'u8[786432]{0}', space=vmem, size = 0xc0000, scoped, tag = 'input window, operand 3']
    #allocation12 [shape = 's32[2]{0}', space=sflag, size = 0x8, scoped, tag = 'scoped memory for model_forward.1']
    #allocation13 [shape = 'u8[3072]{0}', space=vmem, size = 0xc00, scoped, tag = 'output window, operand 0, single buffered']
    %10 = vsyncpa [#allocation6], 0
    %11 = vsyncpa [#allocation9], 0
    %12 = vsyncpa [#allocation12], 0
    %s13 = scalar_lea.sflag [#allocation12], 1
    %14 = vsyncpa %s13, 0
    %15 = vsyncpa [#allocation7], 0
    loop: start=0, step=1, limit=4
    $region2: #{model_forward.1} parent=1 // loop_pre_header
      _
    $region3: #{model_forward.1} parent=1 // loop_header
      %s17 = sphi 0, %s21
      %p18 = scmp.ge.s32.totalorder %s17, 4
      %s25 = sphi 0, %s25
      %s27 = sphi 0, %s25
      %s28 = sphi 0, %s27
      %s42 = sphi 0, %s28
      %s46 = sphi 0, %s46
      %s48 = sphi 0, %s46
      %s49 = sphi 0, %s48
      %s63 = sphi 0, %s49
      %s67 = sphi 0, %s67
      %s69 = sphi 0, %s67
      %s70 = sphi 0, %s69
      %s84 = sphi 0, %s70
      %s90 = sphi 0, %s92
      %s93 = sphi 0, %s90
      %s94 = sphi 0, %s93
      %s110 = sphi 0, %s94
      %s114 = sphi 0, %s114
      %s116 = sphi 0, %s114
      %s117 = sphi 0, %s116
      %s131 = sphi 0, %s117
      %s135 = sphi 0, %s135
      %s137 = sphi 0, %s135
      %s138 = sphi 0, %s137
      %s152 = sphi 0, %s138
    $region4: #{model_forward.1} parent=1 // loop_header_branch
      %20 = sbr.rel (%p18) target = $region8
    $region5: #{model_forward.1} parent=1 // loop_body
      %s22 = ssub.s32 %s17, 1
      %s23 = ssub.s32 %s17, 2
      %s24 = sadd.s32 %s17, 1
      %s26 = sadd.s32 %s25, 1
      %p29 = scmp.eq.s32.totalorder %s17, 1
      %p30 = scmp.ne.s32.totalorder %s25, %s27
      %p31 = scmp.eq.s32.totalorder %s17, 0
      %p32 = por %p30, %p31
      %p33 = scmp.ne.s32.totalorder %s25, %s27
      %p34 = scmp.eq.s32.totalorder %s22, 1
      %p35 = por %p33, %p34
      %p36 = scmp.ne.s32.totalorder %s27, %s28
      %p37 = scmp.eq.s32.totalorder %s22, 0
      %p38 = por %p36, %p37
      %p39 = scmp.ne.s32.totalorder %s27, %s28
      %p40 = scmp.eq.s32.totalorder %s23, 1
      %p41 = por %p39, %p40
      %p43 = scmp.ne.s32.totalorder %s28, %s42
      %p44 = scmp.eq.s32.totalorder %s23, 0
      %p45 = por %p43, %p44
      %s47 = sadd.s32 %s46, 1
      %p50 = scmp.eq.s32.totalorder %s17, 1
      %p51 = scmp.ne.s32.totalorder %s46, %s48
      %p52 = scmp.eq.s32.totalorder %s17, 0
      %p53 = por %p51, %p52
      %p54 = scmp.ne.s32.totalorder %s46, %s48
      %p55 = scmp.eq.s32.totalorder %s22, 1
      %p56 = por %p54, %p55
      %p57 = scmp.ne.s32.totalorder %s48, %s49
      %p58 = scmp.eq.s32.totalorder %s22, 0
      %p59 = por %p57, %p58
      %p60 = scmp.ne.s32.totalorder %s48, %s49
      %p61 = scmp.eq.s32.totalorder %s23, 1
      %p62 = por %p60, %p61
      %p64 = scmp.ne.s32.totalorder %s49, %s63
      %p65 = scmp.eq.s32.totalorder %s23, 0
      %p66 = por %p64, %p65
      %s68 = sadd.s32 %s67, 1
      %p71 = scmp.eq.s32.totalorder %s17, 1
      %p72 = scmp.ne.s32.totalorder %s67, %s69
      %p73 = scmp.eq.s32.totalorder %s17, 0
      %p74 = por %p72, %p73
      %p75 = scmp.ne.s32.totalorder %s67, %s69
      %p76 = scmp.eq.s32.totalorder %s22, 1
      %p77 = por %p75, %p76
      %p78 = scmp.ne.s32.totalorder %s69, %s70
      %p79 = scmp.eq.s32.totalorder %s22, 0
      %p80 = por %p78, %p79
      %p81 = scmp.ne.s32.totalorder %s69, %s70
      %p82 = scmp.eq.s32.totalorder %s23, 1
      %p83 = por %p81, %p82
      %p85 = scmp.ne.s32.totalorder %s70, %s84
      %p86 = scmp.eq.s32.totalorder %s23, 0
      %p87 = por %p85, %p86
      %s88 = ssub.s32 %s17, %s24
      %p89 = scmp.eq.s32.totalorder %s88, 0
      %s91 = sadd.s32 %s90, 1
      %s92 = scalar_select %p89, %s90, %s91
      %p95 = pneg %p89
      %p96 = scmp.eq.s32.totalorder %s17, 1
      %p97 = por %p95, %p96
      %p98 = scmp.ne.s32.totalorder %s90, %s93
      %p99 = scmp.eq.s32.totalorder %s17, 0
      %p100 = por %p98, %p99
      %p101 = scmp.ne.s32.totalorder %s90, %s93
      %p102 = scmp.eq.s32.totalorder %s22, 1
      %p103 = por %p101, %p102
      %p104 = scmp.ne.s32.totalorder %s93, %s94
      %p105 = scmp.eq.s32.totalorder %s22, 0
      %p106 = por %p104, %p105
      %p107 = scmp.ne.s32.totalorder %s93, %s94
      %p108 = scmp.eq.s32.totalorder %s23, 1
      %p109 = por %p107, %p108
      %p111 = scmp.ne.s32.totalorder %s94, %s110
      %p112 = scmp.eq.s32.totalorder %s23, 0
      %p113 = por %p111, %p112
      %s115 = sadd.s32 %s114, 1
      %p118 = scmp.eq.s32.totalorder %s17, 1
      %p119 = scmp.ne.s32.totalorder %s114, %s116
      %p120 = scmp.eq.s32.totalorder %s17, 0
      %p121 = por %p119, %p120
      %p122 = scmp.ne.s32.totalorder %s114, %s116
      %p123 = scmp.eq.s32.totalorder %s22, 1
      %p124 = por %p122, %p123
      %p125 = scmp.ne.s32.totalorder %s116, %s117
      %p126 = scmp.eq.s32.totalorder %s22, 0
      %p127 = por %p125, %p126
      %p128 = scmp.ne.s32.totalorder %s116, %s117
      %p129 = scmp.eq.s32.totalorder %s23, 1
      %p130 = por %p128, %p129
      %p132 = scmp.ne.s32.totalorder %s117, %s131
      %p133 = scmp.eq.s32.totalorder %s23, 0
      %p134 = por %p132, %p133
      %s136 = sadd.s32 %s135, 1
      %p139 = scmp.eq.s32.totalorder %s17, 1
      %p140 = scmp.ne.s32.totalorder %s135, %s137
      %p141 = scmp.eq.s32.totalorder %s17, 0
      %p142 = por %p140, %p141
      %p143 = scmp.ne.s32.totalorder %s135, %s137
      %p144 = scmp.eq.s32.totalorder %s22, 1
      %p145 = por %p143, %p144
      %p146 = scmp.ne.s32.totalorder %s137, %s138
      %p147 = scmp.eq.s32.totalorder %s22, 0
      %p148 = por %p146, %p147
      %p149 = scmp.ne.s32.totalorder %s137, %s138
      %p150 = scmp.eq.s32.totalorder %s23, 1
      %p151 = por %p149, %p150
      %p153 = scmp.ne.s32.totalorder %s138, %s152
      %p154 = scmp.eq.s32.totalorder %s23, 0
      %p155 = por %p153, %p154
      %p156 = scmp.le.s32.totalorder 1, %s17
      %p157 = scmp.lt.s32.totalorder %s17, 3
      %p158 = pnand %p156, %p157
      %p159 = pneg %p158
      // Predicated region
      $region9: #{model_forward.1} parent=5 // pred_check
        _
      $region10: #{model_forward.1} parent=5 // pred_check_branch
        %161 = sbr.rel (%p158) target = $region12
      $region11: #{model_forward.1} parent=5 // pred_region
        %s162 = ssub.s32 %s17, 1
        // Predicated region
        $region13: #{model_forward.1} parent=11 // pred_check
          %p163 = pneg %p38
        $region14: #{model_forward.1} parent=11 // pred_check_branch
          %165 = sbr.rel (%p163) target = $region16
        $region15: #{model_forward.1} parent=11 // pred_region
          %s167 = ssub.s32 96, 96
          %168 = vsyncadd [#allocation6], %s167
          %s170 = sshll.u32 [#allocation5], 4
          %s171 = int_to_ptr.vmem [resolvable:$true] %s170
          %173 = dma.hbm_to_vmem [thread:$0]  %s0, 96, %s171, [#allocation6]
        $region16: #{model_forward.1} parent=11 // pred_fallthru
          _
        // Predicated region
        $region17: #{model_forward.1} parent=11 // pred_check
          %p174 = pneg %p59
        $region18: #{model_forward.1} parent=11 // pred_check_branch
          %176 = sbr.rel (%p174) target = $region20
        $region19: #{model_forward.1} parent=11 // pred_region
          %s178 = ssub.s32 73728, 73728
          %179 = vsyncadd [#allocation9], %s178
          %s180 = sshll.u32 [#allocation8], 4
          %s181 = int_to_ptr.vmem [resolvable:$true] %s180
          %186 = dma.hbm_to_vmem [thread:$0]  %s1, 73728, %s181, [#allocation9], 1024, 768, 48
        $region20: #{model_forward.1} parent=11 // pred_fallthru
          _
        // Predicated region
        $region21: #{model_forward.1} parent=11 // pred_check
          %p187 = pneg %p80
        $region22: #{model_forward.1} parent=11 // pred_check_branch
          %189 = sbr.rel (%p187) target = $region24
        $region23: #{model_forward.1} parent=11 // pred_region
          %s191 = ssub.s32 192, 192
          %192 = vsyncadd [#allocation9], %s191
          %s194 = sshll.u32 [#allocation10], 4
          %s195 = int_to_ptr.vmem [resolvable:$true] %s194
          %197 = dma.hbm_to_vmem [thread:$0]  %s2, 192, %s195, [#allocation9]
        $region24: #{model_forward.1} parent=11 // pred_fallthru
          _
        // Predicated region
        $region25: #{model_forward.1} parent=11 // pred_check
          %p198 = pneg %p127
        $region26: #{model_forward.1} parent=11 // pred_check_branch
          %200 = sbr.rel (%p198) target = $region28
        $region27: #{model_forward.1} parent=11 // pred_region
          _
        $region28: #{model_forward.1} parent=11 // pred_fallthru
          _
      $region12: #{model_forward.1} parent=5 // pred_fallthru
        _
      %p201 = scmp.lt.s32.totalorder %s17, 2
      // Predicated region
      $region29: #{model_forward.1} parent=5 // pred_check
        %p202 = pneg %p201
      $region30: #{model_forward.1} parent=5 // pred_check_branch
        %204 = sbr.rel (%p202) target = $region32
      $region31: #{model_forward.1} parent=5 // pred_region
        // Predicated region
        $region33: #{model_forward.1} parent=31 // pred_check
          %p205 = pneg %p100
        $region34: #{model_forward.1} parent=31 // pred_check_branch
          %207 = sbr.rel (%p205) target = $region36
        $region35: #{model_forward.1} parent=31 // pred_region
          %s208 = sand.u32 %s90, 1
          %s209 = scalar_lea.sflag [#allocation12], %s208
          %s210 = sand.u32 %s90, 1
          %s211 = smul.addr %s210, 768
          %s212 = scalar_lea.vmem [#allocation11], %s211
          %s213 = smul.u32 32, %s17
          %s215 = ssub.s32 12288, 12288
          %216 = vsyncadd %s209, %s215
          %s217 = smul.addr %s213, 6
          %s218 = smul.addr %s217, 64
          %s219 = scalar_lea.hbm %s3, %s218
          %s220 = sshll.u32 %s212, 4
          %s221 = int_to_ptr.vmem [resolvable:$true] %s220
          %226 = dma.hbm_to_vmem [thread:$0]  %s219, 12288, %s221, %s209, 384, 384, 24
        $region36: #{model_forward.1} parent=31 // pred_fallthru
          _
      $region32: #{model_forward.1} parent=5 // pred_fallthru
        _
      %p227 = scmp.le.s32.totalorder 1, %s17
      %p228 = scmp.lt.s32.totalorder %s17, 3
      %p229 = pnand %p227, %p228
      %p230 = pneg %p229
      // Predicated region
      $region37: #{model_forward.1} parent=5 // pred_check
        _
      $region38: #{model_forward.1} parent=5 // pred_check_branch
        %232 = sbr.rel (%p229) target = $region40
      $region39: #{model_forward.1} parent=5 // pred_region
        %s233 = ssub.s32 %s17, 1
        // Predicated region
        $region41: #{model_forward.1} parent=39 // pred_check
          %p234 = pneg %p38
        $region42: #{model_forward.1} parent=39 // pred_check_branch
          %236 = sbr.rel (%p234) target = $region44
        $region43: #{model_forward.1} parent=39 // pred_region
          %237 = dma.done [#allocation6], 96
        $region44: #{model_forward.1} parent=39 // pred_fallthru
          _
        // Predicated region
        $region45: #{model_forward.1} parent=39 // pred_check
          %p238 = pneg %p59
        $region46: #{model_forward.1} parent=39 // pred_check_branch
          %240 = sbr.rel (%p238) target = $region48
        $region47: #{model_forward.1} parent=39 // pred_region
          %241 = dma.done [#allocation9], 73728
        $region48: #{model_forward.1} parent=39 // pred_fallthru
          _
        // Predicated region
        $region49: #{model_forward.1} parent=39 // pred_check
          %p242 = pneg %p80
        $region50: #{model_forward.1} parent=39 // pred_check_branch
          %244 = sbr.rel (%p242) target = $region52
        $region51: #{model_forward.1} parent=39 // pred_region
          %245 = dma.done [#allocation9], 192
        $region52: #{model_forward.1} parent=39 // pred_fallthru
          _
        %s246 = sand.u32 %s93, 1
        %s247 = scalar_lea.sflag [#allocation12], %s246
        %s248 = sand.u32 %s93, 1
        %s249 = smul.addr %s248, 768
        %s250 = scalar_lea.vmem [#allocation11], %s249
        // Predicated region
        $region53: #{model_forward.1} parent=39 // pred_check
          %p251 = pneg %p106
        $region54: #{model_forward.1} parent=39 // pred_check_branch
          %253 = sbr.rel (%p251) target = $region56
        $region55: #{model_forward.1} parent=39 // pred_region
          %254 = dma.done %s247, 12288
        $region56: #{model_forward.1} parent=39 // pred_fallthru
          _
        %p255 = pneg %p38
        %p256 = pneg %p35
        %p257 = pneg %p59
        %p258 = pneg %p56
        %p259 = pneg %p80
        %p260 = pneg %p77
        %s261 = sand.u32 %s93, 1
        %s262 = scalar_lea.sflag [#allocation12], %s261
        %s263 = sand.u32 %s93, 1
        %s264 = smul.addr %s263, 768
        %s265 = scalar_lea.vmem [#allocation11], %s264
        %p266 = pneg %p106
        %p267 = pneg %p103
        %p268 = pneg %p127
        %p269 = pneg %p124
        %p270 = pneg %p148
        %p271 = pneg %p145
        %s272 = smul.u32 32, %s22
        %p273 = scmp.eq.s32.totalorder %s22, 0
        // Predicated region
        $region57: #{model_forward.1} parent=39 // pred_check
          %p274 = pneg %p273
        $region58: #{model_forward.1} parent=39 // pred_check_branch
          %276 = sbr.rel (%p274) target = $region60
        $region59: #{model_forward.1} parent=39 // pred_region
          %v277 = vld [vmem:[#allocation5] sm:$0x3f]
          %v279 = vlaneseq
          %v280 = vshrl.u32 %v279, 7
          %v281 = vsub.s32 0, %v280
          %v282 = vrot.slane %v277, %v281
          %v283 = vlaneseq
          %v284 = vshrl.u32 %v283, 7
          %v285 = vsub.s32 1, %v284
          %v286 = vrot.slane %v277, %v285
          %v287 = vlaneseq
          %v288 = vshrl.u32 %v287, 7
          %v289 = vsub.s32 2, %v288
          %v290 = vrot.slane %v277, %v289
          %v291 = vlaneseq
          %v292 = vshrl.u32 %v291, 7
          %v293 = vsub.s32 3, %v292
          %v294 = vrot.slane %v277, %v293
          %v295 = vlaneseq
          %v296 = vshrl.u32 %v295, 7
          %v297 = vsub.s32 4, %v296
          %v298 = vrot.slane %v277, %v297
          %v299 = vlaneseq
          %v300 = vshrl.u32 %v299, 7
          %v301 = vsub.s32 5, %v300
          %v302 = vrot.slane %v277, %v301
          %v309 = vpack.c.bf16 %v282, %v282
          %v310 = vpack.c.bf16 %v286, %v286
          %v311 = vpack.c.bf16 %v290, %v290
          %v312 = vpack.c.bf16 %v294, %v294
          %v313 = vpack.c.bf16 %v298, %v298
          %v314 = vpack.c.bf16 %v302, %v302
          %v315 = vld [vmem:[#allocation8] sm:$0xff]
          %v316 = vld [vmem:[#allocation8 + $0x8] sm:$0xff]
          %v317 = vld [vmem:[#allocation8 + $0x10] sm:$0xff]
          %v318 = vld [vmem:[#allocation8 + $0x18] sm:$0xff]
          %v319 = vld [vmem:[#allocation8 + $0x20] sm:$0xff]
          %v320 = vld [vmem:[#allocation8 + $0x28] sm:$0xff]
          %v321 = vld [vmem:[#allocation8 + $0x30] sm:$0xff]
          %v322 = vld [vmem:[#allocation8 + $0x38] sm:$0xff]
          %v323 = vld [vmem:[#allocation8 + $0x40] sm:$0xff]
          %v324 = vld [vmem:[#allocation8 + $0x48] sm:$0xff]
          %v325 = vld [vmem:[#allocation8 + $0x50] sm:$0xff]
          %v326 = vld [vmem:[#allocation8 + $0x58] sm:$0xff]
          %v327 = vld [vmem:[#allocation8 + $0x60] sm:$0xff]
          %v328 = vld [vmem:[#allocation8 + $0x68] sm:$0xff]
          %v329 = vld [vmem:[#allocation8 + $0x70] sm:$0xff]
          %v330 = vld [vmem:[#allocation8 + $0x78] sm:$0xff]
          %v331 = vld [vmem:[#allocation8 + $0x80] sm:$0xff]
          %v332 = vld [vmem:[#allocation8 + $0x88] sm:$0xff]
          %v333 = vld [vmem:[#allocation8 + $0x90] sm:$0xff]
          %v334 = vld [vmem:[#allocation8 + $0x98] sm:$0xff]
          %v335 = vld [vmem:[#allocation8 + $0xa0] sm:$0xff]
          %v336 = vld [vmem:[#allocation8 + $0xa8] sm:$0xff]
          %v337 = vld [vmem:[#allocation8 + $0xb0] sm:$0xff]
          %v338 = vld [vmem:[#allocation8 + $0xb8] sm:$0xff]
          %v339 = vld [vmem:[#allocation8 + $0xc0] sm:$0xff]
          %v340 = vld [vmem:[#allocation8 + $0xc8] sm:$0xff]
          %v341 = vld [vmem:[#allocation8 + $0xd0] sm:$0xff]
          %v342 = vld [vmem:[#allocation8 + $0xd8] sm:$0xff]
          %v343 = vld [vmem:[#allocation8 + $0xe0] sm:$0xff]
          %v344 = vld [vmem:[#allocation8 + $0xe8] sm:$0xff]
          %v345 = vld [vmem:[#allocation8 + $0xf0] sm:$0xff]
          %v346 = vld [vmem:[#allocation8 + $0xf8] sm:$0xff]
          %v347 = vld [vmem:[#allocation8 + $0x100] sm:$0xff]
          %v348 = vld [vmem:[#allocation8 + $0x108] sm:$0xff]
          %v349 = vld [vmem:[#allocation8 + $0x110] sm:$0xff]
          %v350 = vld [vmem:[#allocation8 + $0x118] sm:$0xff]
          %v351 = vld [vmem:[#allocation8 + $0x120] sm:$0xff]
          %v352 = vld [vmem:[#allocation8 + $0x128] sm:$0xff]
          %v353 = vld [vmem:[#allocation8 + $0x130] sm:$0xff]
          %v354 = vld [vmem:[#allocation8 + $0x138] sm:$0xff]
          %v355 = vld [vmem:[#allocation8 + $0x140] sm:$0xff]
          %v356 = vld [vmem:[#allocation8 + $0x148] sm:$0xff]
          %v357 = vld [vmem:[#allocation8 + $0x150] sm:$0xff]
          %v358 = vld [vmem:[#allocation8 + $0x158] sm:$0xff]
          %v359 = vld [vmem:[#allocation8 + $0x160] sm:$0xff]
          %v360 = vld [vmem:[#allocation8 + $0x168] sm:$0xff]
          %v361 = vld [vmem:[#allocation8 + $0x170] sm:$0xff]
          %v362 = vld [vmem:[#allocation8 + $0x178] sm:$0xff]
          %v363 = vld [vmem:[#allocation8 + $0x180] sm:$0xff]
          %v364 = vld [vmem:[#allocation8 + $0x188] sm:$0xff]
          %v365 = vld [vmem:[#allocation8 + $0x190] sm:$0xff]
          %v366 = vld [vmem:[#allocation8 + $0x198] sm:$0xff]
          %v367 = vld [vmem:[#allocation8 + $0x1a0] sm:$0xff]
          %v368 = vld [vmem:[#allocation8 + $0x1a8] sm:$0xff]
          %v369 = vld [vmem:[#allocation8 + $0x1b0] sm:$0xff]
          %v370 = vld [vmem:[#allocation8 + $0x1b8] sm:$0xff]
          %v371 = vld [vmem:[#allocation8 + $0x1c0] sm:$0xff]
          %v372 = vld [vmem:[#allocation8 + $0x1c8] sm:$0xff]
          %v373 = vld [vmem:[#allocation8 + $0x1d0] sm:$0xff]
          %v374 = vld [vmem:[#allocation8 + $0x1d8] sm:$0xff]
          %v375 = vld [vmem:[#allocation8 + $0x1e0] sm:$0xff]
          %v376 = vld [vmem:[#allocation8 + $0x1e8] sm:$0xff]
          %v377 = vld [vmem:[#allocation8 + $0x1f0] sm:$0xff]
          %v378 = vld [vmem:[#allocation8 + $0x1f8] sm:$0xff]
          %v379 = vld [vmem:[#allocation8 + $0x200] sm:$0xff]
          %v380 = vld [vmem:[#allocation8 + $0x208] sm:$0xff]
          %v381 = vld [vmem:[#allocation8 + $0x210] sm:$0xff]
          %v382 = vld [vmem:[#allocation8 + $0x218] sm:$0xff]
          %v383 = vld [vmem:[#allocation8 + $0x220] sm:$0xff]
          %v384 = vld [vmem:[#allocation8 + $0x228] sm:$0xff]
          %v385 = vld [vmem:[#allocation8 + $0x230] sm:$0xff]
          %v386 = vld [vmem:[#allocation8 + $0x238] sm:$0xff]
          %v387 = vld [vmem:[#allocation8 + $0x240] sm:$0xff]
          %v388 = vld [vmem:[#allocation8 + $0x248] sm:$0xff]
          %v389 = vld [vmem:[#allocation8 + $0x250] sm:$0xff]
          %v390 = vld [vmem:[#allocation8 + $0x258] sm:$0xff]
          %v391 = vld [vmem:[#allocation8 + $0x260] sm:$0xff]
          %v392 = vld [vmem:[#allocation8 + $0x268] sm:$0xff]
          %v393 = vld [vmem:[#allocation8 + $0x270] sm:$0xff]
          %v394 = vld [vmem:[#allocation8 + $0x278] sm:$0xff]
          %v395 = vld [vmem:[#allocation8 + $0x280] sm:$0xff]
          %v396 = vld [vmem:[#allocation8 + $0x288] sm:$0xff]
          %v397 = vld [vmem:[#allocation8 + $0x290] sm:$0xff]
          %v398 = vld [vmem:[#allocation8 + $0x298] sm:$0xff]
          %v399 = vld [vmem:[#allocation8 + $0x2a0] sm:$0xff]
          %v400 = vld [vmem:[#allocation8 + $0x2a8] sm:$0xff]
          %v401 = vld [vmem:[#allocation8 + $0x2b0] sm:$0xff]
          %v402 = vld [vmem:[#allocation8 + $0x2b8] sm:$0xff]
          %v403 = vld [vmem:[#allocation8 + $0x2c0] sm:$0xff]
          %v404 = vld [vmem:[#allocation8 + $0x2c8] sm:$0xff]
          %v405 = vld [vmem:[#allocation8 + $0x2d0] sm:$0xff]
          %v406 = vld [vmem:[#allocation8 + $0x2d8] sm:$0xff]
          %v407 = vld [vmem:[#allocation8 + $0x2e0] sm:$0xff]
          %v408 = vld [vmem:[#allocation8 + $0x2e8] sm:$0xff]
          %v409 = vld [vmem:[#allocation8 + $0x2f0] sm:$0xff]
          %v410 = vld [vmem:[#allocation8 + $0x2f8] sm:$0xff]
          %v411 = vld [vmem:[#allocation8 + $0x300] sm:$0xff]
          %v412 = vld [vmem:[#allocation8 + $0x308] sm:$0xff]
          %v413 = vld [vmem:[#allocation8 + $0x310] sm:$0xff]
          %v414 = vld [vmem:[#allocation8 + $0x318] sm:$0xff]
          %v415 = vld [vmem:[#allocation8 + $0x320] sm:$0xff]
          %v416 = vld [vmem:[#allocation8 + $0x328] sm:$0xff]
          %v417 = vld [vmem:[#allocation8 + $0x330] sm:$0xff]
          %v418 = vld [vmem:[#allocation8 + $0x338] sm:$0xff]
          %v419 = vld [vmem:[#allocation8 + $0x340] sm:$0xff]
          %v420 = vld [vmem:[#allocation8 + $0x348] sm:$0xff]
          %v421 = vld [vmem:[#allocation8 + $0x350] sm:$0xff]
          %v422 = vld [vmem:[#allocation8 + $0x358] sm:$0xff]
          %v423 = vld [vmem:[#allocation8 + $0x360] sm:$0xff]
          %v424 = vld [vmem:[#allocation8 + $0x368] sm:$0xff]
          %v425 = vld [vmem:[#allocation8 + $0x370] sm:$0xff]
          %v426 = vld [vmem:[#allocation8 + $0x378] sm:$0xff]
          %v427 = vld [vmem:[#allocation8 + $0x380] sm:$0xff]
          %v428 = vld [vmem:[#allocation8 + $0x388] sm:$0xff]
          %v429 = vld [vmem:[#allocation8 + $0x390] sm:$0xff]
          %v430 = vld [vmem:[#allocation8 + $0x398] sm:$0xff]
          %v431 = vld [vmem:[#allocation8 + $0x3a0] sm:$0xff]
          %v432 = vld [vmem:[#allocation8 + $0x3a8] sm:$0xff]
          %v433 = vld [vmem:[#allocation8 + $0x3b0] sm:$0xff]
          %v434 = vld [vmem:[#allocation8 + $0x3b8] sm:$0xff]
          %v435 = vld [vmem:[#allocation8 + $0x3c0] sm:$0xff]
          %v436 = vld [vmem:[#allocation8 + $0x3c8] sm:$0xff]
          %v437 = vld [vmem:[#allocation8 + $0x3d0] sm:$0xff]
          %v438 = vld [vmem:[#allocation8 + $0x3d8] sm:$0xff]
          %v439 = vld [vmem:[#allocation8 + $0x3e0] sm:$0xff]
          %v440 = vld [vmem:[#allocation8 + $0x3e8] sm:$0xff]
          %v441 = vld [vmem:[#allocation8 + $0x3f0] sm:$0xff]
          %v442 = vld [vmem:[#allocation8 + $0x3f8] sm:$0xff]
          %v443 = vld [vmem:[#allocation8 + $0x400] sm:$0xff]
          %v444 = vld [vmem:[#allocation8 + $0x408] sm:$0xff]
          %v445 = vld [vmem:[#allocation8 + $0x410] sm:$0xff]
          %v446 = vld [vmem:[#allocation8 + $0x418] sm:$0xff]
          %v447 = vld [vmem:[#allocation8 + $0x420] sm:$0xff]
          %v448 = vld [vmem:[#allocation8 + $0x428] sm:$0xff]
          %v449 = vld [vmem:[#allocation8 + $0x430] sm:$0xff]
          %v450 = vld [vmem:[#allocation8 + $0x438] sm:$0xff]
          %v451 = vld [vmem:[#allocation8 + $0x440] sm:$0xff]
          %v452 = vld [vmem:[#allocation8 + $0x448] sm:$0xff]
          %v453 = vld [vmem:[#allocation8 + $0x450] sm:$0xff]
          %v454 = vld [vmem:[#allocation8 + $0x458] sm:$0xff]
          %v455 = vld [vmem:[#allocation8 + $0x460] sm:$0xff]
          %v456 = vld [vmem:[#allocation8 + $0x468] sm:$0xff]
          %v457 = vld [vmem:[#allocation8 + $0x470] sm:$0xff]
          %v458 = vld [vmem:[#allocation8 + $0x478] sm:$0xff]
          %v459 = vld [vmem:[#allocation8 + $0x480] sm:$0xff]
          %v460 = vld [vmem:[#allocation8 + $0x488] sm:$0xff]
          %v461 = vld [vmem:[#allocation8 + $0x490] sm:$0xff]
          %v462 = vld [vmem:[#allocation8 + $0x498] sm:$0xff]
          %v463 = vld [vmem:[#allocation8 + $0x4a0] sm:$0xff]
          %v464 = vld [vmem:[#allocation8 + $0x4a8] sm:$0xff]
          %v465 = vld [vmem:[#allocation8 + $0x4b0] sm:$0xff]
          %v466 = vld [vmem:[#allocation8 + $0x4b8] sm:$0xff]
          %v467 = vld [vmem:[#allocation8 + $0x4c0] sm:$0xff]
          %v468 = vld [vmem:[#allocation8 + $0x4c8] sm:$0xff]
          %v469 = vld [vmem:[#allocation8 + $0x4d0] sm:$0xff]
          %v470 = vld [vmem:[#allocation8 + $0x4d8] sm:$0xff]
          %v471 = vld [vmem:[#allocation8 + $0x4e0] sm:$0xff]
          %v472 = vld [vmem:[#allocation8 + $0x4e8] sm:$0xff]
          %v473 = vld [vmem:[#allocation8 + $0x4f0] sm:$0xff]
          %v474 = vld [vmem:[#allocation8 + $0x4f8] sm:$0xff]
          %v475 = vld [vmem:[#allocation8 + $0x500] sm:$0xff]
          %v476 = vld [vmem:[#allocation8 + $0x508] sm:$0xff]
          %v477 = vld [vmem:[#allocation8 + $0x510] sm:$0xff]
          %v478 = vld [vmem:[#allocation8 + $0x518] sm:$0xff]
          %v479 = vld [vmem:[#allocation8 + $0x520] sm:$0xff]
          %v480 = vld [vmem:[#allocation8 + $0x528] sm:$0xff]
          %v481 = vld [vmem:[#allocation8 + $0x530] sm:$0xff]
          %v482 = vld [vmem:[#allocation8 + $0x538] sm:$0xff]
          %v483 = vld [vmem:[#allocation8 + $0x540] sm:$0xff]
          %v484 = vld [vmem:[#allocation8 + $0x548] sm:$0xff]
          %v485 = vld [vmem:[#allocation8 + $0x550] sm:$0xff]
          %v486 = vld [vmem:[#allocation8 + $0x558] sm:$0xff]
          %v487 = vld [vmem:[#allocation8 + $0x560] sm:$0xff]
          %v488 = vld [vmem:[#allocation8 + $0x568] sm:$0xff]
          %v489 = vld [vmem:[#allocation8 + $0x570] sm:$0xff]
          %v490 = vld [vmem:[#allocation8 + $0x578] sm:$0xff]
          %v491 = vld [vmem:[#allocation8 + $0x580] sm:$0xff]
          %v492 = vld [vmem:[#allocation8 + $0x588] sm:$0xff]
          %v493 = vld [vmem:[#allocation8 + $0x590] sm:$0xff]
          %v494 = vld [vmem:[#allocation8 + $0x598] sm:$0xff]
          %v495 = vld [vmem:[#allocation8 + $0x5a0] sm:$0xff]
          %v496 = vld [vmem:[#allocation8 + $0x5a8] sm:$0xff]
          %v497 = vld [vmem:[#allocation8 + $0x5b0] sm:$0xff]
          %v498 = vld [vmem:[#allocation8 + $0x5b8] sm:$0xff]
          %v499 = vld [vmem:[#allocation8 + $0x5c0] sm:$0xff]
          %v500 = vld [vmem:[#allocation8 + $0x5c8] sm:$0xff]
          %v501 = vld [vmem:[#allocation8 + $0x5d0] sm:$0xff]
          %v502 = vld [vmem:[#allocation8 + $0x5d8] sm:$0xff]
          %v503 = vld [vmem:[#allocation8 + $0x5e0] sm:$0xff]
          %v504 = vld [vmem:[#allocation8 + $0x5e8] sm:$0xff]
          %v505 = vld [vmem:[#allocation8 + $0x5f0] sm:$0xff]
          %v506 = vld [vmem:[#allocation8 + $0x5f8] sm:$0xff]
          %v507 = vld [vmem:[#allocation8 + $0x600] sm:$0xff]
          %v508 = vld [vmem:[#allocation8 + $0x608] sm:$0xff]
          %v509 = vld [vmem:[#allocation8 + $0x610] sm:$0xff]
          %v510 = vld [vmem:[#allocation8 + $0x618] sm:$0xff]
          %v511 = vld [vmem:[#allocation8 + $0x620] sm:$0xff]
          %v512 = vld [vmem:[#allocation8 + $0x628] sm:$0xff]
          %v513 = vld [vmem:[#allocation8 + $0x630] sm:$0xff]
          %v514 = vld [vmem:[#allocation8 + $0x638] sm:$0xff]
          %v515 = vld [vmem:[#allocation8 + $0x640] sm:$0xff]
          %v516 = vld [vmem:[#allocation8 + $0x648] sm:$0xff]
          %v517 = vld [vmem:[#allocation8 + $0x650] sm:$0xff]
          %v518 = vld [vmem:[#allocation8 + $0x658] sm:$0xff]
          %v519 = vld [vmem:[#allocation8 + $0x660] sm:$0xff]
          %v520 = vld [vmem:[#allocation8 + $0x668] sm:$0xff]
          %v521 = vld [vmem:[#allocation8 + $0x670] sm:$0xff]
          %v522 = vld [vmem:[#allocation8 + $0x678] sm:$0xff]
          %v523 = vld [vmem:[#allocation8 + $0x680] sm:$0xff]
          %v524 = vld [vmem:[#allocation8 + $0x688] sm:$0xff]
          %v525 = vld [vmem:[#allocation8 + $0x690] sm:$0xff]
          %v526 = vld [vmem:[#allocation8 + $0x698] sm:$0xff]
          %v527 = vld [vmem:[#allocation8 + $0x6a0] sm:$0xff]
          %v528 = vld [vmem:[#allocation8 + $0x6a8] sm:$0xff]
          %v529 = vld [vmem:[#allocation8 + $0x6b0] sm:$0xff]
          %v530 = vld [vmem:[#allocation8 + $0x6b8] sm:$0xff]
          %v531 = vld [vmem:[#allocation8 + $0x6c0] sm:$0xff]
          %v532 = vld [vmem:[#allocation8 + $0x6c8] sm:$0xff]
          %v533 = vld [vmem:[#allocation8 + $0x6d0] sm:$0xff]
          %v534 = vld [vmem:[#allocation8 + $0x6d8] sm:$0xff]
          %v535 = vld [vmem:[#allocation8 + $0x6e0] sm:$0xff]
          %v536 = vld [vmem:[#allocation8 + $0x6e8] sm:$0xff]
          %v537 = vld [vmem:[#allocation8 + $0x6f0] sm:$0xff]
          %v538 = vld [vmem:[#allocation8 + $0x6f8] sm:$0xff]
          %v539 = vld [vmem:[#allocation8 + $0x700] sm:$0xff]
          %v540 = vld [vmem:[#allocation8 + $0x708] sm:$0xff]
          %v541 = vld [vmem:[#allocation8 + $0x710] sm:$0xff]
          %v542 = vld [vmem:[#allocation8 + $0x718] sm:$0xff]
          %v543 = vld [vmem:[#allocation8 + $0x720] sm:$0xff]
          %v544 = vld [vmem:[#allocation8 + $0x728] sm:$0xff]
          %v545 = vld [vmem:[#allocation8 + $0x730] sm:$0xff]
          %v546 = vld [vmem:[#allocation8 + $0x738] sm:$0xff]
          %v547 = vld [vmem:[#allocation8 + $0x740] sm:$0xff]
          %v548 = vld [vmem:[#allocation8 + $0x748] sm:$0xff]
          %v549 = vld [vmem:[#allocation8 + $0x750] sm:$0xff]
          %v550 = vld [vmem:[#allocation8 + $0x758] sm:$0xff]
          %v551 = vld [vmem:[#allocation8 + $0x760] sm:$0xff]
          %v552 = vld [vmem:[#allocation8 + $0x768] sm:$0xff]
          %v553 = vld [vmem:[#allocation8 + $0x770] sm:$0xff]
          %v554 = vld [vmem:[#allocation8 + $0x778] sm:$0xff]
          %v555 = vld [vmem:[#allocation8 + $0x780] sm:$0xff]
          %v556 = vld [vmem:[#allocation8 + $0x788] sm:$0xff]
          %v557 = vld [vmem:[#allocation8 + $0x790] sm:$0xff]
          %v558 = vld [vmem:[#allocation8 + $0x798] sm:$0xff]
          %v559 = vld [vmem:[#allocation8 + $0x7a0] sm:$0xff]
          %v560 = vld [vmem:[#allocation8 + $0x7a8] sm:$0xff]
          %v561 = vld [vmem:[#allocation8 + $0x7b0] sm:$0xff]
          %v562 = vld [vmem:[#allocation8 + $0x7b8] sm:$0xff]
          %v563 = vld [vmem:[#allocation8 + $0x7c0] sm:$0xff]
          %v564 = vld [vmem:[#allocation8 + $0x7c8] sm:$0xff]
          %v565 = vld [vmem:[#allocation8 + $0x7d0] sm:$0xff]
          %v566 = vld [vmem:[#allocation8 + $0x7d8] sm:$0xff]
          %v567 = vld [vmem:[#allocation8 + $0x7e0] sm:$0xff]
          %v568 = vld [vmem:[#allocation8 + $0x7e8] sm:$0xff]
          %v569 = vld [vmem:[#allocation8 + $0x7f0] sm:$0xff]
          %v570 = vld [vmem:[#allocation8 + $0x7f8] sm:$0xff]
          %v571 = vld [vmem:[#allocation8 + $0x800] sm:$0xff]
          %v572 = vld [vmem:[#allocation8 + $0x808] sm:$0xff]
          %v573 = vld [vmem:[#allocation8 + $0x810] sm:$0xff]
          %v574 = vld [vmem:[#allocation8 + $0x818] sm:$0xff]
          %v575 = vld [vmem:[#allocation8 + $0x820] sm:$0xff]
          %v576 = vld [vmem:[#allocation8 + $0x828] sm:$0xff]
          %v577 = vld [vmem:[#allocation8 + $0x830] sm:$0xff]
          %v578 = vld [vmem:[#allocation8 + $0x838] sm:$0xff]
          %v579 = vld [vmem:[#allocation8 + $0x840] sm:$0xff]
          %v580 = vld [vmem:[#allocation8 + $0x848] sm:$0xff]
          %v581 = vld [vmem:[#allocation8 + $0x850] sm:$0xff]
          %v582 = vld [vmem:[#allocation8 + $0x858] sm:$0xff]
          %v583 = vld [vmem:[#allocation8 + $0x860] sm:$0xff]
          %v584 = vld [vmem:[#allocation8 + $0x868] sm:$0xff]
          %v585 = vld [vmem:[#allocation8 + $0x870] sm:$0xff]
          %v586 = vld [vmem:[#allocation8 + $0x878] sm:$0xff]
          %v587 = vld [vmem:[#allocation8 + $0x880] sm:$0xff]
          %v588 = vld [vmem:[#allocation8 + $0x888] sm:$0xff]
          %v589 = vld [vmem:[#allocation8 + $0x890] sm:$0xff]
          %v590 = vld [vmem:[#allocation8 + $0x898] sm:$0xff]
          %v591 = vld [vmem:[#allocation8 + $0x8a0] sm:$0xff]
          %v592 = vld [vmem:[#allocation8 + $0x8a8] sm:$0xff]
          %v593 = vld [vmem:[#allocation8 + $0x8b0] sm:$0xff]
          %v594 = vld [vmem:[#allocation8 + $0x8b8] sm:$0xff]
          %v595 = vld [vmem:[#allocation8 + $0x8c0] sm:$0xff]
          %v596 = vld [vmem:[#allocation8 + $0x8c8] sm:$0xff]
          %v597 = vld [vmem:[#allocation8 + $0x8d0] sm:$0xff]
          %v598 = vld [vmem:[#allocation8 + $0x8d8] sm:$0xff]
          %v599 = vld [vmem:[#allocation8 + $0x8e0] sm:$0xff]
          %v600 = vld [vmem:[#allocation8 + $0x8e8] sm:$0xff]
          %v601 = vld [vmem:[#allocation8 + $0x8f0] sm:$0xff]
          %v602 = vld [vmem:[#allocation8 + $0x8f8] sm:$0xff]
          %v603 = vld [vmem:[#allocation8 + $0x900] sm:$0xff]
          %v604 = vld [vmem:[#allocation8 + $0x908] sm:$0xff]
          %v605 = vld [vmem:[#allocation8 + $0x910] sm:$0xff]
          %v606 = vld [vmem:[#allocation8 + $0x918] sm:$0xff]
          %v607 = vld [vmem:[#allocation8 + $0x920] sm:$0xff]
          %v608 = vld [vmem:[#allocation8 + $0x928] sm:$0xff]
          %v609 = vld [vmem:[#allocation8 + $0x930] sm:$0xff]
          %v610 = vld [vmem:[#allocation8 + $0x938] sm:$0xff]
          %v611 = vld [vmem:[#allocation8 + $0x940] sm:$0xff]
          %v612 = vld [vmem:[#allocation8 + $0x948] sm:$0xff]
          %v613 = vld [vmem:[#allocation8 + $0x950] sm:$0xff]
          %v614 = vld [vmem:[#allocation8 + $0x958] sm:$0xff]
          %v615 = vld [vmem:[#allocation8 + $0x960] sm:$0xff]
          %v616 = vld [vmem:[#allocation8 + $0x968] sm:$0xff]
          %v617 = vld [vmem:[#allocation8 + $0x970] sm:$0xff]
          %v618 = vld [vmem:[#allocation8 + $0x978] sm:$0xff]
          %v619 = vld [vmem:[#allocation8 + $0x980] sm:$0xff]
          %v620 = vld [vmem:[#allocation8 + $0x988] sm:$0xff]
          %v621 = vld [vmem:[#allocation8 + $0x990] sm:$0xff]
          %v622 = vld [vmem:[#allocation8 + $0x998] sm:$0xff]
          %v623 = vld [vmem:[#allocation8 + $0x9a0] sm:$0xff]
          %v624 = vld [vmem:[#allocation8 + $0x9a8] sm:$0xff]
          %v625 = vld [vmem:[#allocation8 + $0x9b0] sm:$0xff]
          %v626 = vld [vmem:[#allocation8 + $0x9b8] sm:$0xff]
          %v627 = vld [vmem:[#allocation8 + $0x9c0] sm:$0xff]
          %v628 = vld [vmem:[#allocation8 + $0x9c8] sm:$0xff]
          %v629 = vld [vmem:[#allocation8 + $0x9d0] sm:$0xff]
          %v630 = vld [vmem:[#allocation8 + $0x9d8] sm:$0xff]
          %v631 = vld [vmem:[#allocation8 + $0x9e0] sm:$0xff]
          %v632 = vld [vmem:[#allocation8 + $0x9e8] sm:$0xff]
          %v633 = vld [vmem:[#allocation8 + $0x9f0] sm:$0xff]
          %v634 = vld [vmem:[#allocation8 + $0x9f8] sm:$0xff]
          %v635 = vld [vmem:[#allocation8 + $0xa00] sm:$0xff]
          %v636 = vld [vmem:[#allocation8 + $0xa08] sm:$0xff]
          %v637 = vld [vmem:[#allocation8 + $0xa10] sm:$0xff]
          %v638 = vld [vmem:[#allocation8 + $0xa18] sm:$0xff]
          %v639 = vld [vmem:[#allocation8 + $0xa20] sm:$0xff]
          %v640 = vld [vmem:[#allocation8 + $0xa28] sm:$0xff]
          %v641 = vld [vmem:[#allocation8 + $0xa30] sm:$0xff]
          %v642 = vld [vmem:[#allocation8 + $0xa38] sm:$0xff]
          %v643 = vld [vmem:[#allocation8 + $0xa40] sm:$0xff]
          %v644 = vld [vmem:[#allocation8 + $0xa48] sm:$0xff]
          %v645 = vld [vmem:[#allocation8 + $0xa50] sm:$0xff]
          %v646 = vld [vmem:[#allocation8 + $0xa58] sm:$0xff]
          %v647 = vld [vmem:[#allocation8 + $0xa60] sm:$0xff]
          %v648 = vld [vmem:[#allocation8 + $0xa68] sm:$0xff]
          %v649 = vld [vmem:[#allocation8 + $0xa70] sm:$0xff]
          %v650 = vld [vmem:[#allocation8 + $0xa78] sm:$0xff]
          %v651 = vld [vmem:[#allocation8 + $0xa80] sm:$0xff]
          %v652 = vld [vmem:[#allocation8 + $0xa88] sm:$0xff]
          %v653 = vld [vmem:[#allocation8 + $0xa90] sm:$0xff]
          %v654 = vld [vmem:[#allocation8 + $0xa98] sm:$0xff]
          %v655 = vld [vmem:[#allocation8 + $0xaa0] sm:$0xff]
          %v656 = vld [vmem:[#allocation8 + $0xaa8] sm:$0xff]
          %v657 = vld [vmem:[#allocation8 + $0xab0] sm:$0xff]
          %v658 = vld [vmem:[#allocation8 + $0xab8] sm:$0xff]
          %v659 = vld [vmem:[#allocation8 + $0xac0] sm:$0xff]
          %v660 = vld [vmem:[#allocation8 + $0xac8] sm:$0xff]
          %v661 = vld [vmem:[#allocation8 + $0xad0] sm:$0xff]
          %v662 = vld [vmem:[#allocation8 + $0xad8] sm:$0xff]
          %v663 = vld [vmem:[#allocation8 + $0xae0] sm:$0xff]
          %v664 = vld [vmem:[#allocation8 + $0xae8] sm:$0xff]
          %v665 = vld [vmem:[#allocation8 + $0xaf0] sm:$0xff]
          %v666 = vld [vmem:[#allocation8 + $0xaf8] sm:$0xff]
          %v667 = vld [vmem:[#allocation8 + $0xb00] sm:$0xff]
          %v668 = vld [vmem:[#allocation8 + $0xb08] sm:$0xff]
          %v669 = vld [vmem:[#allocation8 + $0xb10] sm:$0xff]
          %v670 = vld [vmem:[#allocation8 + $0xb18] sm:$0xff]
          %v671 = vld [vmem:[#allocation8 + $0xb20] sm:$0xff]
          %v672 = vld [vmem:[#allocation8 + $0xb28] sm:$0xff]
          %v673 = vld [vmem:[#allocation8 + $0xb30] sm:$0xff]
          %v674 = vld [vmem:[#allocation8 + $0xb38] sm:$0xff]
          %v675 = vld [vmem:[#allocation8 + $0xb40] sm:$0xff]
          %v676 = vld [vmem:[#allocation8 + $0xb48] sm:$0xff]
          %v677 = vld [vmem:[#allocation8 + $0xb50] sm:$0xff]
          %v678 = vld [vmem:[#allocation8 + $0xb58] sm:$0xff]
          %v679 = vld [vmem:[#allocation8 + $0xb60] sm:$0xff]
          %v680 = vld [vmem:[#allocation8 + $0xb68] sm:$0xff]
          %v681 = vld [vmem:[#allocation8 + $0xb70] sm:$0xff]
          %v682 = vld [vmem:[#allocation8 + $0xb78] sm:$0xff]
          %v683 = vld [vmem:[#allocation8 + $0xb80] sm:$0xff]
          %v684 = vld [vmem:[#allocation8 + $0xb88] sm:$0xff]
          %v685 = vld [vmem:[#allocation8 + $0xb90] sm:$0xff]
          %v686 = vld [vmem:[#allocation8 + $0xb98] sm:$0xff]
          %v687 = vld [vmem:[#allocation8 + $0xba0] sm:$0xff]
          %v688 = vld [vmem:[#allocation8 + $0xba8] sm:$0xff]
          %v689 = vld [vmem:[#allocation8 + $0xbb0] sm:$0xff]
          %v690 = vld [vmem:[#allocation8 + $0xbb8] sm:$0xff]
          %v691 = vld [vmem:[#allocation8 + $0xbc0] sm:$0xff]
          %v692 = vld [vmem:[#allocation8 + $0xbc8] sm:$0xff]
          %v693 = vld [vmem:[#allocation8 + $0xbd0] sm:$0xff]
          %v694 = vld [vmem:[#allocation8 + $0xbd8] sm:$0xff]
          %v695 = vld [vmem:[#allocation8 + $0xbe0] sm:$0xff]
          %v696 = vld [vmem:[#allocation8 + $0xbe8] sm:$0xff]
          %v697 = vld [vmem:[#allocation8 + $0xbf0] sm:$0xff]
          %v698 = vld [vmem:[#allocation8 + $0xbf8] sm:$0xff]
          %v699 = vld [vmem:[#allocation8 + $0xc00] sm:$0xff]
          %v700 = vld [vmem:[#allocation8 + $0xc08] sm:$0xff]
          %v701 = vld [vmem:[#allocation8 + $0xc10] sm:$0xff]
          %v702 = vld [vmem:[#allocation8 + $0xc18] sm:$0xff]
          %v703 = vld [vmem:[#allocation8 + $0xc20] sm:$0xff]
          %v704 = vld [vmem:[#allocation8 + $0xc28] sm:$0xff]
          %v705 = vld [vmem:[#allocation8 + $0xc30] sm:$0xff]
          %v706 = vld [vmem:[#allocation8 + $0xc38] sm:$0xff]
          %v707 = vld [vmem:[#allocation8 + $0xc40] sm:$0xff]
          %v708 = vld [vmem:[#allocation8 + $0xc48] sm:$0xff]
          %v709 = vld [vmem:[#allocation8 + $0xc50] sm:$0xff]
          %v710 = vld [vmem:[#allocation8 + $0xc58] sm:$0xff]
          %v711 = vld [vmem:[#allocation8 + $0xc60] sm:$0xff]
          %v712 = vld [vmem:[#allocation8 + $0xc68] sm:$0xff]
          %v713 = vld [vmem:[#allocation8 + $0xc70] sm:$0xff]
          %v714 = vld [vmem:[#allocation8 + $0xc78] sm:$0xff]
          %v715 = vld [vmem:[#allocation8 + $0xc80] sm:$0xff]
          %v716 = vld [vmem:[#allocation8 + $0xc88] sm:$0xff]
          %v717 = vld [vmem:[#allocation8 + $0xc90] sm:$0xff]
          %v718 = vld [vmem:[#allocation8 + $0xc98] sm:$0xff]
          %v719 = vld [vmem:[#allocation8 + $0xca0] sm:$0xff]
          %v720 = vld [vmem:[#allocation8 + $0xca8] sm:$0xff]
          %v721 = vld [vmem:[#allocation8 + $0xcb0] sm:$0xff]
          %v722 = vld [vmem:[#allocation8 + $0xcb8] sm:$0xff]
          %v723 = vld [vmem:[#allocation8 + $0xcc0] sm:$0xff]
          %v724 = vld [vmem:[#allocation8 + $0xcc8] sm:$0xff]
          %v725 = vld [vmem:[#allocation8 + $0xcd0] sm:$0xff]
          %v726 = vld [vmem:[#allocation8 + $0xcd8] sm:$0xff]
          %v727 = vld [vmem:[#allocation8 + $0xce0] sm:$0xff]
          %v728 = vld [vmem:[#allocation8 + $0xce8] sm:$0xff]
          %v729 = vld [vmem:[#allocation8 + $0xcf0] sm:$0xff]
          %v730 = vld [vmem:[#allocation8 + $0xcf8] sm:$0xff]
          %v731 = vld [vmem:[#allocation8 + $0xd00] sm:$0xff]
          %v732 = vld [vmem:[#allocation8 + $0xd08] sm:$0xff]
          %v733 = vld [vmem:[#allocation8 + $0xd10] sm:$0xff]
          %v734 = vld [vmem:[#allocation8 + $0xd18] sm:$0xff]
          %v735 = vld [vmem:[#allocation8 + $0xd20] sm:$0xff]
          %v736 = vld [vmem:[#allocation8 + $0xd28] sm:$0xff]
          %v737 = vld [vmem:[#allocation8 + $0xd30] sm:$0xff]
          %v738 = vld [vmem:[#allocation8 + $0xd38] sm:$0xff]
          %v739 = vld [vmem:[#allocation8 + $0xd40] sm:$0xff]
          %v740 = vld [vmem:[#allocation8 + $0xd48] sm:$0xff]
          %v741 = vld [vmem:[#allocation8 + $0xd50] sm:$0xff]
          %v742 = vld [vmem:[#allocation8 + $0xd58] sm:$0xff]
          %v743 = vld [vmem:[#allocation8 + $0xd60] sm:$0xff]
          %v744 = vld [vmem:[#allocation8 + $0xd68] sm:$0xff]
          %v745 = vld [vmem:[#allocation8 + $0xd70] sm:$0xff]
          %v746 = vld [vmem:[#allocation8 + $0xd78] sm:$0xff]
          %v747 = vld [vmem:[#allocation8 + $0xd80] sm:$0xff]
          %v748 = vld [vmem:[#allocation8 + $0xd88] sm:$0xff]
          %v749 = vld [vmem:[#allocation8 + $0xd90] sm:$0xff]
          %v750 = vld [vmem:[#allocation8 + $0xd98] sm:$0xff]
          %v751 = vld [vmem:[#allocation8 + $0xda0] sm:$0xff]
          %v752 = vld [vmem:[#allocation8 + $0xda8] sm:$0xff]
          %v753 = vld [vmem:[#allocation8 + $0xdb0] sm:$0xff]
          %v754 = vld [vmem:[#allocation8 + $0xdb8] sm:$0xff]
          %v755 = vld [vmem:[#allocation8 + $0xdc0] sm:$0xff]
          %v756 = vld [vmem:[#allocation8 + $0xdc8] sm:$0xff]
          %v757 = vld [vmem:[#allocation8 + $0xdd0] sm:$0xff]
          %v758 = vld [vmem:[#allocation8 + $0xdd8] sm:$0xff]
          %v759 = vld [vmem:[#allocation8 + $0xde0] sm:$0xff]
          %v760 = vld [vmem:[#allocation8 + $0xde8] sm:$0xff]
          %v761 = vld [vmem:[#allocation8 + $0xdf0] sm:$0xff]
          %v762 = vld [vmem:[#allocation8 + $0xdf8] sm:$0xff]
          %v763 = vld [vmem:[#allocation8 + $0xe00] sm:$0xff]
          %v764 = vld [vmem:[#allocation8 + $0xe08] sm:$0xff]
          %v765 = vld [vmem:[#allocation8 + $0xe10] sm:$0xff]
          %v766 = vld [vmem:[#allocation8 + $0xe18] sm:$0xff]
          %v767 = vld [vmem:[#allocation8 + $0xe20] sm:$0xff]
          %v768 = vld [vmem:[#allocation8 + $0xe28] sm:$0xff]
          %v769 = vld [vmem:[#allocation8 + $0xe30] sm:$0xff]
          %v770 = vld [vmem:[#allocation8 + $0xe38] sm:$0xff]
          %v771 = vld [vmem:[#allocation8 + $0xe40] sm:$0xff]
          %v772 = vld [vmem:[#allocation8 + $0xe48] sm:$0xff]
          %v773 = vld [vmem:[#allocation8 + $0xe50] sm:$0xff]
          %v774 = vld [vmem:[#allocation8 + $0xe58] sm:$0xff]
          %v775 = vld [vmem:[#allocation8 + $0xe60] sm:$0xff]
          %v776 = vld [vmem:[#allocation8 + $0xe68] sm:$0xff]
          %v777 = vld [vmem:[#allocation8 + $0xe70] sm:$0xff]
          %v778 = vld [vmem:[#allocation8 + $0xe78] sm:$0xff]
          %v779 = vld [vmem:[#allocation8 + $0xe80] sm:$0xff]
          %v780 = vld [vmem:[#allocation8 + $0xe88] sm:$0xff]
          %v781 = vld [vmem:[#allocation8 + $0xe90] sm:$0xff]
          %v782 = vld [vmem:[#allocation8 + $0xe98] sm:$0xff]
          %v783 = vld [vmem:[#allocation8 + $0xea0] sm:$0xff]
          %v784 = vld [vmem:[#allocation8 + $0xea8] sm:$0xff]
          %v785 = vld [vmem:[#allocation8 + $0xeb0] sm:$0xff]
          %v786 = vld [vmem:[#allocation8 + $0xeb8] sm:$0xff]
          %v787 = vld [vmem:[#allocation8 + $0xec0] sm:$0xff]
          %v788 = vld [vmem:[#allocation8 + $0xec8] sm:$0xff]
          %v789 = vld [vmem:[#allocation8 + $0xed0] sm:$0xff]
          %v790 = vld [vmem:[#allocation8 + $0xed8] sm:$0xff]
          %v791 = vld [vmem:[#allocation8 + $0xee0] sm:$0xff]
          %v792 = vld [vmem:[#allocation8 + $0xee8] sm:$0xff]
          %v793 = vld [vmem:[#allocation8 + $0xef0] sm:$0xff]
          %v794 = vld [vmem:[#allocation8 + $0xef8] sm:$0xff]
          %v795 = vld [vmem:[#allocation8 + $0xf00] sm:$0xff]
          %v796 = vld [vmem:[#allocation8 + $0xf08] sm:$0xff]
          %v797 = vld [vmem:[#allocation8 + $0xf10] sm:$0xff]
          %v798 = vld [vmem:[#allocation8 + $0xf18] sm:$0xff]
          %v799 = vld [vmem:[#allocation8 + $0xf20] sm:$0xff]
          %v800 = vld [vmem:[#allocation8 + $0xf28] sm:$0xff]
          %v801 = vld [vmem:[#allocation8 + $0xf30] sm:$0xff]
          %v802 = vld [vmem:[#allocation8 + $0xf38] sm:$0xff]
          %v803 = vld [vmem:[#allocation8 + $0xf40] sm:$0xff]
          %v804 = vld [vmem:[#allocation8 + $0xf48] sm:$0xff]
          %v805 = vld [vmem:[#allocation8 + $0xf50] sm:$0xff]
          %v806 = vld [vmem:[#allocation8 + $0xf58] sm:$0xff]
          %v807 = vld [vmem:[#allocation8 + $0xf60] sm:$0xff]
          %v808 = vld [vmem:[#allocation8 + $0xf68] sm:$0xff]
          %v809 = vld [vmem:[#allocation8 + $0xf70] sm:$0xff]
          %v810 = vld [vmem:[#allocation8 + $0xf78] sm:$0xff]
          %v811 = vld [vmem:[#allocation8 + $0xf80] sm:$0xff]
          %v812 = vld [vmem:[#allocation8 + $0xf88] sm:$0xff]
          %v813 = vld [vmem:[#allocation8 + $0xf90] sm:$0xff]
          %v814 = vld [vmem:[#allocation8 + $0xf98] sm:$0xff]
          %v815 = vld [vmem:[#allocation8 + $0xfa0] sm:$0xff]
          %v816 = vld [vmem:[#allocation8 + $0xfa8] sm:$0xff]
          %v817 = vld [vmem:[#allocation8 + $0xfb0] sm:$0xff]
          %v818 = vld [vmem:[#allocation8 + $0xfb8] sm:$0xff]
          %v819 = vld [vmem:[#allocation8 + $0xfc0] sm:$0xff]
          %v820 = vld [vmem:[#allocation8 + $0xfc8] sm:$0xff]
          %v821 = vld [vmem:[#allocation8 + $0xfd0] sm:$0xff]
          %v822 = vld [vmem:[#allocation8 + $0xfd8] sm:$0xff]
          %v823 = vld [vmem:[#allocation8 + $0xfe0] sm:$0xff]
          %v824 = vld [vmem:[#allocation8 + $0xfe8] sm:$0xff]
          %v825 = vld [vmem:[#allocation8 + $0xff0] sm:$0xff]
          %v826 = vld [vmem:[#allocation8 + $0xff8] sm:$0xff]
          %v827 = vld [vmem:[#allocation8 + $0x1000] sm:$0xff]
          %v828 = vld [vmem:[#allocation8 + $0x1008] sm:$0xff]
          %v829 = vld [vmem:[#allocation8 + $0x1010] sm:$0xff]
          %v830 = vld [vmem:[#allocation8 + $0x1018] sm:$0xff]
          %v831 = vld [vmem:[#allocation8 + $0x1020] sm:$0xff]
          %v832 = vld [vmem:[#allocation8 + $0x1028] sm:$0xff]
          %v833 = vld [vmem:[#allocation8 + $0x1030] sm:$0xff]
          %v834 = vld [vmem:[#allocation8 + $0x1038] sm:$0xff]
          %v835 = vld [vmem:[#allocation8 + $0x1040] sm:$0xff]
          %v836 = vld [vmem:[#allocation8 + $0x1048] sm:$0xff]
          %v837 = vld [vmem:[#allocation8 + $0x1050] sm:$0xff]
          %v838 = vld [vmem:[#allocation8 + $0x1058] sm:$0xff]
          %v839 = vld [vmem:[#allocation8 + $0x1060] sm:$0xff]
          %v840 = vld [vmem:[#allocation8 + $0x1068] sm:$0xff]
          %v841 = vld [vmem:[#allocation8 + $0x1070] sm:$0xff]
          %v842 = vld [vmem:[#allocation8 + $0x1078] sm:$0xff]
          %v843 = vld [vmem:[#allocation8 + $0x1080] sm:$0xff]
          %v844 = vld [vmem:[#allocation8 + $0x1088] sm:$0xff]
          %v845 = vld [vmem:[#allocation8 + $0x1090] sm:$0xff]
          %v846 = vld [vmem:[#allocation8 + $0x1098] sm:$0xff]
          %v847 = vld [vmem:[#allocation8 + $0x10a0] sm:$0xff]
          %v848 = vld [vmem:[#allocation8 + $0x10a8] sm:$0xff]
          %v849 = vld [vmem:[#allocation8 + $0x10b0] sm:$0xff]
          %v850 = vld [vmem:[#allocation8 + $0x10b8] sm:$0xff]
          %v851 = vld [vmem:[#allocation8 + $0x10c0] sm:$0xff]
          %v852 = vld [vmem:[#allocation8 + $0x10c8] sm:$0xff]
          %v853 = vld [vmem:[#allocation8 + $0x10d0] sm:$0xff]
          %v854 = vld [vmem:[#allocation8 + $0x10d8] sm:$0xff]
          %v855 = vld [vmem:[#allocation8 + $0x10e0] sm:$0xff]
          %v856 = vld [vmem:[#allocation8 + $0x10e8] sm:$0xff]
          %v857 = vld [vmem:[#allocation8 + $0x10f0] sm:$0xff]
          %v858 = vld [vmem:[#allocation8 + $0x10f8] sm:$0xff]
          %v859 = vld [vmem:[#allocation8 + $0x1100] sm:$0xff]
          %v860 = vld [vmem:[#allocation8 + $0x1108] sm:$0xff]
          %v861 = vld [vmem:[#allocation8 + $0x1110] sm:$0xff]
          %v862 = vld [vmem:[#allocation8 + $0x1118] sm:$0xff]
          %v863 = vld [vmem:[#allocation8 + $0x1120] sm:$0xff]
          %v864 = vld [vmem:[#allocation8 + $0x1128] sm:$0xff]
          %v865 = vld [vmem:[#allocation8 + $0x1130] sm:$0xff]
          %v866 = vld [vmem:[#allocation8 + $0x1138] sm:$0xff]
          %v867 = vld [vmem:[#allocation8 + $0x1140] sm:$0xff]
          %v868 = vld [vmem:[#allocation8 + $0x1148] sm:$0xff]
          %v869 = vld [vmem:[#allocation8 + $0x1150] sm:$0xff]
          %v870 = vld [vmem:[#allocation8 + $0x1158] sm:$0xff]
          %v871 = vld [vmem:[#allocation8 + $0x1160] sm:$0xff]
          %v872 = vld [vmem:[#allocation8 + $0x1168] sm:$0xff]
          %v873 = vld [vmem:[#allocation8 + $0x1170] sm:$0xff]
          %v874 = vld [vmem:[#allocation8 + $0x1178] sm:$0xff]
          %v875 = vld [vmem:[#allocation8 + $0x1180] sm:$0xff]
          %v876 = vld [vmem:[#allocation8 + $0x1188] sm:$0xff]
          %v877 = vld [vmem:[#allocation8 + $0x1190] sm:$0xff]
          %v878 = vld [vmem:[#allocation8 + $0x1198] sm:$0xff]
          %v879 = vld [vmem:[#allocation8 + $0x11a0] sm:$0xff]
          %v880 = vld [vmem:[#allocation8 + $0x11a8] sm:$0xff]
          %v881 = vld [vmem:[#allocation8 + $0x11b0] sm:$0xff]
          %v882 = vld [vmem:[#allocation8 + $0x11b8] sm:$0xff]
          %v883 = vld [vmem:[#allocation8 + $0x11c0] sm:$0xff]
          %v884 = vld [vmem:[#allocation8 + $0x11c8] sm:$0xff]
          %v885 = vld [vmem:[#allocation8 + $0x11d0] sm:$0xff]
          %v886 = vld [vmem:[#allocation8 + $0x11d8] sm:$0xff]
          %v887 = vld [vmem:[#allocation8 + $0x11e0] sm:$0xff]
          %v888 = vld [vmem:[#allocation8 + $0x11e8] sm:$0xff]
          %v889 = vld [vmem:[#allocation8 + $0x11f0] sm:$0xff]
          %v890 = vld [vmem:[#allocation8 + $0x11f8] sm:$0xff]
          %v891 = vld [vmem:[#allocation10] sm:$0xff]
          %v892 = vld [vmem:[#allocation10 + $0x8] sm:$0xf]
          %v1469 = vunpack.c.l.b16 %v315
          %v1470 = vunpack.c.h.b16 %v315
          %v1471 = vunpack.c.l.b16 %v316
          %v1472 = vunpack.c.h.b16 %v316
          %v1473 = vunpack.c.l.b16 %v317
          %v1474 = vunpack.c.h.b16 %v317
          %v1475 = vunpack.c.l.b16 %v318
          %v1476 = vunpack.c.h.b16 %v318
          %v1477 = vunpack.c.l.b16 %v319
          %v1478 = vunpack.c.h.b16 %v319
          %v1479 = vunpack.c.l.b16 %v320
          %v1480 = vunpack.c.h.b16 %v320
          %v1481 = vunpack.c.l.b16 %v321
          %v1482 = vunpack.c.h.b16 %v321
          %v1483 = vunpack.c.l.b16 %v322
          %v1484 = vunpack.c.h.b16 %v322
          %v1485 = vunpack.c.l.b16 %v323
          %v1486 = vunpack.c.h.b16 %v323
          %v1487 = vunpack.c.l.b16 %v324
          %v1488 = vunpack.c.h.b16 %v324
          %v1489 = vunpack.c.l.b16 %v325
          %v1490 = vunpack.c.h.b16 %v325
          %v1491 = vunpack.c.l.b16 %v326
          %v1492 = vunpack.c.h.b16 %v326
          %v1493 = vunpack.c.l.b16 %v327
          %v1494 = vunpack.c.h.b16 %v327
          %v1495 = vunpack.c.l.b16 %v328
          %v1496 = vunpack.c.h.b16 %v328
          %v1497 = vunpack.c.l.b16 %v329
          %v1498 = vunpack.c.h.b16 %v329
          %v1499 = vunpack.c.l.b16 %v330
          %v1500 = vunpack.c.h.b16 %v330
          %v1501 = vunpack.c.l.b16 %v331
          %v1502 = vunpack.c.h.b16 %v331
          %v1503 = vunpack.c.l.b16 %v332
          %v1504 = vunpack.c.h.b16 %v332
          %v1505 = vunpack.c.l.b16 %v333
          %v1506 = vunpack.c.h.b16 %v333
          %v1507 = vunpack.c.l.b16 %v334
          %v1508 = vunpack.c.h.b16 %v334
          %v1509 = vunpack.c.l.b16 %v335
          %v1510 = vunpack.c.h.b16 %v335
          %v1511 = vunpack.c.l.b16 %v336
          %v1512 = vunpack.c.h.b16 %v336
          %v1513 = vunpack.c.l.b16 %v337
          %v1514 = vunpack.c.h.b16 %v337
          %v1515 = vunpack.c.l.b16 %v338
          %v1516 = vunpack.c.h.b16 %v338
          %v1517 = vunpack.c.l.b16 %v339
          %v1518 = vunpack.c.h.b16 %v339
          %v1519 = vunpack.c.l.b16 %v340
          %v1520 = vunpack.c.h.b16 %v340
          %v1521 = vunpack.c.l.b16 %v341
          %v1522 = vunpack.c.h.b16 %v341
          %v1523 = vunpack.c.l.b16 %v342
          %v1524 = vunpack.c.h.b16 %v342
          %v1525 = vunpack.c.l.b16 %v343
          %v1526 = vunpack.c.h.b16 %v343
          %v1527 = vunpack.c.l.b16 %v344
          %v1528 = vunpack.c.h.b16 %v344
          %v1529 = vunpack.c.l.b16 %v345
          %v1530 = vunpack.c.h.b16 %v345
          %v1531 = vunpack.c.l.b16 %v346
          %v1532 = vunpack.c.h.b16 %v346
          %v1533 = vunpack.c.l.b16 %v347
          %v1534 = vunpack.c.h.b16 %v347
          %v1535 = vunpack.c.l.b16 %v348
          %v1536 = vunpack.c.h.b16 %v348
          %v1537 = vunpack.c.l.b16 %v349
          %v1538 = vunpack.c.h.b16 %v349
          %v1539 = vunpack.c.l.b16 %v350
          %v1540 = vunpack.c.h.b16 %v350
          %v1541 = vunpack.c.l.b16 %v351
          %v1542 = vunpack.c.h.b16 %v351
          %v1543 = vunpack.c.l.b16 %v352
          %v1544 = vunpack.c.h.b16 %v352
          %v1545 = vunpack.c.l.b16 %v353
          %v1546 = vunpack.c.h.b16 %v353
          %v1547 = vunpack.c.l.b16 %v354
          %v1548 = vunpack.c.h.b16 %v354
          %v1549 = vunpack.c.l.b16 %v355
          %v1550 = vunpack.c.h.b16 %v355
          %v1551 = vunpack.c.l.b16 %v356
          %v1552 = vunpack.c.h.b16 %v356
          %v1553 = vunpack.c.l.b16 %v357
          %v1554 = vunpack.c.h.b16 %v357
          %v1555 = vunpack.c.l.b16 %v358
          %v1556 = vunpack.c.h.b16 %v358
          %v1557 = vunpack.c.l.b16 %v359
          %v1558 = vunpack.c.h.b16 %v359
          %v1559 = vunpack.c.l.b16 %v360
          %v1560 = vunpack.c.h.b16 %v360
          %v1561 = vunpack.c.l.b16 %v361
          %v1562 = vunpack.c.h.b16 %v361
          %v1563 = vunpack.c.l.b16 %v362
          %v1564 = vunpack.c.h.b16 %v362
          %v1565 = vunpack.c.l.b16 %v363
          %v1566 = vunpack.c.h.b16 %v363
          %v1567 = vunpack.c.l.b16 %v364
          %v1568 = vunpack.c.h.b16 %v364
          %v1569 = vunpack.c.l.b16 %v365
          %v1570 = vunpack.c.h.b16 %v365
          %v1571 = vunpack.c.l.b16 %v366
          %v1572 = vunpack.c.h.b16 %v366
          %v1573 = vunpack.c.l.b16 %v367
          %v1574 = vunpack.c.h.b16 %v367
          %v1575 = vunpack.c.l.b16 %v368
          %v1576 = vunpack.c.h.b16 %v368
          %v1577 = vunpack.c.l.b16 %v369
          %v1578 = vunpack.c.h.b16 %v369
          %v1579 = vunpack.c.l.b16 %v370
          %v1580 = vunpack.c.h.b16 %v370
          %v1581 = vunpack.c.l.b16 %v371
          %v1582 = vunpack.c.h.b16 %v371
          %v1583 = vunpack.c.l.b16 %v372
          %v1584 = vunpack.c.h.b16 %v372
          %v1585 = vunpack.c.l.b16 %v373
          %v1586 = vunpack.c.h.b16 %v373
          %v1587 = vunpack.c.l.b16 %v374
          %v1588 = vunpack.c.h.b16 %v374
          %v1589 = vunpack.c.l.b16 %v375
          %v1590 = vunpack.c.h.b16 %v375
          %v1591 = vunpack.c.l.b16 %v376
          %v1592 = vunpack.c.h.b16 %v376
          %v1593 = vunpack.c.l.b16 %v377
          %v1594 = vunpack.c.h.b16 %v377
          %v1595 = vunpack.c.l.b16 %v378
          %v1596 = vunpack.c.h.b16 %v378
          %v1597 = vunpack.c.l.b16 %v379
          %v1598 = vunpack.c.h.b16 %v379
          %v1599 = vunpack.c.l.b16 %v380
          %v1600 = vunpack.c.h.b16 %v380
          %v1601 = vunpack.c.l.b16 %v381
          %v1602 = vunpack.c.h.b16 %v381
          %v1603 = vunpack.c.l.b16 %v382
          %v1604 = vunpack.c.h.b16 %v382
          %v1605 = vunpack.c.l.b16 %v383
          %v1606 = vunpack.c.h.b16 %v383
          %v1607 = vunpack.c.l.b16 %v384
          %v1608 = vunpack.c.h.b16 %v384
          %v1609 = vunpack.c.l.b16 %v385
          %v1610 = vunpack.c.h.b16 %v385
          %v1611 = vunpack.c.l.b16 %v386
          %v1612 = vunpack.c.h.b16 %v386
          %v1613 = vunpack.c.l.b16 %v387
          %v1614 = vunpack.c.h.b16 %v387
          %v1615 = vunpack.c.l.b16 %v388
          %v1616 = vunpack.c.h.b16 %v388
          %v1617 = vunpack.c.l.b16 %v389
          %v1618 = vunpack.c.h.b16 %v389
          %v1619 = vunpack.c.l.b16 %v390
          %v1620 = vunpack.c.h.b16 %v390
          %v1621 = vunpack.c.l.b16 %v391
          %v1622 = vunpack.c.h.b16 %v391
          %v1623 = vunpack.c.l.b16 %v392
          %v1624 = vunpack.c.h.b16 %v392
          %v1625 = vunpack.c.l.b16 %v393
          %v1626 = vunpack.c.h.b16 %v393
          %v1627 = vunpack.c.l.b16 %v394
          %v1628 = vunpack.c.h.b16 %v394
          %v1629 = vunpack.c.l.b16 %v395
          %v1630 = vunpack.c.h.b16 %v395
          %v1631 = vunpack.c.l.b16 %v396
          %v1632 = vunpack.c.h.b16 %v396
          %v1633 = vunpack.c.l.b16 %v397
          %v1634 = vunpack.c.h.b16 %v397
          %v1635 = vunpack.c.l.b16 %v398
          %v1636 = vunpack.c.h.b16 %v398
          %v1637 = vunpack.c.l.b16 %v399
          %v1638 = vunpack.c.h.b16 %v399
          %v1639 = vunpack.c.l.b16 %v400
          %v1640 = vunpack.c.h.b16 %v400
          %v1641 = vunpack.c.l.b16 %v401
          %v1642 = vunpack.c.h.b16 %v401
          %v1643 = vunpack.c.l.b16 %v402
          %v1644 = vunpack.c.h.b16 %v402
          %v1645 = vunpack.c.l.b16 %v403
          %v1646 = vunpack.c.h.b16 %v403
          %v1647 = vunpack.c.l.b16 %v404
          %v1648 = vunpack.c.h.b16 %v404
          %v1649 = vunpack.c.l.b16 %v405
          %v1650 = vunpack.c.h.b16 %v405
          %v1651 = vunpack.c.l.b16 %v406
          %v1652 = vunpack.c.h.b16 %v406
          %v1653 = vunpack.c.l.b16 %v407
          %v1654 = vunpack.c.h.b16 %v407
          %v1655 = vunpack.c.l.b16 %v408
          %v1656 = vunpack.c.h.b16 %v408
          %v1657 = vunpack.c.l.b16 %v409
          %v1658 = vunpack.c.h.b16 %v409
          %v1659 = vunpack.c.l.b16 %v410
          %v1660 = vunpack.c.h.b16 %v410
          %v1661 = vunpack.c.l.b16 %v411
          %v1662 = vunpack.c.h.b16 %v411
          %v1663 = vunpack.c.l.b16 %v412
          %v1664 = vunpack.c.h.b16 %v412
          %v1665 = vunpack.c.l.b16 %v413
          %v1666 = vunpack.c.h.b16 %v413
          %v1667 = vunpack.c.l.b16 %v414
          %v1668 = vunpack.c.h.b16 %v414
          %v1669 = vunpack.c.l.b16 %v415
          %v1670 = vunpack.c.h.b16 %v415
          %v1671 = vunpack.c.l.b16 %v416
          %v1672 = vunpack.c.h.b16 %v416
          %v1673 = vunpack.c.l.b16 %v417
          %v1674 = vunpack.c.h.b16 %v417
          %v1675 = vunpack.c.l.b16 %v418
          %v1676 = vunpack.c.h.b16 %v418
          %v1677 = vunpack.c.l.b16 %v419
          %v1678 = vunpack.c.h.b16 %v419
          %v1679 = vunpack.c.l.b16 %v420
          %v1680 = vunpack.c.h.b16 %v420
          %v1681 = vunpack.c.l.b16 %v421
          %v1682 = vunpack.c.h.b16 %v421
          %v1683 = vunpack.c.l.b16 %v422
          %v1684 = vunpack.c.h.b16 %v422
          %v1685 = vunpack.c.l.b16 %v423
          %v1686 = vunpack.c.h.b16 %v423
          %v1687 = vunpack.c.l.b16 %v424
          %v1688 = vunpack.c.h.b16 %v424
          %v1689 = vunpack.c.l.b16 %v425
          %v1690 = vunpack.c.h.b16 %v425
          %v1691 = vunpack.c.l.b16 %v426
          %v1692 = vunpack.c.h.b16 %v426
          %v1693 = vunpack.c.l.b16 %v427
          %v1694 = vunpack.c.h.b16 %v427
          %v1695 = vunpack.c.l.b16 %v428
          %v1696 = vunpack.c.h.b16 %v428
          %v1697 = vunpack.c.l.b16 %v429
          %v1698 = vunpack.c.h.b16 %v429
          %v1699 = vunpack.c.l.b16 %v430
          %v1700 = vunpack.c.h.b16 %v430
          %v1701 = vunpack.c.l.b16 %v431
          %v1702 = vunpack.c.h.b16 %v431
          %v1703 = vunpack.c.l.b16 %v432
          %v1704 = vunpack.c.h.b16 %v432
          %v1705 = vunpack.c.l.b16 %v433
          %v1706 = vunpack.c.h.b16 %v433
          %v1707 = vunpack.c.l.b16 %v434
          %v1708 = vunpack.c.h.b16 %v434
          %v1709 = vunpack.c.l.b16 %v435
          %v1710 = vunpack.c.h.b16 %v435
          %v1711 = vunpack.c.l.b16 %v436
          %v1712 = vunpack.c.h.b16 %v436
          %v1713 = vunpack.c.l.b16 %v437
          %v1714 = vunpack.c.h.b16 %v437
          %v1715 = vunpack.c.l.b16 %v438
          %v1716 = vunpack.c.h.b16 %v438
          %v1717 = vunpack.c.l.b16 %v439
          %v1718 = vunpack.c.h.b16 %v439
          %v1719 = vunpack.c.l.b16 %v440
          %v1720 = vunpack.c.h.b16 %v440
          %v1721 = vunpack.c.l.b16 %v441
          %v1722 = vunpack.c.h.b16 %v441
          %v1723 = vunpack.c.l.b16 %v442
          %v1724 = vunpack.c.h.b16 %v442
          %v1725 = vunpack.c.l.b16 %v443
          %v1726 = vunpack.c.h.b16 %v443
          %v1727 = vunpack.c.l.b16 %v444
          %v1728 = vunpack.c.h.b16 %v444
          %v1729 = vunpack.c.l.b16 %v445
          %v1730 = vunpack.c.h.b16 %v445
          %v1731 = vunpack.c.l.b16 %v446
          %v1732 = vunpack.c.h.b16 %v446
          %v1733 = vunpack.c.l.b16 %v447
          %v1734 = vunpack.c.h.b16 %v447
          %v1735 = vunpack.c.l.b16 %v448
          %v1736 = vunpack.c.h.b16 %v448
          %v1737 = vunpack.c.l.b16 %v449
          %v1738 = vunpack.c.h.b16 %v449
          %v1739 = vunpack.c.l.b16 %v450
          %v1740 = vunpack.c.h.b16 %v450
          %v1741 = vunpack.c.l.b16 %v451
          %v1742 = vunpack.c.h.b16 %v451
          %v1743 = vunpack.c.l.b16 %v452
          %v1744 = vunpack.c.h.b16 %v452
          %v1745 = vunpack.c.l.b16 %v453
          %v1746 = vunpack.c.h.b16 %v453
          %v1747 = vunpack.c.l.b16 %v454
          %v1748 = vunpack.c.h.b16 %v454
          %v1749 = vunpack.c.l.b16 %v455
          %v1750 = vunpack.c.h.b16 %v455
          %v1751 = vunpack.c.l.b16 %v456
          %v1752 = vunpack.c.h.b16 %v456
          %v1753 = vunpack.c.l.b16 %v457
          %v1754 = vunpack.c.h.b16 %v457
          %v1755 = vunpack.c.l.b16 %v458
          %v1756 = vunpack.c.h.b16 %v458
          %v1757 = vunpack.c.l.b16 %v459
          %v1758 = vunpack.c.h.b16 %v459
          %v1759 = vunpack.c.l.b16 %v460
          %v1760 = vunpack.c.h.b16 %v460
          %v1761 = vunpack.c.l.b16 %v461
          %v1762 = vunpack.c.h.b16 %v461
          %v1763 = vunpack.c.l.b16 %v462
          %v1764 = vunpack.c.h.b16 %v462
          %v1765 = vunpack.c.l.b16 %v463
          %v1766 = vunpack.c.h.b16 %v463
          %v1767 = vunpack.c.l.b16 %v464
          %v1768 = vunpack.c.h.b16 %v464
          %v1769 = vunpack.c.l.b16 %v465
          %v1770 = vunpack.c.h.b16 %v465
          %v1771 = vunpack.c.l.b16 %v466
          %v1772 = vunpack.c.h.b16 %v466
          %v1773 = vunpack.c.l.b16 %v467
          %v1774 = vunpack.c.h.b16 %v467
          %v1775 = vunpack.c.l.b16 %v468
          %v1776 = vunpack.c.h.b16 %v468
          %v1777 = vunpack.c.l.b16 %v469
          %v1778 = vunpack.c.h.b16 %v469
          %v1779 = vunpack.c.l.b16 %v470
          %v1780 = vunpack.c.h.b16 %v470
          %v1781 = vunpack.c.l.b16 %v471
          %v1782 = vunpack.c.h.b16 %v471
          %v1783 = vunpack.c.l.b16 %v472
          %v1784 = vunpack.c.h.b16 %v472
          %v1785 = vunpack.c.l.b16 %v473
          %v1786 = vunpack.c.h.b16 %v473
          %v1787 = vunpack.c.l.b16 %v474
          %v1788 = vunpack.c.h.b16 %v474
          %v1789 = vunpack.c.l.b16 %v475
          %v1790 = vunpack.c.h.b16 %v475
          %v1791 = vunpack.c.l.b16 %v476
          %v1792 = vunpack.c.h.b16 %v476
          %v1793 = vunpack.c.l.b16 %v477
          %v1794 = vunpack.c.h.b16 %v477
          %v1795 = vunpack.c.l.b16 %v478
          %v1796 = vunpack.c.h.b16 %v478
          %v1797 = vunpack.c.l.b16 %v479
          %v1798 = vunpack.c.h.b16 %v479
          %v1799 = vunpack.c.l.b16 %v480
          %v1800 = vunpack.c.h.b16 %v480
          %v1801 = vunpack.c.l.b16 %v481
          %v1802 = vunpack.c.h.b16 %v481
          %v1803 = vunpack.c.l.b16 %v482
          %v1804 = vunpack.c.h.b16 %v482
          %v1805 = vunpack.c.l.b16 %v483
          %v1806 = vunpack.c.h.b16 %v483
          %v1807 = vunpack.c.l.b16 %v484
          %v1808 = vunpack.c.h.b16 %v484
          %v1809 = vunpack.c.l.b16 %v485
          %v1810 = vunpack.c.h.b16 %v485
          %v1811 = vunpack.c.l.b16 %v486
          %v1812 = vunpack.c.h.b16 %v486
          %v1813 = vunpack.c.l.b16 %v487
          %v1814 = vunpack.c.h.b16 %v487
          %v1815 = vunpack.c.l.b16 %v488
          %v1816 = vunpack.c.h.b16 %v488
          %v1817 = vunpack.c.l.b16 %v489
          %v1818 = vunpack.c.h.b16 %v489
          %v1819 = vunpack.c.l.b16 %v490
          %v1820 = vunpack.c.h.b16 %v490
          %v1821 = vunpack.c.l.b16 %v491
          %v1822 = vunpack.c.h.b16 %v491
          %v1823 = vunpack.c.l.b16 %v492
          %v1824 = vunpack.c.h.b16 %v492
          %v1825 = vunpack.c.l.b16 %v493
          %v1826 = vunpack.c.h.b16 %v493
          %v1827 = vunpack.c.l.b16 %v494
          %v1828 = vunpack.c.h.b16 %v494
          %v1829 = vunpack.c.l.b16 %v495
          %v1830 = vunpack.c.h.b16 %v495
          %v1831 = vunpack.c.l.b16 %v496
          %v1832 = vunpack.c.h.b16 %v496
          %v1833 = vunpack.c.l.b16 %v497
          %v1834 = vunpack.c.h.b16 %v497
          %v1835 = vunpack.c.l.b16 %v498
          %v1836 = vunpack.c.h.b16 %v498
          %v1837 = vunpack.c.l.b16 %v499
          %v1838 = vunpack.c.h.b16 %v499
          %v1839 = vunpack.c.l.b16 %v500
          %v1840 = vunpack.c.h.b16 %v500
          %v1841 = vunpack.c.l.b16 %v501
          %v1842 = vunpack.c.h.b16 %v501
          %v1843 = vunpack.c.l.b16 %v502
          %v1844 = vunpack.c.h.b16 %v502
          %v1845 = vunpack.c.l.b16 %v503
          %v1846 = vunpack.c.h.b16 %v503
          %v1847 = vunpack.c.l.b16 %v504
          %v1848 = vunpack.c.h.b16 %v504
          %v1849 = vunpack.c.l.b16 %v505
          %v1850 = vunpack.c.h.b16 %v505
          %v1851 = vunpack.c.l.b16 %v506
          %v1852 = vunpack.c.h.b16 %v506
          %v1853 = vunpack.c.l.b16 %v507
          %v1854 = vunpack.c.h.b16 %v507
          %v1855 = vunpack.c.l.b16 %v508
          %v1856 = vunpack.c.h.b16 %v508
          %v1857 = vunpack.c.l.b16 %v509
          %v1858 = vunpack.c.h.b16 %v509
          %v1859 = vunpack.c.l.b16 %v510
          %v1860 = vunpack.c.h.b16 %v510
          %v1861 = vunpack.c.l.b16 %v511
          %v1862 = vunpack.c.h.b16 %v511
          %v1863 = vunpack.c.l.b16 %v512
          %v1864 = vunpack.c.h.b16 %v512
          %v1865 = vunpack.c.l.b16 %v513
          %v1866 = vunpack.c.h.b16 %v513
          %v1867 = vunpack.c.l.b16 %v514
          %v1868 = vunpack.c.h.b16 %v514
          %v1869 = vunpack.c.l.b16 %v515
          %v1870 = vunpack.c.h.b16 %v515
          %v1871 = vunpack.c.l.b16 %v516
          %v1872 = vunpack.c.h.b16 %v516
          %v1873 = vunpack.c.l.b16 %v517
          %v1874 = vunpack.c.h.b16 %v517
          %v1875 = vunpack.c.l.b16 %v518
          %v1876 = vunpack.c.h.b16 %v518
          %v1877 = vunpack.c.l.b16 %v519
          %v1878 = vunpack.c.h.b16 %v519
          %v1879 = vunpack.c.l.b16 %v520
          %v1880 = vunpack.c.h.b16 %v520
          %v1881 = vunpack.c.l.b16 %v521
          %v1882 = vunpack.c.h.b16 %v521
          %v1883 = vunpack.c.l.b16 %v522
          %v1884 = vunpack.c.h.b16 %v522
          %v1885 = vunpack.c.l.b16 %v523
          %v1886 = vunpack.c.h.b16 %v523
          %v1887 = vunpack.c.l.b16 %v524
          %v1888 = vunpack.c.h.b16 %v524
          %v1889 = vunpack.c.l.b16 %v525
          %v1890 = vunpack.c.h.b16 %v525
          %v1891 = vunpack.c.l.b16 %v526
          %v1892 = vunpack.c.h.b16 %v526
          %v1893 = vunpack.c.l.b16 %v527
          %v1894 = vunpack.c.h.b16 %v527
          %v1895 = vunpack.c.l.b16 %v528
          %v1896 = vunpack.c.h.b16 %v528
          %v1897 = vunpack.c.l.b16 %v529
          %v1898 = vunpack.c.h.b16 %v529
          %v1899 = vunpack.c.l.b16 %v530
          %v1900 = vunpack.c.h.b16 %v530
          %v1901 = vunpack.c.l.b16 %v531
          %v1902 = vunpack.c.h.b16 %v531
          %v1903 = vunpack.c.l.b16 %v532
          %v1904 = vunpack.c.h.b16 %v532
          %v1905 = vunpack.c.l.b16 %v533
          %v1906 = vunpack.c.h.b16 %v533
          %v1907 = vunpack.c.l.b16 %v534
          %v1908 = vunpack.c.h.b16 %v534
          %v1909 = vunpack.c.l.b16 %v535
          %v1910 = vunpack.c.h.b16 %v535
          %v1911 = vunpack.c.l.b16 %v536
          %v1912 = vunpack.c.h.b16 %v536
          %v1913 = vunpack.c.l.b16 %v537
          %v1914 = vunpack.c.h.b16 %v537
          %v1915 = vunpack.c.l.b16 %v538
          %v1916 = vunpack.c.h.b16 %v538
          %v1917 = vunpack.c.l.b16 %v539
          %v1918 = vunpack.c.h.b16 %v539
          %v1919 = vunpack.c.l.b16 %v540
          %v1920 = vunpack.c.h.b16 %v540
          %v1921 = vunpack.c.l.b16 %v541
          %v1922 = vunpack.c.h.b16 %v541
          %v1923 = vunpack.c.l.b16 %v542
          %v1924 = vunpack.c.h.b16 %v542
          %v1925 = vunpack.c.l.b16 %v543
          %v1926 = vunpack.c.h.b16 %v543
          %v1927 = vunpack.c.l.b16 %v544
          %v1928 = vunpack.c.h.b16 %v544
          %v1929 = vunpack.c.l.b16 %v545
          %v1930 = vunpack.c.h.b16 %v545
          %v1931 = vunpack.c.l.b16 %v546
          %v1932 = vunpack.c.h.b16 %v546
          %v1933 = vunpack.c.l.b16 %v547
          %v1934 = vunpack.c.h.b16 %v547
          %v1935 = vunpack.c.l.b16 %v548
          %v1936 = vunpack.c.h.b16 %v548
          %v1937 = vunpack.c.l.b16 %v549
          %v1938 = vunpack.c.h.b16 %v549
          %v1939 = vunpack.c.l.b16 %v550
          %v1940 = vunpack.c.h.b16 %v550
          %v1941 = vunpack.c.l.b16 %v551
          %v1942 = vunpack.c.h.b16 %v551
          %v1943 = vunpack.c.l.b16 %v552
          %v1944 = vunpack.c.h.b16 %v552
          %v1945 = vunpack.c.l.b16 %v553
          %v1946 = vunpack.c.h.b16 %v553
          %v1947 = vunpack.c.l.b16 %v554
          %v1948 = vunpack.c.h.b16 %v554
          %v1949 = vunpack.c.l.b16 %v555
          %v1950 = vunpack.c.h.b16 %v555
          %v1951 = vunpack.c.l.b16 %v556
          %v1952 = vunpack.c.h.b16 %v556
          %v1953 = vunpack.c.l.b16 %v557
          %v1954 = vunpack.c.h.b16 %v557
          %v1955 = vunpack.c.l.b16 %v558
          %v1956 = vunpack.c.h.b16 %v558
          %v1957 = vunpack.c.l.b16 %v559
          %v1958 = vunpack.c.h.b16 %v559
          %v1959 = vunpack.c.l.b16 %v560
          %v1960 = vunpack.c.h.b16 %v560
          %v1961 = vunpack.c.l.b16 %v561
          %v1962 = vunpack.c.h.b16 %v561
          %v1963 = vunpack.c.l.b16 %v562
          %v1964 = vunpack.c.h.b16 %v562
          %v1965 = vunpack.c.l.b16 %v563
          %v1966 = vunpack.c.h.b16 %v563
          %v1967 = vunpack.c.l.b16 %v564
          %v1968 = vunpack.c.h.b16 %v564
          %v1969 = vunpack.c.l.b16 %v565
          %v1970 = vunpack.c.h.b16 %v565
          %v1971 = vunpack.c.l.b16 %v566
          %v1972 = vunpack.c.h.b16 %v566
          %v1973 = vunpack.c.l.b16 %v567
          %v1974 = vunpack.c.h.b16 %v567
          %v1975 = vunpack.c.l.b16 %v568
          %v1976 = vunpack.c.h.b16 %v568
          %v1977 = vunpack.c.l.b16 %v569
          %v1978 = vunpack.c.h.b16 %v569
          %v1979 = vunpack.c.l.b16 %v570
          %v1980 = vunpack.c.h.b16 %v570
          %v1981 = vunpack.c.l.b16 %v571
          %v1982 = vunpack.c.h.b16 %v571
          %v1983 = vunpack.c.l.b16 %v572
          %v1984 = vunpack.c.h.b16 %v572
          %v1985 = vunpack.c.l.b16 %v573
          %v1986 = vunpack.c.h.b16 %v573
          %v1987 = vunpack.c.l.b16 %v574
          %v1988 = vunpack.c.h.b16 %v574
          %v1989 = vunpack.c.l.b16 %v575
          %v1990 = vunpack.c.h.b16 %v575
          %v1991 = vunpack.c.l.b16 %v576
          %v1992 = vunpack.c.h.b16 %v576
          %v1993 = vunpack.c.l.b16 %v577
          %v1994 = vunpack.c.h.b16 %v577
          %v1995 = vunpack.c.l.b16 %v578
          %v1996 = vunpack.c.h.b16 %v578
          %v1997 = vunpack.c.l.b16 %v579
          %v1998 = vunpack.c.h.b16 %v579
          %v1999 = vunpack.c.l.b16 %v580
          %v2000 = vunpack.c.h.b16 %v580
          %v2001 = vunpack.c.l.b16 %v581
          %v2002 = vunpack.c.h.b16 %v581
          %v2003 = vunpack.c.l.b16 %v582
          %v2004 = vunpack.c.h.b16 %v582
          %v2005 = vunpack.c.l.b16 %v583
          %v2006 = vunpack.c.h.b16 %v583
          %v2007 = vunpack.c.l.b16 %v584
          %v2008 = vunpack.c.h.b16 %v584
          %v2009 = vunpack.c.l.b16 %v585
          %v2010 = vunpack.c.h.b16 %v585
          %v2011 = vunpack.c.l.b16 %v586
          %v2012 = vunpack.c.h.b16 %v586
          %v2013 = vunpack.c.l.b16 %v587
          %v2014 = vunpack.c.h.b16 %v587
          %v2015 = vunpack.c.l.b16 %v588
          %v2016 = vunpack.c.h.b16 %v588
          %v2017 = vunpack.c.l.b16 %v589
          %v2018 = vunpack.c.h.b16 %v589
          %v2019 = vunpack.c.l.b16 %v590
          %v2020 = vunpack.c.h.b16 %v590
          %v2021 = vunpack.c.l.b16 %v591
          %v2022 = vunpack.c.h.b16 %v591
          %v2023 = vunpack.c.l.b16 %v592
          %v2024 = vunpack.c.h.b16 %v592
          %v2025 = vunpack.c.l.b16 %v593
          %v2026 = vunpack.c.h.b16 %v593
          %v2027 = vunpack.c.l.b16 %v594
          %v2028 = vunpack.c.h.b16 %v594
          %v2029 = vunpack.c.l.b16 %v595
          %v2030 = vunpack.c.h.b16 %v595
          %v2031 = vunpack.c.l.b16 %v596
          %v2032 = vunpack.c.h.b16 %v596
          %v2033 = vunpack.c.l.b16 %v597
          %v2034 = vunpack.c.h.b16 %v597
          %v2035 = vunpack.c.l.b16 %v598
          %v2036 = vunpack.c.h.b16 %v598
          %v2037 = vunpack.c.l.b16 %v599
          %v2038 = vunpack.c.h.b16 %v599
          %v2039 = vunpack.c.l.b16 %v600
          %v2040 = vunpack.c.h.b16 %v600
          %v2041 = vunpack.c.l.b16 %v601
          %v2042 = vunpack.c.h.b16 %v601
          %v2043 = vunpack.c.l.b16 %v602
          %v2044 = vunpack.c.h.b16 %v602
          %v2045 = vunpack.c.l.b16 %v603
          %v2046 = vunpack.c.h.b16 %v603
          %v2047 = vunpack.c.l.b16 %v604
          %v2048 = vunpack.c.h.b16 %v604
          %v2049 = vunpack.c.l.b16 %v605
          %v2050 = vunpack.c.h.b16 %v605
          %v2051 = vunpack.c.l.b16 %v606
          %v2052 = vunpack.c.h.b16 %v606
          %v2053 = vunpack.c.l.b16 %v607
          %v2054 = vunpack.c.h.b16 %v607
          %v2055 = vunpack.c.l.b16 %v608
          %v2056 = vunpack.c.h.b16 %v608
          %v2057 = vunpack.c.l.b16 %v609
          %v2058 = vunpack.c.h.b16 %v609
          %v2059 = vunpack.c.l.b16 %v610
          %v2060 = vunpack.c.h.b16 %v610
          %v2061 = vunpack.c.l.b16 %v611
          %v2062 = vunpack.c.h.b16 %v611
          %v2063 = vunpack.c.l.b16 %v612
          %v2064 = vunpack.c.h.b16 %v612
          %v2065 = vunpack.c.l.b16 %v613
          %v2066 = vunpack.c.h.b16 %v613
          %v2067 = vunpack.c.l.b16 %v614
          %v2068 = vunpack.c.h.b16 %v614
          %v2069 = vunpack.c.l.b16 %v615
          %v2070 = vunpack.c.h.b16 %v615
          %v2071 = vunpack.c.l.b16 %v616
          %v2072 = vunpack.c.h.b16 %v616
          %v2073 = vunpack.c.l.b16 %v617
          %v2074 = vunpack.c.h.b16 %v617
          %v2075 = vunpack.c.l.b16 %v618
          %v2076 = vunpack.c.h.b16 %v618
          %v2077 = vunpack.c.l.b16 %v619
          %v2078 = vunpack.c.h.b16 %v619
          %v2079 = vunpack.c.l.b16 %v620
          %v2080 = vunpack.c.h.b16 %v620
          %v2081 = vunpack.c.l.b16 %v621
          %v2082 = vunpack.c.h.b16 %v621
          %v2083 = vunpack.c.l.b16 %v622
          %v2084 = vunpack.c.h.b16 %v622
          %v2085 = vunpack.c.l.b16 %v623
          %v2086 = vunpack.c.h.b16 %v623
          %v2087 = vunpack.c.l.b16 %v624
          %v2088 = vunpack.c.h.b16 %v624
          %v2089 = vunpack.c.l.b16 %v625
          %v2090 = vunpack.c.h.b16 %v625
          %v2091 = vunpack.c.l.b16 %v626
          %v2092 = vunpack.c.h.b16 %v626
          %v2093 = vunpack.c.l.b16 %v627
          %v2094 = vunpack.c.h.b16 %v627
          %v2095 = vunpack.c.l.b16 %v628
          %v2096 = vunpack.c.h.b16 %v628
          %v2097 = vunpack.c.l.b16 %v629
          %v2098 = vunpack.c.h.b16 %v629
          %v2099 = vunpack.c.l.b16 %v630
          %v2100 = vunpack.c.h.b16 %v630
          %v2101 = vunpack.c.l.b16 %v631
          %v2102 = vunpack.c.h.b16 %v631
          %v2103 = vunpack.c.l.b16 %v632
          %v2104 = vunpack.c.h.b16 %v632
          %v2105 = vunpack.c.l.b16 %v633
          %v2106 = vunpack.c.h.b16 %v633
          %v2107 = vunpack.c.l.b16 %v634
          %v2108 = vunpack.c.h.b16 %v634
          %v2109 = vunpack.c.l.b16 %v635
          %v2110 = vunpack.c.h.b16 %v635
          %v2111 = vunpack.c.l.b16 %v636
          %v2112 = vunpack.c.h.b16 %v636
          %v2113 = vunpack.c.l.b16 %v637
          %v2114 = vunpack.c.h.b16 %v637
          %v2115 = vunpack.c.l.b16 %v638
          %v2116 = vunpack.c.h.b16 %v638
          %v2117 = vunpack.c.l.b16 %v639
          %v2118 = vunpack.c.h.b16 %v639
          %v2119 = vunpack.c.l.b16 %v640
          %v2120 = vunpack.c.h.b16 %v640
          %v2121 = vunpack.c.l.b16 %v641
          %v2122 = vunpack.c.h.b16 %v641
          %v2123 = vunpack.c.l.b16 %v642
          %v2124 = vunpack.c.h.b16 %v642
          %v2125 = vunpack.c.l.b16 %v643
          %v2126 = vunpack.c.h.b16 %v643
          %v2127 = vunpack.c.l.b16 %v644
          %v2128 = vunpack.c.h.b16 %v644
          %v2129 = vunpack.c.l.b16 %v645
          %v2130 = vunpack.c.h.b16 %v645
          %v2131 = vunpack.c.l.b16 %v646
          %v2132 = vunpack.c.h.b16 %v646
          %v2133 = vunpack.c.l.b16 %v647
          %v2134 = vunpack.c.h.b16 %v647
          %v2135 = vunpack.c.l.b16 %v648
          %v2136 = vunpack.c.h.b16 %v648
          %v2137 = vunpack.c.l.b16 %v649
          %v2138 = vunpack.c.h.b16 %v649
          %v2139 = vunpack.c.l.b16 %v650
          %v2140 = vunpack.c.h.b16 %v650
          %v2141 = vunpack.c.l.b16 %v651
          %v2142 = vunpack.c.h.b16 %v651
          %v2143 = vunpack.c.l.b16 %v652
          %v2144 = vunpack.c.h.b16 %v652
          %v2145 = vunpack.c.l.b16 %v653
          %v2146 = vunpack.c.h.b16 %v653
          %v2147 = vunpack.c.l.b16 %v654
          %v2148 = vunpack.c.h.b16 %v654
          %v2149 = vunpack.c.l.b16 %v655
          %v2150 = vunpack.c.h.b16 %v655
          %v2151 = vunpack.c.l.b16 %v656
          %v2152 = vunpack.c.h.b16 %v656
          %v2153 = vunpack.c.l.b16 %v657
          %v2154 = vunpack.c.h.b16 %v657
          %v2155 = vunpack.c.l.b16 %v658
          %v2156 = vunpack.c.h.b16 %v658
          %v2157 = vunpack.c.l.b16 %v659
          %v2158 = vunpack.c.h.b16 %v659
          %v2159 = vunpack.c.l.b16 %v660
          %v2160 = vunpack.c.h.b16 %v660
          %v2161 = vunpack.c.l.b16 %v661
          %v2162 = vunpack.c.h.b16 %v661
          %v2163 = vunpack.c.l.b16 %v662
          %v2164 = vunpack.c.h.b16 %v662
          %v2165 = vunpack.c.l.b16 %v663
          %v2166 = vunpack.c.h.b16 %v663
          %v2167 = vunpack.c.l.b16 %v664
          %v2168 = vunpack.c.h.b16 %v664
          %v2169 = vunpack.c.l.b16 %v665
          %v2170 = vunpack.c.h.b16 %v665
          %v2171 = vunpack.c.l.b16 %v666
          %v2172 = vunpack.c.h.b16 %v666
          %v2173 = vunpack.c.l.b16 %v667
          %v2174 = vunpack.c.h.b16 %v667
          %v2175 = vunpack.c.l.b16 %v668
          %v2176 = vunpack.c.h.b16 %v668
          %v2177 = vunpack.c.l.b16 %v669
          %v2178 = vunpack.c.h.b16 %v669
          %v2179 = vunpack.c.l.b16 %v670
          %v2180 = vunpack.c.h.b16 %v670
          %v2181 = vunpack.c.l.b16 %v671
          %v2182 = vunpack.c.h.b16 %v671
          %v2183 = vunpack.c.l.b16 %v672
          %v2184 = vunpack.c.h.b16 %v672
          %v2185 = vunpack.c.l.b16 %v673
          %v2186 = vunpack.c.h.b16 %v673
          %v2187 = vunpack.c.l.b16 %v674
          %v2188 = vunpack.c.h.b16 %v674
          %v2189 = vunpack.c.l.b16 %v675
          %v2190 = vunpack.c.h.b16 %v675
          %v2191 = vunpack.c.l.b16 %v676
          %v2192 = vunpack.c.h.b16 %v676
          %v2193 = vunpack.c.l.b16 %v677
          %v2194 = vunpack.c.h.b16 %v677
          %v2195 = vunpack.c.l.b16 %v678
          %v2196 = vunpack.c.h.b16 %v678
          %v2197 = vunpack.c.l.b16 %v679
          %v2198 = vunpack.c.h.b16 %v679
          %v2199 = vunpack.c.l.b16 %v680
          %v2200 = vunpack.c.h.b16 %v680
          %v2201 = vunpack.c.l.b16 %v681
          %v2202 = vunpack.c.h.b16 %v681
          %v2203 = vunpack.c.l.b16 %v682
          %v2204 = vunpack.c.h.b16 %v682
          %v2205 = vunpack.c.l.b16 %v683
          %v2206 = vunpack.c.h.b16 %v683
          %v2207 = vunpack.c.l.b16 %v684
          %v2208 = vunpack.c.h.b16 %v684
          %v2209 = vunpack.c.l.b16 %v685
          %v2210 = vunpack.c.h.b16 %v685
          %v2211 = vunpack.c.l.b16 %v686
          %v2212 = vunpack.c.h.b16 %v686
          %v2213 = vunpack.c.l.b16 %v687
          %v2214 = vunpack.c.h.b16 %v687
          %v2215 = vunpack.c.l.b16 %v688
          %v2216 = vunpack.c.h.b16 %v688
          %v2217 = vunpack.c.l.b16 %v689
          %v2218 = vunpack.c.h.b16 %v689
          %v2219 = vunpack.c.l.b16 %v690
          %v2220 = vunpack.c.h.b16 %v690
          %v2221 = vunpack.c.l.b16 %v691
          %v2222 = vunpack.c.h.b16 %v691
          %v2223 = vunpack.c.l.b16 %v692
          %v2224 = vunpack.c.h.b16 %v692
          %v2225 = vunpack.c.l.b16 %v693
          %v2226 = vunpack.c.h.b16 %v693
          %v2227 = vunpack.c.l.b16 %v694
          %v2228 = vunpack.c.h.b16 %v694
          %v2229 = vunpack.c.l.b16 %v695
          %v2230 = vunpack.c.h.b16 %v695
          %v2231 = vunpack.c.l.b16 %v696
          %v2232 = vunpack.c.h.b16 %v696
          %v2233 = vunpack.c.l.b16 %v697
          %v2234 = vunpack.c.h.b16 %v697
          %v2235 = vunpack.c.l.b16 %v698
          %v2236 = vunpack.c.h.b16 %v698
          %v2237 = vunpack.c.l.b16 %v699
          %v2238 = vunpack.c.h.b16 %v699
          %v2239 = vunpack.c.l.b16 %v700
          %v2240 = vunpack.c.h.b16 %v700
          %v2241 = vunpack.c.l.b16 %v701
          %v2242 = vunpack.c.h.b16 %v701
          %v2243 = vunpack.c.l.b16 %v702
          %v2244 = vunpack.c.h.b16 %v702
          %v2245 = vunpack.c.l.b16 %v703
          %v2246 = vunpack.c.h.b16 %v703
          %v2247 = vunpack.c.l.b16 %v704
          %v2248 = vunpack.c.h.b16 %v704
          %v2249 = vunpack.c.l.b16 %v705
          %v2250 = vunpack.c.h.b16 %v705
          %v2251 = vunpack.c.l.b16 %v706
          %v2252 = vunpack.c.h.b16 %v706
          %v2253 = vunpack.c.l.b16 %v707
          %v2254 = vunpack.c.h.b16 %v707
          %v2255 = vunpack.c.l.b16 %v708
          %v2256 = vunpack.c.h.b16 %v708
          %v2257 = vunpack.c.l.b16 %v709
          %v2258 = vunpack.c.h.b16 %v709
          %v2259 = vunpack.c.l.b16 %v710
          %v2260 = vunpack.c.h.b16 %v710
          %v2261 = vunpack.c.l.b16 %v711
          %v2262 = vunpack.c.h.b16 %v711
          %v2263 = vunpack.c.l.b16 %v712
          %v2264 = vunpack.c.h.b16 %v712
          %v2265 = vunpack.c.l.b16 %v713
          %v2266 = vunpack.c.h.b16 %v713
          %v2267 = vunpack.c.l.b16 %v714
          %v2268 = vunpack.c.h.b16 %v714
          %v2269 = vunpack.c.l.b16 %v715
          %v2270 = vunpack.c.h.b16 %v715
          %v2271 = vunpack.c.l.b16 %v716
          %v2272 = vunpack.c.h.b16 %v716
          %v2273 = vunpack.c.l.b16 %v717
          %v2274 = vunpack.c.h.b16 %v717
          %v2275 = vunpack.c.l.b16 %v718
          %v2276 = vunpack.c.h.b16 %v718
          %v2277 = vunpack.c.l.b16 %v719
          %v2278 = vunpack.c.h.b16 %v719
          %v2279 = vunpack.c.l.b16 %v720
          %v2280 = vunpack.c.h.b16 %v720
          %v2281 = vunpack.c.l.b16 %v721
          %v2282 = vunpack.c.h.b16 %v721
          %v2283 = vunpack.c.l.b16 %v722
          %v2284 = vunpack.c.h.b16 %v722
          %v2285 = vunpack.c.l.b16 %v723
          %v2286 = vunpack.c.h.b16 %v723
          %v2287 = vunpack.c.l.b16 %v724
          %v2288 = vunpack.c.h.b16 %v724
          %v2289 = vunpack.c.l.b16 %v725
          %v2290 = vunpack.c.h.b16 %v725
          %v2291 = vunpack.c.l.b16 %v726
          %v2292 = vunpack.c.h.b16 %v726
          %v2293 = vunpack.c.l.b16 %v727
          %v2294 = vunpack.c.h.b16 %v727
          %v2295 = vunpack.c.l.b16 %v728
          %v2296 = vunpack.c.h.b16 %v728
          %v2297 = vunpack.c.l.b16 %v729
          %v2298 = vunpack.c.h.b16 %v729
          %v2299 = vunpack.c.l.b16 %v730
          %v2300 = vunpack.c.h.b16 %v730
          %v2301 = vunpack.c.l.b16 %v731
          %v2302 = vunpack.c.h.b16 %v731
          %v2303 = vunpack.c.l.b16 %v732
          %v2304 = vunpack.c.h.b16 %v732
          %v2305 = vunpack.c.l.b16 %v733
          %v2306 = vunpack.c.h.b16 %v733
          %v2307 = vunpack.c.l.b16 %v734
          %v2308 = vunpack.c.h.b16 %v734
          %v2309 = vunpack.c.l.b16 %v735
          %v2310 = vunpack.c.h.b16 %v735
          %v2311 = vunpack.c.l.b16 %v736
          %v2312 = vunpack.c.h.b16 %v736
          %v2313 = vunpack.c.l.b16 %v737
          %v2314 = vunpack.c.h.b16 %v737
          %v2315 = vunpack.c.l.b16 %v738
          %v2316 = vunpack.c.h.b16 %v738
          %v2317 = vunpack.c.l.b16 %v739
          %v2318 = vunpack.c.h.b16 %v739
          %v2319 = vunpack.c.l.b16 %v740
          %v2320 = vunpack.c.h.b16 %v740
          %v2321 = vunpack.c.l.b16 %v741
          %v2322 = vunpack.c.h.b16 %v741
          %v2323 = vunpack.c.l.b16 %v742
          %v2324 = vunpack.c.h.b16 %v742
          %v2325 = vunpack.c.l.b16 %v743
          %v2326 = vunpack.c.h.b16 %v743
          %v2327 = vunpack.c.l.b16 %v744
          %v2328 = vunpack.c.h.b16 %v744
          %v2329 = vunpack.c.l.b16 %v745
          %v2330 = vunpack.c.h.b16 %v745
          %v2331 = vunpack.c.l.b16 %v746
          %v2332 = vunpack.c.h.b16 %v746
          %v2333 = vunpack.c.l.b16 %v747
          %v2334 = vunpack.c.h.b16 %v747
          %v2335 = vunpack.c.l.b16 %v748
          %v2336 = vunpack.c.h.b16 %v748
          %v2337 = vunpack.c.l.b16 %v749
          %v2338 = vunpack.c.h.b16 %v749
          %v2339 = vunpack.c.l.b16 %v750
          %v2340 = vunpack.c.h.b16 %v750
          %v2341 = vunpack.c.l.b16 %v751
          %v2342 = vunpack.c.h.b16 %v751
          %v2343 = vunpack.c.l.b16 %v752
          %v2344 = vunpack.c.h.b16 %v752
          %v2345 = vunpack.c.l.b16 %v753
          %v2346 = vunpack.c.h.b16 %v753
          %v2347 = vunpack.c.l.b16 %v754
          %v2348 = vunpack.c.h.b16 %v754
          %v2349 = vunpack.c.l.b16 %v755
          %v2350 = vunpack.c.h.b16 %v755
          %v2351 = vunpack.c.l.b16 %v756
          %v2352 = vunpack.c.h.b16 %v756
          %v2353 = vunpack.c.l.b16 %v757
          %v2354 = vunpack.c.h.b16 %v757
          %v2355 = vunpack.c.l.b16 %v758
          %v2356 = vunpack.c.h.b16 %v758
          %v2357 = vunpack.c.l.b16 %v759
          %v2358 = vunpack.c.h.b16 %v759
          %v2359 = vunpack.c.l.b16 %v760
          %v2360 = vunpack.c.h.b16 %v760
          %v2361 = vunpack.c.l.b16 %v761
          %v2362 = vunpack.c.h.b16 %v761
          %v2363 = vunpack.c.l.b16 %v762
          %v2364 = vunpack.c.h.b16 %v762
          %v2365 = vunpack.c.l.b16 %v763
          %v2366 = vunpack.c.h.b16 %v763
          %v2367 = vunpack.c.l.b16 %v764
          %v2368 = vunpack.c.h.b16 %v764
          %v2369 = vunpack.c.l.b16 %v765
          %v2370 = vunpack.c.h.b16 %v765
          %v2371 = vunpack.c.l.b16 %v766
          %v2372 = vunpack.c.h.b16 %v766
          %v2373 = vunpack.c.l.b16 %v767
          %v2374 = vunpack.c.h.b16 %v767
          %v2375 = vunpack.c.l.b16 %v768
          %v2376 = vunpack.c.h.b16 %v768
          %v2377 = vunpack.c.l.b16 %v769
          %v2378 = vunpack.c.h.b16 %v769
          %v2379 = vunpack.c.l.b16 %v770
          %v2380 = vunpack.c.h.b16 %v770
          %v2381 = vunpack.c.l.b16 %v771
          %v2382 = vunpack.c.h.b16 %v771
          %v2383 = vunpack.c.l.b16 %v772
          %v2384 = vunpack.c.h.b16 %v772
          %v2385 = vunpack.c.l.b16 %v773
          %v2386 = vunpack.c.h.b16 %v773
          %v2387 = vunpack.c.l.b16 %v774
          %v2388 = vunpack.c.h.b16 %v774
          %v2389 = vunpack.c.l.b16 %v775
          %v2390 = vunpack.c.h.b16 %v775
          %v2391 = vunpack.c.l.b16 %v776
          %v2392 = vunpack.c.h.b16 %v776
          %v2393 = vunpack.c.l.b16 %v777
          %v2394 = vunpack.c.h.b16 %v777
          %v2395 = vunpack.c.l.b16 %v778
          %v2396 = vunpack.c.h.b16 %v778
          %v2397 = vunpack.c.l.b16 %v779
          %v2398 = vunpack.c.h.b16 %v779
          %v2399 = vunpack.c.l.b16 %v780
          %v2400 = vunpack.c.h.b16 %v780
          %v2401 = vunpack.c.l.b16 %v781
          %v2402 = vunpack.c.h.b16 %v781
          %v2403 = vunpack.c.l.b16 %v782
          %v2404 = vunpack.c.h.b16 %v782
          %v2405 = vunpack.c.l.b16 %v783
          %v2406 = vunpack.c.h.b16 %v783
          %v2407 = vunpack.c.l.b16 %v784
          %v2408 = vunpack.c.h.b16 %v784
          %v2409 = vunpack.c.l.b16 %v785
          %v2410 = vunpack.c.h.b16 %v785
          %v2411 = vunpack.c.l.b16 %v786
          %v2412 = vunpack.c.h.b16 %v786
          %v2413 = vunpack.c.l.b16 %v787
          %v2414 = vunpack.c.h.b16 %v787
          %v2415 = vunpack.c.l.b16 %v788
          %v2416 = vunpack.c.h.b16 %v788
          %v2417 = vunpack.c.l.b16 %v789
          %v2418 = vunpack.c.h.b16 %v789
          %v2419 = vunpack.c.l.b16 %v790
          %v2420 = vunpack.c.h.b16 %v790
          %v2421 = vunpack.c.l.b16 %v791
          %v2422 = vunpack.c.h.b16 %v791
          %v2423 = vunpack.c.l.b16 %v792
          %v2424 = vunpack.c.h.b16 %v792
          %v2425 = vunpack.c.l.b16 %v793
          %v2426 = vunpack.c.h.b16 %v793
          %v2427 = vunpack.c.l.b16 %v794
          %v2428 = vunpack.c.h.b16 %v794
          %v2429 = vunpack.c.l.b16 %v795
          %v2430 = vunpack.c.h.b16 %v795
          %v2431 = vunpack.c.l.b16 %v796
          %v2432 = vunpack.c.h.b16 %v796
          %v2433 = vunpack.c.l.b16 %v797
          %v2434 = vunpack.c.h.b16 %v797
          %v2435 = vunpack.c.l.b16 %v798
          %v2436 = vunpack.c.h.b16 %v798
          %v2437 = vunpack.c.l.b16 %v799
          %v2438 = vunpack.c.h.b16 %v799
          %v2439 = vunpack.c.l.b16 %v800
          %v2440 = vunpack.c.h.b16 %v800
          %v2441 = vunpack.c.l.b16 %v801
          %v2442 = vunpack.c.h.b16 %v801
          %v2443 = vunpack.c.l.b16 %v802
          %v2444 = vunpack.c.h.b16 %v802
          %v2445 = vunpack.c.l.b16 %v803
          %v2446 = vunpack.c.h.b16 %v803
          %v2447 = vunpack.c.l.b16 %v804
          %v2448 = vunpack.c.h.b16 %v804
          %v2449 = vunpack.c.l.b16 %v805
          %v2450 = vunpack.c.h.b16 %v805
          %v2451 = vunpack.c.l.b16 %v806
          %v2452 = vunpack.c.h.b16 %v806
          %v2453 = vunpack.c.l.b16 %v807
          %v2454 = vunpack.c.h.b16 %v807
          %v2455 = vunpack.c.l.b16 %v808
          %v2456 = vunpack.c.h.b16 %v808
          %v2457 = vunpack.c.l.b16 %v809
          %v2458 = vunpack.c.h.b16 %v809
          %v2459 = vunpack.c.l.b16 %v810
          %v2460 = vunpack.c.h.b16 %v810
          %v2461 = vunpack.c.l.b16 %v811
          %v2462 = vunpack.c.h.b16 %v811
          %v2463 = vunpack.c.l.b16 %v812
          %v2464 = vunpack.c.h.b16 %v812
          %v2465 = vunpack.c.l.b16 %v813
          %v2466 = vunpack.c.h.b16 %v813
          %v2467 = vunpack.c.l.b16 %v814
          %v2468 = vunpack.c.h.b16 %v814
          %v2469 = vunpack.c.l.b16 %v815
          %v2470 = vunpack.c.h.b16 %v815
          %v2471 = vunpack.c.l.b16 %v816
          %v2472 = vunpack.c.h.b16 %v816
          %v2473 = vunpack.c.l.b16 %v817
          %v2474 = vunpack.c.h.b16 %v817
          %v2475 = vunpack.c.l.b16 %v818
          %v2476 = vunpack.c.h.b16 %v818
          %v2477 = vunpack.c.l.b16 %v819
          %v2478 = vunpack.c.h.b16 %v819
          %v2479 = vunpack.c.l.b16 %v820
          %v2480 = vunpack.c.h.b16 %v820
          %v2481 = vunpack.c.l.b16 %v821
          %v2482 = vunpack.c.h.b16 %v821
          %v2483 = vunpack.c.l.b16 %v822
          %v2484 = vunpack.c.h.b16 %v822
          %v2485 = vunpack.c.l.b16 %v823
          %v2486 = vunpack.c.h.b16 %v823
          %v2487 = vunpack.c.l.b16 %v824
          %v2488 = vunpack.c.h.b16 %v824
          %v2489 = vunpack.c.l.b16 %v825
          %v2490 = vunpack.c.h.b16 %v825
          %v2491 = vunpack.c.l.b16 %v826
          %v2492 = vunpack.c.h.b16 %v826
          %v2493 = vunpack.c.l.b16 %v827
          %v2494 = vunpack.c.h.b16 %v827
          %v2495 = vunpack.c.l.b16 %v828
          %v2496 = vunpack.c.h.b16 %v828
          %v2497 = vunpack.c.l.b16 %v829
          %v2498 = vunpack.c.h.b16 %v829
          %v2499 = vunpack.c.l.b16 %v830
          %v2500 = vunpack.c.h.b16 %v830
          %v2501 = vunpack.c.l.b16 %v831
          %v2502 = vunpack.c.h.b16 %v831
          %v2503 = vunpack.c.l.b16 %v832
          %v2504 = vunpack.c.h.b16 %v832
          %v2505 = vunpack.c.l.b16 %v833
          %v2506 = vunpack.c.h.b16 %v833
          %v2507 = vunpack.c.l.b16 %v834
          %v2508 = vunpack.c.h.b16 %v834
          %v2509 = vunpack.c.l.b16 %v835
          %v2510 = vunpack.c.h.b16 %v835
          %v2511 = vunpack.c.l.b16 %v836
          %v2512 = vunpack.c.h.b16 %v836
          %v2513 = vunpack.c.l.b16 %v837
          %v2514 = vunpack.c.h.b16 %v837
          %v2515 = vunpack.c.l.b16 %v838
          %v2516 = vunpack.c.h.b16 %v838
          %v2517 = vunpack.c.l.b16 %v839
          %v2518 = vunpack.c.h.b16 %v839
          %v2519 = vunpack.c.l.b16 %v840
          %v2520 = vunpack.c.h.b16 %v840
          %v2521 = vunpack.c.l.b16 %v841
          %v2522 = vunpack.c.h.b16 %v841
          %v2523 = vunpack.c.l.b16 %v842
          %v2524 = vunpack.c.h.b16 %v842
          %v2525 = vunpack.c.l.b16 %v843
          %v2526 = vunpack.c.h.b16 %v843
          %v2527 = vunpack.c.l.b16 %v844
          %v2528 = vunpack.c.h.b16 %v844
          %v2529 = vunpack.c.l.b16 %v845
          %v2530 = vunpack.c.h.b16 %v845
          %v2531 = vunpack.c.l.b16 %v846
          %v2532 = vunpack.c.h.b16 %v846
          %v2533 = vunpack.c.l.b16 %v847
          %v2534 = vunpack.c.h.b16 %v847
          %v2535 = vunpack.c.l.b16 %v848
          %v2536 = vunpack.c.h.b16 %v848
          %v2537 = vunpack.c.l.b16 %v849
          %v2538 = vunpack.c.h.b16 %v849
          %v2539 = vunpack.c.l.b16 %v850
          %v2540 = vunpack.c.h.b16 %v850
          %v2541 = vunpack.c.l.b16 %v851
          %v2542 = vunpack.c.h.b16 %v851
          %v2543 = vunpack.c.l.b16 %v852
          %v2544 = vunpack.c.h.b16 %v852
          %v2545 = vunpack.c.l.b16 %v853
          %v2546 = vunpack.c.h.b16 %v853
          %v2547 = vunpack.c.l.b16 %v854
          %v2548 = vunpack.c.h.b16 %v854
          %v2549 = vunpack.c.l.b16 %v855
          %v2550 = vunpack.c.h.b16 %v855
          %v2551 = vunpack.c.l.b16 %v856
          %v2552 = vunpack.c.h.b16 %v856
          %v2553 = vunpack.c.l.b16 %v857
          %v2554 = vunpack.c.h.b16 %v857
          %v2555 = vunpack.c.l.b16 %v858
          %v2556 = vunpack.c.h.b16 %v858
          %v2557 = vunpack.c.l.b16 %v859
          %v2558 = vunpack.c.h.b16 %v859
          %v2559 = vunpack.c.l.b16 %v860
          %v2560 = vunpack.c.h.b16 %v860
          %v2561 = vunpack.c.l.b16 %v861
          %v2562 = vunpack.c.h.b16 %v861
          %v2563 = vunpack.c.l.b16 %v862
          %v2564 = vunpack.c.h.b16 %v862
          %v2565 = vunpack.c.l.b16 %v863
          %v2566 = vunpack.c.h.b16 %v863
          %v2567 = vunpack.c.l.b16 %v864
          %v2568 = vunpack.c.h.b16 %v864
          %v2569 = vunpack.c.l.b16 %v865
          %v2570 = vunpack.c.h.b16 %v865
          %v2571 = vunpack.c.l.b16 %v866
          %v2572 = vunpack.c.h.b16 %v866
          %v2573 = vunpack.c.l.b16 %v867
          %v2574 = vunpack.c.h.b16 %v867
          %v2575 = vunpack.c.l.b16 %v868
          %v2576 = vunpack.c.h.b16 %v868
          %v2577 = vunpack.c.l.b16 %v869
          %v2578 = vunpack.c.h.b16 %v869
          %v2579 = vunpack.c.l.b16 %v870
          %v2580 = vunpack.c.h.b16 %v870
          %v2581 = vunpack.c.l.b16 %v871
          %v2582 = vunpack.c.h.b16 %v871
          %v2583 = vunpack.c.l.b16 %v872
          %v2584 = vunpack.c.h.b16 %v872
          %v2585 = vunpack.c.l.b16 %v873
          %v2586 = vunpack.c.h.b16 %v873
          %v2587 = vunpack.c.l.b16 %v874
          %v2588 = vunpack.c.h.b16 %v874
          %v2589 = vunpack.c.l.b16 %v875
          %v2590 = vunpack.c.h.b16 %v875
          %v2591 = vunpack.c.l.b16 %v876
          %v2592 = vunpack.c.h.b16 %v876
          %v2593 = vunpack.c.l.b16 %v877
          %v2594 = vunpack.c.h.b16 %v877
          %v2595 = vunpack.c.l.b16 %v878
          %v2596 = vunpack.c.h.b16 %v878
          %v2597 = vunpack.c.l.b16 %v879
          %v2598 = vunpack.c.h.b16 %v879
          %v2599 = vunpack.c.l.b16 %v880
          %v2600 = vunpack.c.h.b16 %v880
          %v2601 = vunpack.c.l.b16 %v881
          %v2602 = vunpack.c.h.b16 %v881
          %v2603 = vunpack.c.l.b16 %v882
          %v2604 = vunpack.c.h.b16 %v882
          %v2605 = vunpack.c.l.b16 %v883
          %v2606 = vunpack.c.h.b16 %v883
          %v2607 = vunpack.c.l.b16 %v884
          %v2608 = vunpack.c.h.b16 %v884
          %v2609 = vunpack.c.l.b16 %v885
          %v2610 = vunpack.c.h.b16 %v885
          %v2611 = vunpack.c.l.b16 %v886
          %v2612 = vunpack.c.h.b16 %v886
          %v2613 = vunpack.c.l.b16 %v887
          %v2614 = vunpack.c.h.b16 %v887
          %v2615 = vunpack.c.l.b16 %v888
          %v2616 = vunpack.c.h.b16 %v888
          %v2617 = vunpack.c.l.b16 %v889
          %v2618 = vunpack.c.h.b16 %v889
          %v2619 = vunpack.c.l.b16 %v890
          %v2620 = vunpack.c.h.b16 %v890
          %v2621 = vpack.c.b16 %v1481, %v1469
          %v2622 = vpack.c.b16 %v1482, %v1470
          %v2623 = vpack.c.b16 %v1483, %v1471
          %v2624 = vpack.c.b16 %v1484, %v1472
          %v2625 = vpack.c.b16 %v1485, %v1473
          %v2626 = vpack.c.b16 %v1486, %v1474
          %v2627 = vpack.c.b16 %v1487, %v1475
          %v2628 = vpack.c.b16 %v1488, %v1476
          %v2629 = vpack.c.b16 %v1489, %v1477
          %v2630 = vpack.c.b16 %v1490, %v1478
          %v2631 = vpack.c.b16 %v1491, %v1479
          %v2632 = vpack.c.b16 %v1492, %v1480
          %v2633 = vpack.c.b16 %v1505, %v1493
          %v2634 = vpack.c.b16 %v1506, %v1494
          %v2635 = vpack.c.b16 %v1507, %v1495
          %v2636 = vpack.c.b16 %v1508, %v1496
          %v2637 = vpack.c.b16 %v1509, %v1497
          %v2638 = vpack.c.b16 %v1510, %v1498
          %v2639 = vpack.c.b16 %v1511, %v1499
          %v2640 = vpack.c.b16 %v1512, %v1500
          %v2641 = vpack.c.b16 %v1513, %v1501
          %v2642 = vpack.c.b16 %v1514, %v1502
          %v2643 = vpack.c.b16 %v1515, %v1503
          %v2644 = vpack.c.b16 %v1516, %v1504
          %v2645 = vpack.c.b16 %v1529, %v1517
          %v2646 = vpack.c.b16 %v1530, %v1518
          %v2647 = vpack.c.b16 %v1531, %v1519
          %v2648 = vpack.c.b16 %v1532, %v1520
          %v2649 = vpack.c.b16 %v1533, %v1521
          %v2650 = vpack.c.b16 %v1534, %v1522
          %v2651 = vpack.c.b16 %v1535, %v1523
          %v2652 = vpack.c.b16 %v1536, %v1524
          %v2653 = vpack.c.b16 %v1537, %v1525
          %v2654 = vpack.c.b16 %v1538, %v1526
          %v2655 = vpack.c.b16 %v1539, %v1527
          %v2656 = vpack.c.b16 %v1540, %v1528
          %v2657 = vpack.c.b16 %v1553, %v1541
          %v2658 = vpack.c.b16 %v1554, %v1542
          %v2659 = vpack.c.b16 %v1555, %v1543
          %v2660 = vpack.c.b16 %v1556, %v1544
          %v2661 = vpack.c.b16 %v1557, %v1545
          %v2662 = vpack.c.b16 %v1558, %v1546
          %v2663 = vpack.c.b16 %v1559, %v1547
          %v2664 = vpack.c.b16 %v1560, %v1548
          %v2665 = vpack.c.b16 %v1561, %v1549
          %v2666 = vpack.c.b16 %v1562, %v1550
          %v2667 = vpack.c.b16 %v1563, %v1551
          %v2668 = vpack.c.b16 %v1564, %v1552
          %v2669 = vpack.c.b16 %v1577, %v1565
          %v2670 = vpack.c.b16 %v1578, %v1566
          %v2671 = vpack.c.b16 %v1579, %v1567
          %v2672 = vpack.c.b16 %v1580, %v1568
          %v2673 = vpack.c.b16 %v1581, %v1569
          %v2674 = vpack.c.b16 %v1582, %v1570
          %v2675 = vpack.c.b16 %v1583, %v1571
          %v2676 = vpack.c.b16 %v1584, %v1572
          %v2677 = vpack.c.b16 %v1585, %v1573
          %v2678 = vpack.c.b16 %v1586, %v1574
          %v2679 = vpack.c.b16 %v1587, %v1575
          %v2680 = vpack.c.b16 %v1588, %v1576
          %v2681 = vpack.c.b16 %v1601, %v1589
          %v2682 = vpack.c.b16 %v1602, %v1590
          %v2683 = vpack.c.b16 %v1603, %v1591
          %v2684 = vpack.c.b16 %v1604, %v1592
          %v2685 = vpack.c.b16 %v1605, %v1593
          %v2686 = vpack.c.b16 %v1606, %v1594
          %v2687 = vpack.c.b16 %v1607, %v1595
          %v2688 = vpack.c.b16 %v1608, %v1596
          %v2689 = vpack.c.b16 %v1609, %v1597
          %v2690 = vpack.c.b16 %v1610, %v1598
          %v2691 = vpack.c.b16 %v1611, %v1599
          %v2692 = vpack.c.b16 %v1612, %v1600
          %v2693 = vpack.c.b16 %v1625, %v1613
          %v2694 = vpack.c.b16 %v1626, %v1614
          %v2695 = vpack.c.b16 %v1627, %v1615
          %v2696 = vpack.c.b16 %v1628, %v1616
          %v2697 = vpack.c.b16 %v1629, %v1617
          %v2698 = vpack.c.b16 %v1630, %v1618
          %v2699 = vpack.c.b16 %v1631, %v1619
          %v2700 = vpack.c.b16 %v1632, %v1620
          %v2701 = vpack.c.b16 %v1633, %v1621
          %v2702 = vpack.c.b16 %v1634, %v1622
          %v2703 = vpack.c.b16 %v1635, %v1623
          %v2704 = vpack.c.b16 %v1636, %v1624
          %v2705 = vpack.c.b16 %v1649, %v1637
          %v2706 = vpack.c.b16 %v1650, %v1638
          %v2707 = vpack.c.b16 %v1651, %v1639
          %v2708 = vpack.c.b16 %v1652, %v1640
          %v2709 = vpack.c.b16 %v1653, %v1641
          %v2710 = vpack.c.b16 %v1654, %v1642
          %v2711 = vpack.c.b16 %v1655, %v1643
          %v2712 = vpack.c.b16 %v1656, %v1644
          %v2713 = vpack.c.b16 %v1657, %v1645
          %v2714 = vpack.c.b16 %v1658, %v1646
          %v2715 = vpack.c.b16 %v1659, %v1647
          %v2716 = vpack.c.b16 %v1660, %v1648
          %v2717 = vpack.c.b16 %v1673, %v1661
          %v2718 = vpack.c.b16 %v1674, %v1662
          %v2719 = vpack.c.b16 %v1675, %v1663
          %v2720 = vpack.c.b16 %v1676, %v1664
          %v2721 = vpack.c.b16 %v1677, %v1665
          %v2722 = vpack.c.b16 %v1678, %v1666
          %v2723 = vpack.c.b16 %v1679, %v1667
          %v2724 = vpack.c.b16 %v1680, %v1668
          %v2725 = vpack.c.b16 %v1681, %v1669
          %v2726 = vpack.c.b16 %v1682, %v1670
          %v2727 = vpack.c.b16 %v1683, %v1671
          %v2728 = vpack.c.b16 %v1684, %v1672
          %v2729 = vpack.c.b16 %v1697, %v1685
          %v2730 = vpack.c.b16 %v1698, %v1686
          %v2731 = vpack.c.b16 %v1699, %v1687
          %v2732 = vpack.c.b16 %v1700, %v1688
          %v2733 = vpack.c.b16 %v1701, %v1689
          %v2734 = vpack.c.b16 %v1702, %v1690
          %v2735 = vpack.c.b16 %v1703, %v1691
          %v2736 = vpack.c.b16 %v1704, %v1692
          %v2737 = vpack.c.b16 %v1705, %v1693
          %v2738 = vpack.c.b16 %v1706, %v1694
          %v2739 = vpack.c.b16 %v1707, %v1695
          %v2740 = vpack.c.b16 %v1708, %v1696
          %v2741 = vpack.c.b16 %v1721, %v1709
          %v2742 = vpack.c.b16 %v1722, %v1710
          %v2743 = vpack.c.b16 %v1723, %v1711
          %v2744 = vpack.c.b16 %v1724, %v1712
          %v2745 = vpack.c.b16 %v1725, %v1713
          %v2746 = vpack.c.b16 %v1726, %v1714
          %v2747 = vpack.c.b16 %v1727, %v1715
          %v2748 = vpack.c.b16 %v1728, %v1716
          %v2749 = vpack.c.b16 %v1729, %v1717
          %v2750 = vpack.c.b16 %v1730, %v1718
          %v2751 = vpack.c.b16 %v1731, %v1719
          %v2752 = vpack.c.b16 %v1732, %v1720
          %v2753 = vpack.c.b16 %v1745, %v1733
          %v2754 = vpack.c.b16 %v1746, %v1734
          %v2755 = vpack.c.b16 %v1747, %v1735
          %v2756 = vpack.c.b16 %v1748, %v1736
          %v2757 = vpack.c.b16 %v1749, %v1737
          %v2758 = vpack.c.b16 %v1750, %v1738
          %v2759 = vpack.c.b16 %v1751, %v1739
          %v2760 = vpack.c.b16 %v1752, %v1740
          %v2761 = vpack.c.b16 %v1753, %v1741
          %v2762 = vpack.c.b16 %v1754, %v1742
          %v2763 = vpack.c.b16 %v1755, %v1743
          %v2764 = vpack.c.b16 %v1756, %v1744
          %v2765 = vpack.c.b16 %v1769, %v1757
          %v2766 = vpack.c.b16 %v1770, %v1758
          %v2767 = vpack.c.b16 %v1771, %v1759
          %v2768 = vpack.c.b16 %v1772, %v1760
          %v2769 = vpack.c.b16 %v1773, %v1761
          %v2770 = vpack.c.b16 %v1774, %v1762
          %v2771 = vpack.c.b16 %v1775, %v1763
          %v2772 = vpack.c.b16 %v1776, %v1764
          %v2773 = vpack.c.b16 %v1777, %v1765
          %v2774 = vpack.c.b16 %v1778, %v1766
          %v2775 = vpack.c.b16 %v1779, %v1767
          %v2776 = vpack.c.b16 %v1780, %v1768
          %v2777 = vpack.c.b16 %v1793, %v1781
          %v2778 = vpack.c.b16 %v1794, %v1782
          %v2779 = vpack.c.b16 %v1795, %v1783
          %v2780 = vpack.c.b16 %v1796, %v1784
          %v2781 = vpack.c.b16 %v1797, %v1785
          %v2782 = vpack.c.b16 %v1798, %v1786
          %v2783 = vpack.c.b16 %v1799, %v1787
          %v2784 = vpack.c.b16 %v1800, %v1788
          %v2785 = vpack.c.b16 %v1801, %v1789
          %v2786 = vpack.c.b16 %v1802, %v1790
          %v2787 = vpack.c.b16 %v1803, %v1791
          %v2788 = vpack.c.b16 %v1804, %v1792
          %v2789 = vpack.c.b16 %v1817, %v1805
          %v2790 = vpack.c.b16 %v1818, %v1806
          %v2791 = vpack.c.b16 %v1819, %v1807
          %v2792 = vpack.c.b16 %v1820, %v1808
          %v2793 = vpack.c.b16 %v1821, %v1809
          %v2794 = vpack.c.b16 %v1822, %v1810
          %v2795 = vpack.c.b16 %v1823, %v1811
          %v2796 = vpack.c.b16 %v1824, %v1812
          %v2797 = vpack.c.b16 %v1825, %v1813
          %v2798 = vpack.c.b16 %v1826, %v1814
          %v2799 = vpack.c.b16 %v1827, %v1815
          %v2800 = vpack.c.b16 %v1828, %v1816
          %v2801 = vpack.c.b16 %v1841, %v1829
          %v2802 = vpack.c.b16 %v1842, %v1830
          %v2803 = vpack.c.b16 %v1843, %v1831
          %v2804 = vpack.c.b16 %v1844, %v1832
          %v2805 = vpack.c.b16 %v1845, %v1833
          %v2806 = vpack.c.b16 %v1846, %v1834
          %v2807 = vpack.c.b16 %v1847, %v1835
          %v2808 = vpack.c.b16 %v1848, %v1836
          %v2809 = vpack.c.b16 %v1849, %v1837
          %v2810 = vpack.c.b16 %v1850, %v1838
          %v2811 = vpack.c.b16 %v1851, %v1839
          %v2812 = vpack.c.b16 %v1852, %v1840
          %v2813 = vpack.c.b16 %v1865, %v1853
          %v2814 = vpack.c.b16 %v1866, %v1854
          %v2815 = vpack.c.b16 %v1867, %v1855
          %v2816 = vpack.c.b16 %v1868, %v1856
          %v2817 = vpack.c.b16 %v1869, %v1857
          %v2818 = vpack.c.b16 %v1870, %v1858
          %v2819 = vpack.c.b16 %v1871, %v1859
          %v2820 = vpack.c.b16 %v1872, %v1860
          %v2821 = vpack.c.b16 %v1873, %v1861
          %v2822 = vpack.c.b16 %v1874, %v1862
          %v2823 = vpack.c.b16 %v1875, %v1863
          %v2824 = vpack.c.b16 %v1876, %v1864
          %v2825 = vpack.c.b16 %v1889, %v1877
          %v2826 = vpack.c.b16 %v1890, %v1878
          %v2827 = vpack.c.b16 %v1891, %v1879
          %v2828 = vpack.c.b16 %v1892, %v1880
          %v2829 = vpack.c.b16 %v1893, %v1881
          %v2830 = vpack.c.b16 %v1894, %v1882
          %v2831 = vpack.c.b16 %v1895, %v1883
          %v2832 = vpack.c.b16 %v1896, %v1884
          %v2833 = vpack.c.b16 %v1897, %v1885
          %v2834 = vpack.c.b16 %v1898, %v1886
          %v2835 = vpack.c.b16 %v1899, %v1887
          %v2836 = vpack.c.b16 %v1900, %v1888
          %v2837 = vpack.c.b16 %v1913, %v1901
          %v2838 = vpack.c.b16 %v1914, %v1902
          %v2839 = vpack.c.b16 %v1915, %v1903
          %v2840 = vpack.c.b16 %v1916, %v1904
          %v2841 = vpack.c.b16 %v1917, %v1905
          %v2842 = vpack.c.b16 %v1918, %v1906
          %v2843 = vpack.c.b16 %v1919, %v1907
          %v2844 = vpack.c.b16 %v1920, %v1908
          %v2845 = vpack.c.b16 %v1921, %v1909
          %v2846 = vpack.c.b16 %v1922, %v1910
          %v2847 = vpack.c.b16 %v1923, %v1911
          %v2848 = vpack.c.b16 %v1924, %v1912
          %v2849 = vpack.c.b16 %v1937, %v1925
          %v2850 = vpack.c.b16 %v1938, %v1926
          %v2851 = vpack.c.b16 %v1939, %v1927
          %v2852 = vpack.c.b16 %v1940, %v1928
          %v2853 = vpack.c.b16 %v1941, %v1929
          %v2854 = vpack.c.b16 %v1942, %v1930
          %v2855 = vpack.c.b16 %v1943, %v1931
          %v2856 = vpack.c.b16 %v1944, %v1932
          %v2857 = vpack.c.b16 %v1945, %v1933
          %v2858 = vpack.c.b16 %v1946, %v1934
          %v2859 = vpack.c.b16 %v1947, %v1935
          %v2860 = vpack.c.b16 %v1948, %v1936
          %v2861 = vpack.c.b16 %v1961, %v1949
          %v2862 = vpack.c.b16 %v1962, %v1950
          %v2863 = vpack.c.b16 %v1963, %v1951
          %v2864 = vpack.c.b16 %v1964, %v1952
          %v2865 = vpack.c.b16 %v1965, %v1953
          %v2866 = vpack.c.b16 %v1966, %v1954
          %v2867 = vpack.c.b16 %v1967, %v1955
          %v2868 = vpack.c.b16 %v1968, %v1956
          %v2869 = vpack.c.b16 %v1969, %v1957
          %v2870 = vpack.c.b16 %v1970, %v1958
          %v2871 = vpack.c.b16 %v1971, %v1959
          %v2872 = vpack.c.b16 %v1972, %v1960
          %v2873 = vpack.c.b16 %v1985, %v1973
          %v2874 = vpack.c.b16 %v1986, %v1974
          %v2875 = vpack.c.b16 %v1987, %v1975
          %v2876 = vpack.c.b16 %v1988, %v1976
          %v2877 = vpack.c.b16 %v1989, %v1977
          %v2878 = vpack.c.b16 %v1990, %v1978
          %v2879 = vpack.c.b16 %v1991, %v1979
          %v2880 = vpack.c.b16 %v1992, %v1980
          %v2881 = vpack.c.b16 %v1993, %v1981
          %v2882 = vpack.c.b16 %v1994, %v1982
          %v2883 = vpack.c.b16 %v1995, %v1983
          %v2884 = vpack.c.b16 %v1996, %v1984
          %v2885 = vpack.c.b16 %v2009, %v1997
          %v2886 = vpack.c.b16 %v2010, %v1998
          %v2887 = vpack.c.b16 %v2011, %v1999
          %v2888 = vpack.c.b16 %v2012, %v2000
          %v2889 = vpack.c.b16 %v2013, %v2001
          %v2890 = vpack.c.b16 %v2014, %v2002
          %v2891 = vpack.c.b16 %v2015, %v2003
          %v2892 = vpack.c.b16 %v2016, %v2004
          %v2893 = vpack.c.b16 %v2017, %v2005
          %v2894 = vpack.c.b16 %v2018, %v2006
          %v2895 = vpack.c.b16 %v2019, %v2007
          %v2896 = vpack.c.b16 %v2020, %v2008
          %v2897 = vpack.c.b16 %v2033, %v2021
          %v2898 = vpack.c.b16 %v2034, %v2022
          %v2899 = vpack.c.b16 %v2035, %v2023
          %v2900 = vpack.c.b16 %v2036, %v2024
          %v2901 = vpack.c.b16 %v2037, %v2025
          %v2902 = vpack.c.b16 %v2038, %v2026
          %v2903 = vpack.c.b16 %v2039, %v2027
          %v2904 = vpack.c.b16 %v2040, %v2028
          %v2905 = vpack.c.b16 %v2041, %v2029
          %v2906 = vpack.c.b16 %v2042, %v2030
          %v2907 = vpack.c.b16 %v2043, %v2031
          %v2908 = vpack.c.b16 %v2044, %v2032
          %v2909 = vpack.c.b16 %v2057, %v2045
          %v2910 = vpack.c.b16 %v2058, %v2046
          %v2911 = vpack.c.b16 %v2059, %v2047
          %v2912 = vpack.c.b16 %v2060, %v2048
          %v2913 = vpack.c.b16 %v2061, %v2049
          %v2914 = vpack.c.b16 %v2062, %v2050
          %v2915 = vpack.c.b16 %v2063, %v2051
          %v2916 = vpack.c.b16 %v2064, %v2052
          %v2917 = vpack.c.b16 %v2065, %v2053
          %v2918 = vpack.c.b16 %v2066, %v2054
          %v2919 = vpack.c.b16 %v2067, %v2055
          %v2920 = vpack.c.b16 %v2068, %v2056
          %v2921 = vpack.c.b16 %v2081, %v2069
          %v2922 = vpack.c.b16 %v2082, %v2070
          %v2923 = vpack.c.b16 %v2083, %v2071
          %v2924 = vpack.c.b16 %v2084, %v2072
          %v2925 = vpack.c.b16 %v2085, %v2073
          %v2926 = vpack.c.b16 %v2086, %v2074
          %v2927 = vpack.c.b16 %v2087, %v2075
          %v2928 = vpack.c.b16 %v2088, %v2076
          %v2929 = vpack.c.b16 %v2089, %v2077
          %v2930 = vpack.c.b16 %v2090, %v2078
          %v2931 = vpack.c.b16 %v2091, %v2079
          %v2932 = vpack.c.b16 %v2092, %v2080
          %v2933 = vpack.c.b16 %v2105, %v2093
          %v2934 = vpack.c.b16 %v2106, %v2094
          %v2935 = vpack.c.b16 %v2107, %v2095
          %v2936 = vpack.c.b16 %v2108, %v2096
          %v2937 = vpack.c.b16 %v2109, %v2097
          %v2938 = vpack.c.b16 %v2110, %v2098
          %v2939 = vpack.c.b16 %v2111, %v2099
          %v2940 = vpack.c.b16 %v2112, %v2100
          %v2941 = vpack.c.b16 %v2113, %v2101
          %v2942 = vpack.c.b16 %v2114, %v2102
          %v2943 = vpack.c.b16 %v2115, %v2103
          %v2944 = vpack.c.b16 %v2116, %v2104
          %v2945 = vpack.c.b16 %v2129, %v2117
          %v2946 = vpack.c.b16 %v2130, %v2118
          %v2947 = vpack.c.b16 %v2131, %v2119
          %v2948 = vpack.c.b16 %v2132, %v2120
          %v2949 = vpack.c.b16 %v2133, %v2121
          %v2950 = vpack.c.b16 %v2134, %v2122
          %v2951 = vpack.c.b16 %v2135, %v2123
          %v2952 = vpack.c.b16 %v2136, %v2124
          %v2953 = vpack.c.b16 %v2137, %v2125
          %v2954 = vpack.c.b16 %v2138, %v2126
          %v2955 = vpack.c.b16 %v2139, %v2127
          %v2956 = vpack.c.b16 %v2140, %v2128
          %v2957 = vpack.c.b16 %v2153, %v2141
          %v2958 = vpack.c.b16 %v2154, %v2142
          %v2959 = vpack.c.b16 %v2155, %v2143
          %v2960 = vpack.c.b16 %v2156, %v2144
          %v2961 = vpack.c.b16 %v2157, %v2145
          %v2962 = vpack.c.b16 %v2158, %v2146
          %v2963 = vpack.c.b16 %v2159, %v2147
          %v2964 = vpack.c.b16 %v2160, %v2148
          %v2965 = vpack.c.b16 %v2161, %v2149
          %v2966 = vpack.c.b16 %v2162, %v2150
          %v2967 = vpack.c.b16 %v2163, %v2151
          %v2968 = vpack.c.b16 %v2164, %v2152
          %v2969 = vpack.c.b16 %v2177, %v2165
          %v2970 = vpack.c.b16 %v2178, %v2166
          %v2971 = vpack.c.b16 %v2179, %v2167
          %v2972 = vpack.c.b16 %v2180, %v2168
          %v2973 = vpack.c.b16 %v2181, %v2169
          %v2974 = vpack.c.b16 %v2182, %v2170
          %v2975 = vpack.c.b16 %v2183, %v2171
          %v2976 = vpack.c.b16 %v2184, %v2172
          %v2977 = vpack.c.b16 %v2185, %v2173
          %v2978 = vpack.c.b16 %v2186, %v2174
          %v2979 = vpack.c.b16 %v2187, %v2175
          %v2980 = vpack.c.b16 %v2188, %v2176
          %v2981 = vpack.c.b16 %v2201, %v2189
          %v2982 = vpack.c.b16 %v2202, %v2190
          %v2983 = vpack.c.b16 %v2203, %v2191
          %v2984 = vpack.c.b16 %v2204, %v2192
          %v2985 = vpack.c.b16 %v2205, %v2193
          %v2986 = vpack.c.b16 %v2206, %v2194
          %v2987 = vpack.c.b16 %v2207, %v2195
          %v2988 = vpack.c.b16 %v2208, %v2196
          %v2989 = vpack.c.b16 %v2209, %v2197
          %v2990 = vpack.c.b16 %v2210, %v2198
          %v2991 = vpack.c.b16 %v2211, %v2199
          %v2992 = vpack.c.b16 %v2212, %v2200
          %v2993 = vpack.c.b16 %v2225, %v2213
          %v2994 = vpack.c.b16 %v2226, %v2214
          %v2995 = vpack.c.b16 %v2227, %v2215
          %v2996 = vpack.c.b16 %v2228, %v2216
          %v2997 = vpack.c.b16 %v2229, %v2217
          %v2998 = vpack.c.b16 %v2230, %v2218
          %v2999 = vpack.c.b16 %v2231, %v2219
          %v3000 = vpack.c.b16 %v2232, %v2220
          %v3001 = vpack.c.b16 %v2233, %v2221
          %v3002 = vpack.c.b16 %v2234, %v2222
          %v3003 = vpack.c.b16 %v2235, %v2223
          %v3004 = vpack.c.b16 %v2236, %v2224
          %v3005 = vpack.c.b16 %v2249, %v2237
          %v3006 = vpack.c.b16 %v2250, %v2238
          %v3007 = vpack.c.b16 %v2251, %v2239
          %v3008 = vpack.c.b16 %v2252, %v2240
          %v3009 = vpack.c.b16 %v2253, %v2241
          %v3010 = vpack.c.b16 %v2254, %v2242
          %v3011 = vpack.c.b16 %v2255, %v2243
          %v3012 = vpack.c.b16 %v2256, %v2244
          %v3013 = vpack.c.b16 %v2257, %v2245
          %v3014 = vpack.c.b16 %v2258, %v2246
          %v3015 = vpack.c.b16 %v2259, %v2247
          %v3016 = vpack.c.b16 %v2260, %v2248
          %v3017 = vpack.c.b16 %v2273, %v2261
          %v3018 = vpack.c.b16 %v2274, %v2262
          %v3019 = vpack.c.b16 %v2275, %v2263
          %v3020 = vpack.c.b16 %v2276, %v2264
          %v3021 = vpack.c.b16 %v2277, %v2265
          %v3022 = vpack.c.b16 %v2278, %v2266
          %v3023 = vpack.c.b16 %v2279, %v2267
          %v3024 = vpack.c.b16 %v2280, %v2268
          %v3025 = vpack.c.b16 %v2281, %v2269
          %v3026 = vpack.c.b16 %v2282, %v2270
          %v3027 = vpack.c.b16 %v2283, %v2271
          %v3028 = vpack.c.b16 %v2284, %v2272
          %v3029 = vpack.c.b16 %v2297, %v2285
          %v3030 = vpack.c.b16 %v2298, %v2286
          %v3031 = vpack.c.b16 %v2299, %v2287
          %v3032 = vpack.c.b16 %v2300, %v2288
          %v3033 = vpack.c.b16 %v2301, %v2289
          %v3034 = vpack.c.b16 %v2302, %v2290
          %v3035 = vpack.c.b16 %v2303, %v2291
          %v3036 = vpack.c.b16 %v2304, %v2292
          %v3037 = vpack.c.b16 %v2305, %v2293
          %v3038 = vpack.c.b16 %v2306, %v2294
          %v3039 = vpack.c.b16 %v2307, %v2295
          %v3040 = vpack.c.b16 %v2308, %v2296
          %v3041 = vpack.c.b16 %v2321, %v2309
          %v3042 = vpack.c.b16 %v2322, %v2310
          %v3043 = vpack.c.b16 %v2323, %v2311
          %v3044 = vpack.c.b16 %v2324, %v2312
          %v3045 = vpack.c.b16 %v2325, %v2313
          %v3046 = vpack.c.b16 %v2326, %v2314
          %v3047 = vpack.c.b16 %v2327, %v2315
          %v3048 = vpack.c.b16 %v2328, %v2316
          %v3049 = vpack.c.b16 %v2329, %v2317
          %v3050 = vpack.c.b16 %v2330, %v2318
          %v3051 = vpack.c.b16 %v2331, %v2319
          %v3052 = vpack.c.b16 %v2332, %v2320
          %v3053 = vpack.c.b16 %v2345, %v2333
          %v3054 = vpack.c.b16 %v2346, %v2334
          %v3055 = vpack.c.b16 %v2347, %v2335
          %v3056 = vpack.c.b16 %v2348, %v2336
          %v3057 = vpack.c.b16 %v2349, %v2337
          %v3058 = vpack.c.b16 %v2350, %v2338
          %v3059 = vpack.c.b16 %v2351, %v2339
          %v3060 = vpack.c.b16 %v2352, %v2340
          %v3061 = vpack.c.b16 %v2353, %v2341
          %v3062 = vpack.c.b16 %v2354, %v2342
          %v3063 = vpack.c.b16 %v2355, %v2343
          %v3064 = vpack.c.b16 %v2356, %v2344
          %v3065 = vpack.c.b16 %v2369, %v2357
          %v3066 = vpack.c.b16 %v2370, %v2358
          %v3067 = vpack.c.b16 %v2371, %v2359
          %v3068 = vpack.c.b16 %v2372, %v2360
          %v3069 = vpack.c.b16 %v2373, %v2361
          %v3070 = vpack.c.b16 %v2374, %v2362
          %v3071 = vpack.c.b16 %v2375, %v2363
          %v3072 = vpack.c.b16 %v2376, %v2364
          %v3073 = vpack.c.b16 %v2377, %v2365
          %v3074 = vpack.c.b16 %v2378, %v2366
          %v3075 = vpack.c.b16 %v2379, %v2367
          %v3076 = vpack.c.b16 %v2380, %v2368
          %v3077 = vpack.c.b16 %v2393, %v2381
          %v3078 = vpack.c.b16 %v2394, %v2382
          %v3079 = vpack.c.b16 %v2395, %v2383
          %v3080 = vpack.c.b16 %v2396, %v2384
          %v3081 = vpack.c.b16 %v2397, %v2385
          %v3082 = vpack.c.b16 %v2398, %v2386
          %v3083 = vpack.c.b16 %v2399, %v2387
          %v3084 = vpack.c.b16 %v2400, %v2388
          %v3085 = vpack.c.b16 %v2401, %v2389
          %v3086 = vpack.c.b16 %v2402, %v2390
          %v3087 = vpack.c.b16 %v2403, %v2391
          %v3088 = vpack.c.b16 %v2404, %v2392
          %v3089 = vpack.c.b16 %v2417, %v2405
          %v3090 = vpack.c.b16 %v2418, %v2406
          %v3091 = vpack.c.b16 %v2419, %v2407
          %v3092 = vpack.c.b16 %v2420, %v2408
          %v3093 = vpack.c.b16 %v2421, %v2409
          %v3094 = vpack.c.b16 %v2422, %v2410
          %v3095 = vpack.c.b16 %v2423, %v2411
          %v3096 = vpack.c.b16 %v2424, %v2412
          %v3097 = vpack.c.b16 %v2425, %v2413
          %v3098 = vpack.c.b16 %v2426, %v2414
          %v3099 = vpack.c.b16 %v2427, %v2415
          %v3100 = vpack.c.b16 %v2428, %v2416
          %v3101 = vpack.c.b16 %v2441, %v2429
          %v3102 = vpack.c.b16 %v2442, %v2430
          %v3103 = vpack.c.b16 %v2443, %v2431
          %v3104 = vpack.c.b16 %v2444, %v2432
          %v3105 = vpack.c.b16 %v2445, %v2433
          %v3106 = vpack.c.b16 %v2446, %v2434
          %v3107 = vpack.c.b16 %v2447, %v2435
          %v3108 = vpack.c.b16 %v2448, %v2436
          %v3109 = vpack.c.b16 %v2449, %v2437
          %v3110 = vpack.c.b16 %v2450, %v2438
          %v3111 = vpack.c.b16 %v2451, %v2439
          %v3112 = vpack.c.b16 %v2452, %v2440
          %v3113 = vpack.c.b16 %v2465, %v2453
          %v3114 = vpack.c.b16 %v2466, %v2454
          %v3115 = vpack.c.b16 %v2467, %v2455
          %v3116 = vpack.c.b16 %v2468, %v2456
          %v3117 = vpack.c.b16 %v2469, %v2457
          %v3118 = vpack.c.b16 %v2470, %v2458
          %v3119 = vpack.c.b16 %v2471, %v2459
          %v3120 = vpack.c.b16 %v2472, %v2460
          %v3121 = vpack.c.b16 %v2473, %v2461
          %v3122 = vpack.c.b16 %v2474, %v2462
          %v3123 = vpack.c.b16 %v2475, %v2463
          %v3124 = vpack.c.b16 %v2476, %v2464
          %v3125 = vpack.c.b16 %v2489, %v2477
          %v3126 = vpack.c.b16 %v2490, %v2478
          %v3127 = vpack.c.b16 %v2491, %v2479
          %v3128 = vpack.c.b16 %v2492, %v2480
          %v3129 = vpack.c.b16 %v2493, %v2481
          %v3130 = vpack.c.b16 %v2494, %v2482
          %v3131 = vpack.c.b16 %v2495, %v2483
          %v3132 = vpack.c.b16 %v2496, %v2484
          %v3133 = vpack.c.b16 %v2497, %v2485
          %v3134 = vpack.c.b16 %v2498, %v2486
          %v3135 = vpack.c.b16 %v2499, %v2487
          %v3136 = vpack.c.b16 %v2500, %v2488
          %v3137 = vpack.c.b16 %v2513, %v2501
          %v3138 = vpack.c.b16 %v2514, %v2502
          %v3139 = vpack.c.b16 %v2515, %v2503
          %v3140 = vpack.c.b16 %v2516, %v2504
          %v3141 = vpack.c.b16 %v2517, %v2505
          %v3142 = vpack.c.b16 %v2518, %v2506
          %v3143 = vpack.c.b16 %v2519, %v2507
          %v3144 = vpack.c.b16 %v2520, %v2508
          %v3145 = vpack.c.b16 %v2521, %v2509
          %v3146 = vpack.c.b16 %v2522, %v2510
          %v3147 = vpack.c.b16 %v2523, %v2511
          %v3148 = vpack.c.b16 %v2524, %v2512
          %v3149 = vpack.c.b16 %v2537, %v2525
          %v3150 = vpack.c.b16 %v2538, %v2526
          %v3151 = vpack.c.b16 %v2539, %v2527
          %v3152 = vpack.c.b16 %v2540, %v2528
          %v3153 = vpack.c.b16 %v2541, %v2529
          %v3154 = vpack.c.b16 %v2542, %v2530
          %v3155 = vpack.c.b16 %v2543, %v2531
          %v3156 = vpack.c.b16 %v2544, %v2532
          %v3157 = vpack.c.b16 %v2545, %v2533
          %v3158 = vpack.c.b16 %v2546, %v2534
          %v3159 = vpack.c.b16 %v2547, %v2535
          %v3160 = vpack.c.b16 %v2548, %v2536
          %v3161 = vpack.c.b16 %v2561, %v2549
          %v3162 = vpack.c.b16 %v2562, %v2550
          %v3163 = vpack.c.b16 %v2563, %v2551
          %v3164 = vpack.c.b16 %v2564, %v2552
          %v3165 = vpack.c.b16 %v2565, %v2553
          %v3166 = vpack.c.b16 %v2566, %v2554
          %v3167 = vpack.c.b16 %v2567, %v2555
          %v3168 = vpack.c.b16 %v2568, %v2556
          %v3169 = vpack.c.b16 %v2569, %v2557
          %v3170 = vpack.c.b16 %v2570, %v2558
          %v3171 = vpack.c.b16 %v2571, %v2559
          %v3172 = vpack.c.b16 %v2572, %v2560
          %v3173 = vpack.c.b16 %v2585, %v2573
          %v3174 = vpack.c.b16 %v2586, %v2574
          %v3175 = vpack.c.b16 %v2587, %v2575
          %v3176 = vpack.c.b16 %v2588, %v2576
          %v3177 = vpack.c.b16 %v2589, %v2577
          %v3178 = vpack.c.b16 %v2590, %v2578
          %v3179 = vpack.c.b16 %v2591, %v2579
          %v3180 = vpack.c.b16 %v2592, %v2580
          %v3181 = vpack.c.b16 %v2593, %v2581
          %v3182 = vpack.c.b16 %v2594, %v2582
          %v3183 = vpack.c.b16 %v2595, %v2583
          %v3184 = vpack.c.b16 %v2596, %v2584
          %v3185 = vpack.c.b16 %v2609, %v2597
          %v3186 = vpack.c.b16 %v2610, %v2598
          %v3187 = vpack.c.b16 %v2611, %v2599
          %v3188 = vpack.c.b16 %v2612, %v2600
          %v3189 = vpack.c.b16 %v2613, %v2601
          %v3190 = vpack.c.b16 %v2614, %v2602
          %v3191 = vpack.c.b16 %v2615, %v2603
          %v3192 = vpack.c.b16 %v2616, %v2604
          %v3193 = vpack.c.b16 %v2617, %v2605
          %v3194 = vpack.c.b16 %v2618, %v2606
          %v3195 = vpack.c.b16 %v2619, %v2607
          %v3196 = vpack.c.b16 %v2620, %v2608
          %v3775 = vlaneseq
          %v3776 = vshrl.u32 %v3775, 7
          %v3777 = vsub.s32 0, %v3776
          %v3778 = vrot.slane %v891, %v3777
          %v3779 = vlaneseq
          %v3780 = vshrl.u32 %v3779, 7
          %v3781 = vsub.s32 1, %v3780
          %v3782 = vrot.slane %v891, %v3781
          %v3783 = vlaneseq
          %v3784 = vshrl.u32 %v3783, 7
          %v3785 = vsub.s32 2, %v3784
          %v3786 = vrot.slane %v891, %v3785
          %v3787 = vlaneseq
          %v3788 = vshrl.u32 %v3787, 7
          %v3789 = vsub.s32 3, %v3788
          %v3790 = vrot.slane %v891, %v3789
          %v3791 = vlaneseq
          %v3792 = vshrl.u32 %v3791, 7
          %v3793 = vsub.s32 4, %v3792
          %v3794 = vrot.slane %v891, %v3793
          %v3795 = vlaneseq
          %v3796 = vshrl.u32 %v3795, 7
          %v3797 = vsub.s32 5, %v3796
          %v3798 = vrot.slane %v891, %v3797
          %v3799 = vlaneseq
          %v3800 = vshrl.u32 %v3799, 7
          %v3801 = vsub.s32 6, %v3800
          %v3802 = vrot.slane %v891, %v3801
          %v3803 = vlaneseq
          %v3804 = vshrl.u32 %v3803, 7
          %v3805 = vsub.s32 7, %v3804
          %v3806 = vrot.slane %v891, %v3805
          %v3807 = vlaneseq
          %v3808 = vshrl.u32 %v3807, 7
          %v3809 = vsub.s32 0, %v3808
          %v3810 = vrot.slane %v892, %v3809
          %v3811 = vlaneseq
          %v3812 = vshrl.u32 %v3811, 7
          %v3813 = vsub.s32 1, %v3812
          %v3814 = vrot.slane %v892, %v3813
          %v3815 = vlaneseq
          %v3816 = vshrl.u32 %v3815, 7
          %v3817 = vsub.s32 2, %v3816
          %v3818 = vrot.slane %v892, %v3817
          %v3819 = vlaneseq
          %v3820 = vshrl.u32 %v3819, 7
          %v3821 = vsub.s32 3, %v3820
          %v3822 = vrot.slane %v892, %v3821
          %3835 = vmatprep.subr.bf16.mxu0 %v2622
          %3836 = vmatpush1.bf16.msra.mxu0 %v2621
          %3837 = vmatprep.subr.bf16.mxu0 %v2634
          %3838 = vmatpush1.bf16.msra.mxu0 %v2633
          %3839 = vmatprep.subr.bf16.mxu0 %v2646
          %3840 = vmatpush1.bf16.msra.mxu0 %v2645
          %3841 = vmatprep.subr.bf16.mxu0 %v2658
          %3842 = vmatpush1.bf16.msra.mxu0 %v2657
          %3843 = vmatprep.subr.bf16.mxu0 %v2670
          %3844 = vmatpush1.bf16.msra.mxu0 %v2669
          %3845 = vmatprep.subr.bf16.mxu0 %v2682
          %3846 = vmatpush1.bf16.msra.mxu0 %v2681
          %3847 = vmatprep.subr.bf16.mxu0 %v2694
          %3848 = vmatpush1.bf16.msra.mxu0 %v2693
          %3849 = vmatprep.subr.bf16.mxu0 %v2706
          %3850 = vmatpush1.bf16.msra.mxu0 %v2705
          %3851 = vmatprep.subr.bf16.mxu0 %v2718
          %3852 = vmatpush1.bf16.msra.mxu0 %v2717
          %3853 = vmatprep.subr.bf16.mxu0 %v2730
          %3854 = vmatpush1.bf16.msra.mxu0 %v2729
          %3855 = vmatprep.subr.bf16.mxu0 %v2742
          %3856 = vmatpush1.bf16.msra.mxu0 %v2741
          %3857 = vmatprep.subr.bf16.mxu0 %v2754
          %3858 = vmatpush1.bf16.msra.mxu0 %v2753
          %3859 = vmatprep.subr.bf16.mxu0 %v2766
          %3860 = vmatpush1.bf16.msra.mxu0 %v2765
          %3861 = vmatprep.subr.bf16.mxu0 %v2778
          %3862 = vmatpush1.bf16.msra.mxu0 %v2777
          %3863 = vmatprep.subr.bf16.mxu0 %v2790
          %3864 = vmatpush1.bf16.msra.mxu0 %v2789
          %3865 = vmatprep.subr.bf16.mxu0 %v2802
          %3866 = vmatpush1.bf16.msra.mxu0 %v2801
          %3867 = vmatprep.mubr.bf16.mxu0 %v310
          %3868 = vmatmul.mubr.bf16.gmra.mrb[0].mxu0 %v309
          %v3869 = vpop.f32.mrb[0].mxu0
          %v3870 = vadd.f32 %v3778, %v3869
          %v3871 = vpop.f32.mrb[0].mxu0
          %v3872 = vadd.f32 %v3782, %v3871
          %v3873 = vpop.f32.mrb[0].mxu0
          %v3874 = vpop.f32.mrb[0].mxu0
          %3875 = vdwg.mxu0
          %3876 = vmatprep.subr.bf16.mxu0 %v2814
          %3877 = vmatpush1.bf16.msra.mxu0 %v2813
          %3878 = vmatprep.subr.bf16.mxu0 %v2826
          %3879 = vmatpush1.bf16.msra.mxu0 %v2825
          %3880 = vmatprep.subr.bf16.mxu0 %v2838
          %3881 = vmatpush1.bf16.msra.mxu0 %v2837
          %3882 = vmatprep.subr.bf16.mxu0 %v2850
          %3883 = vmatpush1.bf16.msra.mxu0 %v2849
          %3884 = vmatprep.subr.bf16.mxu0 %v2862
          %3885 = vmatpush1.bf16.msra.mxu0 %v2861
          %3886 = vmatprep.subr.bf16.mxu0 %v2874
          %3887 = vmatpush1.bf16.msra.mxu0 %v2873
          %3888 = vmatprep.subr.bf16.mxu0 %v2886
          %3889 = vmatpush1.bf16.msra.mxu0 %v2885
          %3890 = vmatprep.subr.bf16.mxu0 %v2898
          %3891 = vmatpush1.bf16.msra.mxu0 %v2897
          %3892 = vmatprep.subr.bf16.mxu0 %v2910
          %3893 = vmatpush1.bf16.msra.mxu0 %v2909
          %3894 = vmatprep.subr.bf16.mxu0 %v2922
          %3895 = vmatpush1.bf16.msra.mxu0 %v2921
          %3896 = vmatprep.subr.bf16.mxu0 %v2934
          %3897 = vmatpush1.bf16.msra.mxu0 %v2933
          %3898 = vmatprep.subr.bf16.mxu0 %v2946
          %3899 = vmatpush1.bf16.msra.mxu0 %v2945
          %3900 = vmatprep.subr.bf16.mxu0 %v2958
          %3901 = vmatpush1.bf16.msra.mxu0 %v2957
          %3902 = vmatprep.subr.bf16.mxu0 %v2970
          %3903 = vmatpush1.bf16.msra.mxu0 %v2969
          %3904 = vmatprep.subr.bf16.mxu0 %v2982
          %3905 = vmatpush1.bf16.msra.mxu0 %v2981
          %3906 = vmatprep.subr.bf16.mxu0 %v2994
          %3907 = vmatpush1.bf16.msra.mxu0 %v2993
          %3908 = vmatprep.mubr.bf16.mxu0 %v312
          %3909 = vmatmul.mubr.bf16.gmra.mrb[0].mxu0 %v311
          %v3910 = vpop.f32.mrb[0].mxu0
          %v3911 = vadd.f32 %v3870, %v3910
          %v3912 = vpop.f32.mrb[0].mxu0
          %v3913 = vadd.f32 %v3872, %v3912
          %v3914 = vpop.f32.mrb[0].mxu0
          %v3915 = vpop.f32.mrb[0].mxu0
          %3916 = vdwg.mxu0
          %3917 = vmatprep.subr.bf16.mxu0 %v3006
          %3918 = vmatpush1.bf16.msra.mxu0 %v3005
          %3919 = vmatprep.subr.bf16.mxu0 %v3018
          %3920 = vmatpush1.bf16.msra.mxu0 %v3017
          %3921 = vmatprep.subr.bf16.mxu0 %v3030
          %3922 = vmatpush1.bf16.msra.mxu0 %v3029
          %3923 = vmatprep.subr.bf16.mxu0 %v3042
          %3924 = vmatpush1.bf16.msra.mxu0 %v3041
          %3925 = vmatprep.subr.bf16.mxu0 %v3054
          %3926 = vmatpush1.bf16.msra.mxu0 %v3053
          %3927 = vmatprep.subr.bf16.mxu0 %v3066
          %3928 = vmatpush1.bf16.msra.mxu0 %v3065
          %3929 = vmatprep.subr.bf16.mxu0 %v3078
          %3930 = vmatpush1.bf16.msra.mxu0 %v3077
          %3931 = vmatprep.subr.bf16.mxu0 %v3090
          %3932 = vmatpush1.bf16.msra.mxu0 %v3089
          %3933 = vmatprep.subr.bf16.mxu0 %v3102
          %3934 = vmatpush1.bf16.msra.mxu0 %v3101
          %3935 = vmatprep.subr.bf16.mxu0 %v3114
          %3936 = vmatpush1.bf16.msra.mxu0 %v3113
          %3937 = vmatprep.subr.bf16.mxu0 %v3126
          %3938 = vmatpush1.bf16.msra.mxu0 %v3125
          %3939 = vmatprep.subr.bf16.mxu0 %v3138
          %3940 = vmatpush1.bf16.msra.mxu0 %v3137
          %3941 = vmatprep.subr.bf16.mxu0 %v3150
          %3942 = vmatpush1.bf16.msra.mxu0 %v3149
          %3943 = vmatprep.subr.bf16.mxu0 %v3162
          %3944 = vmatpush1.bf16.msra.mxu0 %v3161
          %3945 = vmatprep.subr.bf16.mxu0 %v3174
          %3946 = vmatpush1.bf16.msra.mxu0 %v3173
          %3947 = vmatprep.subr.bf16.mxu0 %v3186
          %3948 = vmatpush1.bf16.msra.mxu0 %v3185
          %3949 = vmatprep.mubr.bf16.mxu0 %v314
          %3950 = vmatmul.mubr.bf16.gmra.mrb[0].mxu0 %v313
          %v3951 = vpop.f32.mrb[0].mxu0
          %v3952 = vadd.f32 %v3911, %v3951
          %v3953 = vpop.f32.mrb[0].mxu0
          %v3954 = vadd.f32 %v3913, %v3953
          %v3955 = vpop.f32.mrb[0].mxu0
          %v3956 = vpop.f32.mrb[0].mxu0
          %3957 = vdwg.mxu0
          %3958 = vmatprep.subr.bf16.mxu0 %v2624
          %3959 = vmatpush1.bf16.msra.mxu0 %v2623
          %3960 = vmatprep.subr.bf16.mxu0 %v2636
          %3961 = vmatpush1.bf16.msra.mxu0 %v2635
          %3962 = vmatprep.subr.bf16.mxu0 %v2648
          %3963 = vmatpush1.bf16.msra.mxu0 %v2647
          %3964 = vmatprep.subr.bf16.mxu0 %v2660
          %3965 = vmatpush1.bf16.msra.mxu0 %v2659
          %3966 = vmatprep.subr.bf16.mxu0 %v2672
          %3967 = vmatpush1.bf16.msra.mxu0 %v2671
          %3968 = vmatprep.subr.bf16.mxu0 %v2684
          %3969 = vmatpush1.bf16.msra.mxu0 %v2683
          %3970 = vmatprep.subr.bf16.mxu0 %v2696
          %3971 = vmatpush1.bf16.msra.mxu0 %v2695
          %3972 = vmatprep.subr.bf16.mxu0 %v2708
          %3973 = vmatpush1.bf16.msra.mxu0 %v2707
          %3974 = vmatprep.subr.bf16.mxu0 %v2720
          %3975 = vmatpush1.bf16.msra.mxu0 %v2719
          %3976 = vmatprep.subr.bf16.mxu0 %v2732
          %3977 = vmatpush1.bf16.msra.mxu0 %v2731
          %3978 = vmatprep.subr.bf16.mxu0 %v2744
          %3979 = vmatpush1.bf16.msra.mxu0 %v2743
          %3980 = vmatprep.subr.bf16.mxu0 %v2756
          %3981 = vmatpush1.bf16.msra.mxu0 %v2755
          %3982 = vmatprep.subr.bf16.mxu0 %v2768
          %3983 = vmatpush1.bf16.msra.mxu0 %v2767
          %3984 = vmatprep.subr.bf16.mxu0 %v2780
          %3985 = vmatpush1.bf16.msra.mxu0 %v2779
          %3986 = vmatprep.subr.bf16.mxu0 %v2792
          %3987 = vmatpush1.bf16.msra.mxu0 %v2791
          %3988 = vmatprep.subr.bf16.mxu0 %v2804
          %3989 = vmatpush1.bf16.msra.mxu0 %v2803
          %3990 = vmatprep.mubr.bf16.mxu0 %v310
          %3991 = vmatmul.mubr.bf16.gmra.mrb[0].mxu0 %v309
          %v3992 = vpop.f32.mrb[0].mxu0
          %v3993 = vadd.f32 %v3786, %v3992
          %v3994 = vpop.f32.mrb[0].mxu0
          %v3995 = vadd.f32 %v3790, %v3994
          %v3996 = vpop.f32.mrb[0].mxu0
          %v3997 = vpop.f32.mrb[0].mxu0
          %3998 = vdwg.mxu0
          %3999 = vmatprep.subr.bf16.mxu0 %v2816
          %4000 = vmatpush1.bf16.msra.mxu0 %v2815
          %4001 = vmatprep.subr.bf16.mxu0 %v2828
          %4002 = vmatpush1.bf16.msra.mxu0 %v2827
          %4003 = vmatprep.subr.bf16.mxu0 %v2840
          %4004 = vmatpush1.bf16.msra.mxu0 %v2839
          %4005 = vmatprep.subr.bf16.mxu0 %v2852
          %4006 = vmatpush1.bf16.msra.mxu0 %v2851
          %4007 = vmatprep.subr.bf16.mxu0 %v2864
          %4008 = vmatpush1.bf16.msra.mxu0 %v2863
          %4009 = vmatprep.subr.bf16.mxu0 %v2876
          %4010 = vmatpush1.bf16.msra.mxu0 %v2875
          %4011 = vmatprep.subr.bf16.mxu0 %v2888
          %4012 = vmatpush1.bf16.msra.mxu0 %v2887
          %4013 = vmatprep.subr.bf16.mxu0 %v2900
          %4014 = vmatpush1.bf16.msra.mxu0 %v2899
          %4015 = vmatprep.subr.bf16.mxu0 %v2912
          %4016 = vmatpush1.bf16.msra.mxu0 %v2911
          %4017 = vmatprep.subr.bf16.mxu0 %v2924
          %4018 = vmatpush1.bf16.msra.mxu0 %v2923
          %4019 = vmatprep.subr.bf16.mxu0 %v2936
          %4020 = vmatpush1.bf16.msra.mxu0 %v2935
          %4021 = vmatprep.subr.bf16.mxu0 %v2948
          %4022 = vmatpush1.bf16.msra.mxu0 %v2947
          %4023 = vmatprep.subr.bf16.mxu0 %v2960
          %4024 = vmatpush1.bf16.msra.mxu0 %v2959
          %4025 = vmatprep.subr.bf16.mxu0 %v2972
          %4026 = vmatpush1.bf16.msra.mxu0 %v2971
          %4027 = vmatprep.subr.bf16.mxu0 %v2984
          %4028 = vmatpush1.bf16.msra.mxu0 %v2983
          %4029 = vmatprep.subr.bf16.mxu0 %v2996
          %4030 = vmatpush1.bf16.msra.mxu0 %v2995
          %4031 = vmatprep.mubr.bf16.mxu0 %v312
          %4032 = vmatmul.mubr.bf16.gmra.mrb[0].mxu0 %v311
          %v4033 = vpop.f32.mrb[0].mxu0
          %v4034 = vadd.f32 %v3993, %v4033
          %v4035 = vpop.f32.mrb[0].mxu0
          %v4036 = vadd.f32 %v3995, %v4035
          %v4037 = vpop.f32.mrb[0].mxu0
          %v4038 = vpop.f32.mrb[0].mxu0
          %4039 = vdwg.mxu0
          %4040 = vmatprep.subr.bf16.mxu0 %v3008
          %4041 = vmatpush1.bf16.msra.mxu0 %v3007
          %4042 = vmatprep.subr.bf16.mxu0 %v3020
          %4043 = vmatpush1.bf16.msra.mxu0 %v3019
          %4044 = vmatprep.subr.bf16.mxu0 %v3032
          %4045 = vmatpush1.bf16.msra.mxu0 %v3031
          %4046 = vmatprep.subr.bf16.mxu0 %v3044
          %4047 = vmatpush1.bf16.msra.mxu0 %v3043
          %4048 = vmatprep.subr.bf16.mxu0 %v3056
          %4049 = vmatpush1.bf16.msra.mxu0 %v3055
          %4050 = vmatprep.subr.bf16.mxu0 %v3068
          %4051 = vmatpush1.bf16.msra.mxu0 %v3067
          %4052 = vmatprep.subr.bf16.mxu0 %v3080
          %4053 = vmatpush1.bf16.msra.mxu0 %v3079
          %4054 = vmatprep.subr.bf16.mxu0 %v3092
          %4055 = vmatpush1.bf16.msra.mxu0 %v3091
          %4056 = vmatprep.subr.bf16.mxu0 %v3104
          %4057 = vmatpush1.bf16.msra.mxu0 %v3103
          %4058 = vmatprep.subr.bf16.mxu0 %v3116
          %4059 = vmatpush1.bf16.msra.mxu0 %v3115
          %4060 = vmatprep.subr.bf16.mxu0 %v3128
          %4061 = vmatpush1.bf16.msra.mxu0 %v3127
          %4062 = vmatprep.subr.bf16.mxu0 %v3140
          %4063 = vmatpush1.bf16.msra.mxu0 %v3139
          %4064 = vmatprep.subr.bf16.mxu0 %v3152
          %4065 = vmatpush1.bf16.msra.mxu0 %v3151
          %4066 = vmatprep.subr.bf16.mxu0 %v3164
          %4067 = vmatpush1.bf16.msra.mxu0 %v3163
          %4068 = vmatprep.subr.bf16.mxu0 %v3176
          %4069 = vmatpush1.bf16.msra.mxu0 %v3175
          %4070 = vmatprep.subr.bf16.mxu0 %v3188
          %4071 = vmatpush1.bf16.msra.mxu0 %v3187
          %4072 = vmatprep.mubr.bf16.mxu0 %v314
          %4073 = vmatmul.mubr.bf16.gmra.mrb[0].mxu0 %v313
          %v4074 = vpop.f32.mrb[0].mxu0
          %v4075 = vadd.f32 %v4034, %v4074
          %v4076 = vpop.f32.mrb[0].mxu0
          %v4077 = vadd.f32 %v4036, %v4076
          %v4078 = vpop.f32.mrb[0].mxu0
          %v4079 = vpop.f32.mrb[0].mxu0
          %4080 = vdwg.mxu0
          %4081 = vmatprep.subr.bf16.mxu0 %v2626
          %4082 = vmatpush1.bf16.msra.mxu0 %v2625
          %4083 = vmatprep.subr.bf16.mxu0 %v2638
          %4084 = vmatpush1.bf16.msra.mxu0 %v2637
          %4085 = vmatprep.subr.bf16.mxu0 %v2650
          %4086 = vmatpush1.bf16.msra.mxu0 %v2649
          %4087 = vmatprep.subr.bf16.mxu0 %v2662
          %4088 = vmatpush1.bf16.msra.mxu0 %v2661
          %4089 = vmatprep.subr.bf16.mxu0 %v2674
          %4090 = vmatpush1.bf16.msra.mxu0 %v2673
          %4091 = vmatprep.subr.bf16.mxu0 %v2686
          %4092 = vmatpush1.bf16.msra.mxu0 %v2685
          %4093 = vmatprep.subr.bf16.mxu0 %v2698
          %4094 = vmatpush1.bf16.msra.mxu0 %v2697
          %4095 = vmatprep.subr.bf16.mxu0 %v2710
          %4096 = vmatpush1.bf16.msra.mxu0 %v2709
          %4097 = vmatprep.subr.bf16.mxu0 %v2722
          %4098 = vmatpush1.bf16.msra.mxu0 %v2721
          %4099 = vmatprep.subr.bf16.mxu0 %v2734
          %4100 = vmatpush1.bf16.msra.mxu0 %v2733
          %4101 = vmatprep.subr.bf16.mxu0 %v2746
          %4102 = vmatpush1.bf16.msra.mxu0 %v2745
          %4103 = vmatprep.subr.bf16.mxu0 %v2758
          %4104 = vmatpush1.bf16.msra.mxu0 %v2757
          %4105 = vmatprep.subr.bf16.mxu0 %v2770
          %4106 = vmatpush1.bf16.msra.mxu0 %v2769
          %4107 = vmatprep.subr.bf16.mxu0 %v2782
          %4108 = vmatpush1.bf16.msra.mxu0 %v2781
          %4109 = vmatprep.subr.bf16.mxu0 %v2794
          %4110 = vmatpush1.bf16.msra.mxu0 %v2793
          %4111 = vmatprep.subr.bf16.mxu0 %v2806
          %4112 = vmatpush1.bf16.msra.mxu0 %v2805
          %4113 = vmatprep.mubr.bf16.mxu0 %v310
          %4114 = vmatmul.mubr.bf16.gmra.mrb[0].mxu0 %v309
          %v4115 = vpop.f32.mrb[0].mxu0
          %v4116 = vadd.f32 %v3794, %v4115
          %v4117 = vpop.f32.mrb[0].mxu0
          %v4118 = vadd.f32 %v3798, %v4117
          %v4119 = vpop.f32.mrb[0].mxu0
          %v4120 = vpop.f32.mrb[0].mxu0
          %4121 = vdwg.mxu0
          %4122 = vmatprep.subr.bf16.mxu0 %v2818
          %4123 = vmatpush1.bf16.msra.mxu0 %v2817
          %4124 = vmatprep.subr.bf16.mxu0 %v2830
          %4125 = vmatpush1.bf16.msra.mxu0 %v2829
          %4126 = vmatprep.subr.bf16.mxu0 %v2842
          %4127 = vmatpush1.bf16.msra.mxu0 %v2841
          %4128 = vmatprep.subr.bf16.mxu0 %v2854
          %4129 = vmatpush1.bf16.msra.mxu0 %v2853
          %4130 = vmatprep.subr.bf16.mxu0 %v2866
          %4131 = vmatpush1.bf16.msra.mxu0 %v2865
          %4132 = vmatprep.subr.bf16.mxu0 %v2878
          %4133 = vmatpush1.bf16.msra.mxu0 %v2877
          %4134 = vmatprep.subr.bf16.mxu0 %v2890
          %4135 = vmatpush1.bf16.msra.mxu0 %v2889
          %4136 = vmatprep.subr.bf16.mxu0 %v2902
          %4137 = vmatpush1.bf16.msra.mxu0 %v2901
          %4138 = vmatprep.subr.bf16.mxu0 %v2914
          %4139 = vmatpush1.bf16.msra.mxu0 %v2913
          %4140 = vmatprep.subr.bf16.mxu0 %v2926
          %4141 = vmatpush1.bf16.msra.mxu0 %v2925
          %4142 = vmatprep.subr.bf16.mxu0 %v2938
          %4143 = vmatpush1.bf16.msra.mxu0 %v2937
          %4144 = vmatprep.subr.bf16.mxu0 %v2950
          %4145 = vmatpush1.bf16.msra.mxu0 %v2949
          %4146 = vmatprep.subr.bf16.mxu0 %v2962
          %4147 = vmatpush1.bf16.msra.mxu0 %v2961
          %4148 = vmatprep.subr.bf16.mxu0 %v2974
          %4149 = vmatpush1.bf16.msra.mxu0 %v2973
          %4150 = vmatprep.subr.bf16.mxu0 %v2986
          %4151 = vmatpush1.bf16.msra.mxu0 %v2985
          %4152 = vmatprep.subr.bf16.mxu0 %v2998
          %4153 = vmatpush1.bf16.msra.mxu0 %v2997
          %4154 = vmatprep.mubr.bf16.mxu0 %v312
          %4155 = vmatmul.mubr.bf16.gmra.mrb[0].mxu0 %v311
          %v4156 = vpop.f32.mrb[0].mxu0
          %v4157 = vadd.f32 %v4116, %v4156
          %v4158 = vpop.f32.mrb[0].mxu0
          %v4159 = vadd.f32 %v4118, %v4158
          %v4160 = vpop.f32.mrb[0].mxu0
          %v4161 = vpop.f32.mrb[0].mxu0
          %4162 = vdwg.mxu0
          %4163 = vmatprep.subr.bf16.mxu0 %v3010
          %4164 = vmatpush1.bf16.msra.mxu0 %v3009
          %4165 = vmatprep.subr.bf16.mxu0 %v3022
          %4166 = vmatpush1.bf16.msra.mxu0 %v3021
          %4167 = vmatprep.subr.bf16.mxu0 %v3034
          %4168 = vmatpush1.bf16.msra.mxu0 %v3033
          %4169 = vmatprep.subr.bf16.mxu0 %v3046
          %4170 = vmatpush1.bf16.msra.mxu0 %v3045
          %4171 = vmatprep.subr.bf16.mxu0 %v3058
          %4172 = vmatpush1.bf16.msra.mxu0 %v3057
          %4173 = vmatprep.subr.bf16.mxu0 %v3070
          %4174 = vmatpush1.bf16.msra.mxu0 %v3069
          %4175 = vmatprep.subr.bf16.mxu0 %v3082
          %4176 = vmatpush1.bf16.msra.mxu0 %v3081
          %4177 = vmatprep.subr.bf16.mxu0 %v3094
          %4178 = vmatpush1.bf16.msra.mxu0 %v3093
          %4179 = vmatprep.subr.bf16.mxu0 %v3106
          %4180 = vmatpush1.bf16.msra.mxu0 %v3105
          %4181 = vmatprep.subr.bf16.mxu0 %v3118
          %4182 = vmatpush1.bf16.msra.mxu0 %v3117
          %4183 = vmatprep.subr.bf16.mxu0 %v3130
          %4184 = vmatpush1.bf16.msra.mxu0 %v3129
          %4185 = vmatprep.subr.bf16.mxu0 %v3142
          %4186 = vmatpush1.bf16.msra.mxu0 %v3141
          %4187 = vmatprep.subr.bf16.mxu0 %v3154
          %4188 = vmatpush1.bf16.msra.mxu0 %v3153
          %4189 = vmatprep.subr.bf16.mxu0 %v3166
          %4190 = vmatpush1.bf16.msra.mxu0 %v3165
          %4191 = vmatprep.subr.bf16.mxu0 %v3178
          %4192 = vmatpush1.bf16.msra.mxu0 %v3177
          %4193 = vmatprep.subr.bf16.mxu0 %v3190
          %4194 = vmatpush1.bf16.msra.mxu0 %v3189
          %4195 = vmatprep.mubr.bf16.mxu0 %v314
          %4196 = vmatmul.mubr.bf16.gmra.mrb[0].mxu0 %v313
          %v4197 = vpop.f32.mrb[0].mxu0
          %v4198 = vadd.f32 %v4157, %v4197
          %v4199 = vpop.f32.mrb[0].mxu0
          %v4200 = vadd.f32 %v4159, %v4199
          %v4201 = vpop.f32.mrb[0].mxu0
          %v4202 = vpop.f32.mrb[0].mxu0
          %4203 = vdwg.mxu0
          %4204 = vmatprep.subr.bf16.mxu0 %v2628
          %4205 = vmatpush1.bf16.msra.mxu0 %v2627
          %4206 = vmatprep.subr.bf16.mxu0 %v2640
          %4207 = vmatpush1.bf16.msra.mxu0 %v2639
          %4208 = vmatprep.subr.bf16.mxu0 %v2652
          %4209 = vmatpush1.bf16.msra.mxu0 %v2651
          %4210 = vmatprep.subr.bf16.mxu0 %v2664
          %4211 = vmatpush1.bf16.msra.mxu0 %v2663
          %4212 = vmatprep.subr.bf16.mxu0 %v2676
          %4213 = vmatpush1.bf16.msra.mxu0 %v2675
          %4214 = vmatprep.subr.bf16.mxu0 %v2688
          %4215 = vmatpush1.bf16.msra.mxu0 %v2687
          %4216 = vmatprep.subr.bf16.mxu0 %v2700
          %4217 = vmatpush1.bf16.msra.mxu0 %v2699
          %4218 = vmatprep.subr.bf16.mxu0 %v2712
          %4219 = vmatpush1.bf16.msra.mxu0 %v2711
          %4220 = vmatprep.subr.bf16.mxu0 %v2724
          %4221 = vmatpush1.bf16.msra.mxu0 %v2723
          %4222 = vmatprep.subr.bf16.mxu0 %v2736
          %4223 = vmatpush1.bf16.msra.mxu0 %v2735
          %4224 = vmatprep.subr.bf16.mxu0 %v2748
          %4225 = vmatpush1.bf16.msra.mxu0 %v2747
          %4226 = vmatprep.subr.bf16.mxu0 %v2760
          %4227 = vmatpush1.bf16.msra.mxu0 %v2759
          %4228 = vmatprep.subr.bf16.mxu0 %v2772
          %4229 = vmatpush1.bf16.msra.mxu0 %v2771
          %4230 = vmatprep.subr.bf16.mxu0 %v2784
          %4231 = vmatpush1.bf16.msra.mxu0 %v2783
          %4232 = vmatprep.subr.bf16.mxu0 %v2796
          %4233 = vmatpush1.bf16.msra.mxu0 %v2795
          %4234 = vmatprep.subr.bf16.mxu0 %v2808
          %4235 = vmatpush1.bf16.msra.mxu0 %v2807
          %4236 = vmatprep.mubr.bf16.mxu0 %v310
          %4237 = vmatmul.mubr.bf16.gmra.mrb[0].mxu0 %v309
          %v4238 = vpop.f32.mrb[0].mxu0
          %v4239 = vadd.f32 %v3802, %v4238
          %v4240 = vpop.f32.mrb[0].mxu0
          %v4241 = vadd.f32 %v3806, %v4240
          %v4242 = vpop.f32.mrb[0].mxu0
          %v4243 = vpop.f32.mrb[0].mxu0
          %4244 = vdwg.mxu0
          %4245 = vmatprep.subr.bf16.mxu0 %v2820
          %4246 = vmatpush1.bf16.msra.mxu0 %v2819
          %4247 = vmatprep.subr.bf16.mxu0 %v2832
          %4248 = vmatpush1.bf16.msra.mxu0 %v2831
          %4249 = vmatprep.subr.bf16.mxu0 %v2844
          %4250 = vmatpush1.bf16.msra.mxu0 %v2843
          %4251 = vmatprep.subr.bf16.mxu0 %v2856
          %4252 = vmatpush1.bf16.msra.mxu0 %v2855
          %4253 = vmatprep.subr.bf16.mxu0 %v2868
          %4254 = vmatpush1.bf16.msra.mxu0 %v2867
          %4255 = vmatprep.subr.bf16.mxu0 %v2880
          %4256 = vmatpush1.bf16.msra.mxu0 %v2879
          %4257 = vmatprep.subr.bf16.mxu0 %v2892
          %4258 = vmatpush1.bf16.msra.mxu0 %v2891
          %4259 = vmatprep.subr.bf16.mxu0 %v2904
          %4260 = vmatpush1.bf16.msra.mxu0 %v2903
          %4261 = vmatprep.subr.bf16.mxu0 %v2916
          %4262 = vmatpush1.bf16.msra.mxu0 %v2915
          %4263 = vmatprep.subr.bf16.mxu0 %v2928
          %4264 = vmatpush1.bf16.msra.mxu0 %v2927
          %4265 = vmatprep.subr.bf16.mxu0 %v2940
          %4266 = vmatpush1.bf16.msra.mxu0 %v2939
          %4267 = vmatprep.subr.bf16.mxu0 %v2952
          %4268 = vmatpush1.bf16.msra.mxu0 %v2951
          %4269 = vmatprep.subr.bf16.mxu0 %v2964
          %4270 = vmatpush1.bf16.msra.mxu0 %v2963
          %4271 = vmatprep.subr.bf16.mxu0 %v2976
          %4272 = vmatpush1.bf16.msra.mxu0 %v2975
          %4273 = vmatprep.subr.bf16.mxu0 %v2988
          %4274 = vmatpush1.bf16.msra.mxu0 %v2987
          %4275 = vmatprep.subr.bf16.mxu0 %v3000
          %4276 = vmatpush1.bf16.msra.mxu0 %v2999
          %4277 = vmatprep.mubr.bf16.mxu0 %v312
          %4278 = vmatmul.mubr.bf16.gmra.mrb[0].mxu0 %v311
          %v4279 = vpop.f32.mrb[0].mxu0
          %v4280 = vadd.f32 %v4239, %v4279
          %v4281 = vpop.f32.mrb[0].mxu0
          %v4282 = vadd.f32 %v4241, %v4281
          %v4283 = vpop.f32.mrb[0].mxu0
          %v4284 = vpop.f32.mrb[0].mxu0
          %4285 = vdwg.mxu0
          %4286 = vmatprep.subr.bf16.mxu0 %v3012
          %4287 = vmatpush1.bf16.msra.mxu0 %v3011
          %4288 = vmatprep.subr.bf16.mxu0 %v3024
          %4289 = vmatpush1.bf16.msra.mxu0 %v3023
          %4290 = vmatprep.subr.bf16.mxu0 %v3036
          %4291 = vmatpush1.bf16.msra.mxu0 %v3035
          %4292 = vmatprep.subr.bf16.mxu0 %v3048
          %4293 = vmatpush1.bf16.msra.mxu0 %v3047
          %4294 = vmatprep.subr.bf16.mxu0 %v3060
          %4295 = vmatpush1.bf16.msra.mxu0 %v3059
          %4296 = vmatprep.subr.bf16.mxu0 %v3072
          %4297 = vmatpush1.bf16.msra.mxu0 %v3071
          %4298 = vmatprep.subr.bf16.mxu0 %v3084
          %4299 = vmatpush1.bf16.msra.mxu0 %v3083
          %4300 = vmatprep.subr.bf16.mxu0 %v3096
          %4301 = vmatpush1.bf16.msra.mxu0 %v3095
          %4302 = vmatprep.subr.bf16.mxu0 %v3108
          %4303 = vmatpush1.bf16.msra.mxu0 %v3107
          %4304 = vmatprep.subr.bf16.mxu0 %v3120
          %4305 = vmatpush1.bf16.msra.mxu0 %v3119
          %4306 = vmatprep.subr.bf16.mxu0 %v3132
          %4307 = vmatpush1.bf16.msra.mxu0 %v3131
          %4308 = vmatprep.subr.bf16.mxu0 %v3144
          %4309 = vmatpush1.bf16.msra.mxu0 %v3143
          %4310 = vmatprep.subr.bf16.mxu0 %v3156
          %4311 = vmatpush1.bf16.msra.mxu0 %v3155
          %4312 = vmatprep.subr.bf16.mxu0 %v3168
          %4313 = vmatpush1.bf16.msra.mxu0 %v3167
          %4314 = vmatprep.subr.bf16.mxu0 %v3180
          %4315 = vmatpush1.bf16.msra.mxu0 %v3179
          %4316 = vmatprep.subr.bf16.mxu0 %v3192
          %4317 = vmatpush1.bf16.msra.mxu0 %v3191
          %4318 = vmatprep.mubr.bf16.mxu0 %v314
          %4319 = vmatmul.mubr.bf16.gmra.mrb[0].mxu0 %v313
          %v4320 = vpop.f32.mrb[0].mxu0
          %v4321 = vadd.f32 %v4280, %v4320
          %v4322 = vpop.f32.mrb[0].mxu0
          %v4323 = vadd.f32 %v4282, %v4322
          %v4324 = vpop.f32.mrb[0].mxu0
          %v4325 = vpop.f32.mrb[0].mxu0
          %4326 = vdwg.mxu0
          %4327 = vmatprep.subr.bf16.mxu0 %v2630
          %4328 = vmatpush1.bf16.msra.mxu0 %v2629
          %4329 = vmatprep.subr.bf16.mxu0 %v2642
          %4330 = vmatpush1.bf16.msra.mxu0 %v2641
          %4331 = vmatprep.subr.bf16.mxu0 %v2654
          %4332 = vmatpush1.bf16.msra.mxu0 %v2653
          %4333 = vmatprep.subr.bf16.mxu0 %v2666
          %4334 = vmatpush1.bf16.msra.mxu0 %v2665
          %4335 = vmatprep.subr.bf16.mxu0 %v2678
          %4336 = vmatpush1.bf16.msra.mxu0 %v2677
          %4337 = vmatprep.subr.bf16.mxu0 %v2690
          %4338 = vmatpush1.bf16.msra.mxu0 %v2689
          %4339 = vmatprep.subr.bf16.mxu0 %v2702
          %4340 = vmatpush1.bf16.msra.mxu0 %v2701
          %4341 = vmatprep.subr.bf16.mxu0 %v2714
          %4342 = vmatpush1.bf16.msra.mxu0 %v2713
          %4343 = vmatprep.subr.bf16.mxu0 %v2726
          %4344 = vmatpush1.bf16.msra.mxu0 %v2725
          %4345 = vmatprep.subr.bf16.mxu0 %v2738
          %4346 = vmatpush1.bf16.msra.mxu0 %v2737
          %4347 = vmatprep.subr.bf16.mxu0 %v2750
          %4348 = vmatpush1.bf16.msra.mxu0 %v2749
          %4349 = vmatprep.subr.bf16.mxu0 %v2762
          %4350 = vmatpush1.bf16.msra.mxu0 %v2761
          %4351 = vmatprep.subr.bf16.mxu0 %v2774
          %4352 = vmatpush1.bf16.msra.mxu0 %v2773
          %4353 = vmatprep.subr.bf16.mxu0 %v2786
          %4354 = vmatpush1.bf16.msra.mxu0 %v2785
          %4355 = vmatprep.subr.bf16.mxu0 %v2798
          %4356 = vmatpush1.bf16.msra.mxu0 %v2797
          %4357 = vmatprep.subr.bf16.mxu0 %v2810
          %4358 = vmatpush1.bf16.msra.mxu0 %v2809
          %4359 = vmatprep.mubr.bf16.mxu0 %v310
          %4360 = vmatmul.mubr.bf16.gmra.mrb[0].mxu0 %v309
          %v4361 = vpop.f32.mrb[0].mxu0
          %v4362 = vadd.f32 %v3810, %v4361
          %v4363 = vpop.f32.mrb[0].mxu0
          %v4364 = vadd.f32 %v3814, %v4363
          %v4365 = vpop.f32.mrb[0].mxu0
          %v4366 = vpop.f32.mrb[0].mxu0
          %4367 = vdwg.mxu0
          %4368 = vmatprep.subr.bf16.mxu0 %v2822
          %4369 = vmatpush1.bf16.msra.mxu0 %v2821
          %4370 = vmatprep.subr.bf16.mxu0 %v2834
          %4371 = vmatpush1.bf16.msra.mxu0 %v2833
          %4372 = vmatprep.subr.bf16.mxu0 %v2846
          %4373 = vmatpush1.bf16.msra.mxu0 %v2845
          %4374 = vmatprep.subr.bf16.mxu0 %v2858
          %4375 = vmatpush1.bf16.msra.mxu0 %v2857
          %4376 = vmatprep.subr.bf16.mxu0 %v2870
          %4377 = vmatpush1.bf16.msra.mxu0 %v2869
          %4378 = vmatprep.subr.bf16.mxu0 %v2882
          %4379 = vmatpush1.bf16.msra.mxu0 %v2881
          %4380 = vmatprep.subr.bf16.mxu0 %v2894
          %4381 = vmatpush1.bf16.msra.mxu0 %v2893
          %4382 = vmatprep.subr.bf16.mxu0 %v2906
          %4383 = vmatpush1.bf16.msra.mxu0 %v2905
          %4384 = vmatprep.subr.bf16.mxu0 %v2918
          %4385 = vmatpush1.bf16.msra.mxu0 %v2917
          %4386 = vmatprep.subr.bf16.mxu0 %v2930
          %4387 = vmatpush1.bf16.msra.mxu0 %v2929
          %4388 = vmatprep.subr.bf16.mxu0 %v2942
          %4389 = vmatpush1.bf16.msra.mxu0 %v2941
          %4390 = vmatprep.subr.bf16.mxu0 %v2954
          %4391 = vmatpush1.bf16.msra.mxu0 %v2953
          %4392 = vmatprep.subr.bf16.mxu0 %v2966
          %4393 = vmatpush1.bf16.msra.mxu0 %v2965
          %4394 = vmatprep.subr.bf16.mxu0 %v2978
          %4395 = vmatpush1.bf16.msra.mxu0 %v2977
          %4396 = vmatprep.subr.bf16.mxu0 %v2990
          %4397 = vmatpush1.bf16.msra.mxu0 %v2989
          %4398 = vmatprep.subr.bf16.mxu0 %v3002
          %4399 = vmatpush1.bf16.msra.mxu0 %v3001
          %4400 = vmatprep.mubr.bf16.mxu0 %v312
          %4401 = vmatmul.mubr.bf16.gmra.mrb[0].mxu0 %v311
          %v4402 = vpop.f32.mrb[0].mxu0
          %v4403 = vadd.f32 %v4362, %v4402
          %v4404 = vpop.f32.mrb[0].mxu0
          %v4405 = vadd.f32 %v4364, %v4404
          %v4406 = vpop.f32.mrb[0].mxu0
          %v4407 = vpop.f32.mrb[0].mxu0
          %4408 = vdwg.mxu0
          %4409 = vmatprep.subr.bf16.mxu0 %v3014
          %4410 = vmatpush1.bf16.msra.mxu0 %v3013
          %4411 = vmatprep.subr.bf16.mxu0 %v3026
          %4412 = vmatpush1.bf16.msra.mxu0 %v3025
          %4413 = vmatprep.subr.bf16.mxu0 %v3038
          %4414 = vmatpush1.bf16.msra.mxu0 %v3037
          %4415 = vmatprep.subr.bf16.mxu0 %v3050
          %4416 = vmatpush1.bf16.msra.mxu0 %v3049
          %4417 = vmatprep.subr.bf16.mxu0 %v3062
          %4418 = vmatpush1.bf16.msra.mxu0 %v3061
          %4419 = vmatprep.subr.bf16.mxu0 %v3074
          %4420 = vmatpush1.bf16.msra.mxu0 %v3073
          %4421 = vmatprep.subr.bf16.mxu0 %v3086
          %4422 = vmatpush1.bf16.msra.mxu0 %v3085
          %4423 = vmatprep.subr.bf16.mxu0 %v3098
          %4424 = vmatpush1.bf16.msra.mxu0 %v3097
          %4425 = vmatprep.subr.bf16.mxu0 %v3110
          %4426 = vmatpush1.bf16.msra.mxu0 %v3109
          %4427 = vmatprep.subr.bf16.mxu0 %v3122
          %4428 = vmatpush1.bf16.msra.mxu0 %v3121
          %4429 = vmatprep.subr.bf16.mxu0 %v3134
          %4430 = vmatpush1.bf16.msra.mxu0 %v3133
          %4431 = vmatprep.subr.bf16.mxu0 %v3146
          %4432 = vmatpush1.bf16.msra.mxu0 %v3145
          %4433 = vmatprep.subr.bf16.mxu0 %v3158
          %4434 = vmatpush1.bf16.msra.mxu0 %v3157
          %4435 = vmatprep.subr.bf16.mxu0 %v3170
          %4436 = vmatpush1.bf16.msra.mxu0 %v3169
          %4437 = vmatprep.subr.bf16.mxu0 %v3182
          %4438 = vmatpush1.bf16.msra.mxu0 %v3181
          %4439 = vmatprep.subr.bf16.mxu0 %v3194
          %4440 = vmatpush1.bf16.msra.mxu0 %v3193
          %4441 = vmatprep.mubr.bf16.mxu0 %v314
          %4442 = vmatmul.mubr.bf16.gmra.mrb[0].mxu0 %v313
          %v4443 = vpop.f32.mrb[0].mxu0
          %v4444 = vadd.f32 %v4403, %v4443
          %v4445 = vpop.f32.mrb[0].mxu0
          %v4446 = vadd.f32 %v4405, %v4445
          %v4447 = vpop.f32.mrb[0].mxu0
          %v4448 = vpop.f32.mrb[0].mxu0
          %4449 = vdwg.mxu0
          %4450 = vmatprep.subr.bf16.mxu0 %v2632
          %4451 = vmatpush1.bf16.msra.mxu0 %v2631
          %4452 = vmatprep.subr.bf16.mxu0 %v2644
          %4453 = vmatpush1.bf16.msra.mxu0 %v2643
          %4454 = vmatprep.subr.bf16.mxu0 %v2656
          %4455 = vmatpush1.bf16.msra.mxu0 %v2655
          %4456 = vmatprep.subr.bf16.mxu0 %v2668
          %4457 = vmatpush1.bf16.msra.mxu0 %v2667
          %4458 = vmatprep.subr.bf16.mxu0 %v2680
          %4459 = vmatpush1.bf16.msra.mxu0 %v2679
          %4460 = vmatprep.subr.bf16.mxu0 %v2692
          %4461 = vmatpush1.bf16.msra.mxu0 %v2691
          %4462 = vmatprep.subr.bf16.mxu0 %v2704
          %4463 = vmatpush1.bf16.msra.mxu0 %v2703
          %4464 = vmatprep.subr.bf16.mxu0 %v2716
          %4465 = vmatpush1.bf16.msra.mxu0 %v2715
          %4466 = vmatprep.subr.bf16.mxu0 %v2728
          %4467 = vmatpush1.bf16.msra.mxu0 %v2727
          %4468 = vmatprep.subr.bf16.mxu0 %v2740
          %4469 = vmatpush1.bf16.msra.mxu0 %v2739
          %4470 = vmatprep.subr.bf16.mxu0 %v2752
          %4471 = vmatpush1.bf16.msra.mxu0 %v2751
          %4472 = vmatprep.subr.bf16.mxu0 %v2764
          %4473 = vmatpush1.bf16.msra.mxu0 %v2763
          %4474 = vmatprep.subr.bf16.mxu0 %v2776
          %4475 = vmatpush1.bf16.msra.mxu0 %v2775
          %4476 = vmatprep.subr.bf16.mxu0 %v2788
          %4477 = vmatpush1.bf16.msra.mxu0 %v2787
          %4478 = vmatprep.subr.bf16.mxu0 %v2800
          %4479 = vmatpush1.bf16.msra.mxu0 %v2799
          %4480 = vmatprep.subr.bf16.mxu0 %v2812
          %4481 = vmatpush1.bf16.msra.mxu0 %v2811
          %4482 = vmatprep.mubr.bf16.mxu0 %v310
          %4483 = vmatmul.mubr.bf16.gmra.mrb[0].mxu0 %v309
          %v4484 = vpop.f32.mrb[0].mxu0
          %v4485 = vadd.f32 %v3818, %v4484
          %v4486 = vpop.f32.mrb[0].mxu0
          %v4487 = vadd.f32 %v3822, %v4486
          %v4488 = vpop.f32.mrb[0].mxu0
          %v4489 = vpop.f32.mrb[0].mxu0
          %4490 = vdwg.mxu0
          %4491 = vmatprep.subr.bf16.mxu0 %v2824
          %4492 = vmatpush1.bf16.msra.mxu0 %v2823
          %4493 = vmatprep.subr.bf16.mxu0 %v2836
          %4494 = vmatpush1.bf16.msra.mxu0 %v2835
          %4495 = vmatprep.subr.bf16.mxu0 %v2848
          %4496 = vmatpush1.bf16.msra.mxu0 %v2847
          %4497 = vmatprep.subr.bf16.mxu0 %v2860
          %4498 = vmatpush1.bf16.msra.mxu0 %v2859
          %4499 = vmatprep.subr.bf16.mxu0 %v2872
          %4500 = vmatpush1.bf16.msra.mxu0 %v2871
          %4501 = vmatprep.subr.bf16.mxu0 %v2884
          %4502 = vmatpush1.bf16.msra.mxu0 %v2883
          %4503 = vmatprep.subr.bf16.mxu0 %v2896
          %4504 = vmatpush1.bf16.msra.mxu0 %v2895
          %4505 = vmatprep.subr.bf16.mxu0 %v2908
          %4506 = vmatpush1.bf16.msra.mxu0 %v2907
          %4507 = vmatprep.subr.bf16.mxu0 %v2920
          %4508 = vmatpush1.bf16.msra.mxu0 %v2919
          %4509 = vmatprep.subr.bf16.mxu0 %v2932
          %4510 = vmatpush1.bf16.msra.mxu0 %v2931
          %4511 = vmatprep.subr.bf16.mxu0 %v2944
          %4512 = vmatpush1.bf16.msra.mxu0 %v2943
          %4513 = vmatprep.subr.bf16.mxu0 %v2956
          %4514 = vmatpush1.bf16.msra.mxu0 %v2955
          %4515 = vmatprep.subr.bf16.mxu0 %v2968
          %4516 = vmatpush1.bf16.msra.mxu0 %v2967
          %4517 = vmatprep.subr.bf16.mxu0 %v2980
          %4518 = vmatpush1.bf16.msra.mxu0 %v2979
          %4519 = vmatprep.subr.bf16.mxu0 %v2992
          %4520 = vmatpush1.bf16.msra.mxu0 %v2991
          %4521 = vmatprep.subr.bf16.mxu0 %v3004
          %4522 = vmatpush1.bf16.msra.mxu0 %v3003
          %4523 = vmatprep.mubr.bf16.mxu0 %v312
          %4524 = vmatmul.mubr.bf16.gmra.mrb[0].mxu0 %v311
          %v4525 = vpop.f32.mrb[0].mxu0
          %v4526 = vadd.f32 %v4485, %v4525
          %v4527 = vpop.f32.mrb[0].mxu0
          %v4528 = vadd.f32 %v4487, %v4527
          %v4529 = vpop.f32.mrb[0].mxu0
          %v4530 = vpop.f32.mrb[0].mxu0
          %4531 = vdwg.mxu0
          %4532 = vmatprep.subr.bf16.mxu0 %v3016
          %4533 = vmatpush1.bf16.msra.mxu0 %v3015
          %4534 = vmatprep.subr.bf16.mxu0 %v3028
          %4535 = vmatpush1.bf16.msra.mxu0 %v3027
          %4536 = vmatprep.subr.bf16.mxu0 %v3040
          %4537 = vmatpush1.bf16.msra.mxu0 %v3039
          %4538 = vmatprep.subr.bf16.mxu0 %v3052
          %4539 = vmatpush1.bf16.msra.mxu0 %v3051
          %4540 = vmatprep.subr.bf16.mxu0 %v3064
          %4541 = vmatpush1.bf16.msra.mxu0 %v3063
          %4542 = vmatprep.subr.bf16.mxu0 %v3076
          %4543 = vmatpush1.bf16.msra.mxu0 %v3075
          %4544 = vmatprep.subr.bf16.mxu0 %v3088
          %4545 = vmatpush1.bf16.msra.mxu0 %v3087
          %4546 = vmatprep.subr.bf16.mxu0 %v3100
          %4547 = vmatpush1.bf16.msra.mxu0 %v3099
          %4548 = vmatprep.subr.bf16.mxu0 %v3112
          %4549 = vmatpush1.bf16.msra.mxu0 %v3111
          %4550 = vmatprep.subr.bf16.mxu0 %v3124
          %4551 = vmatpush1.bf16.msra.mxu0 %v3123
          %4552 = vmatprep.subr.bf16.mxu0 %v3136
          %4553 = vmatpush1.bf16.msra.mxu0 %v3135
          %4554 = vmatprep.subr.bf16.mxu0 %v3148
          %4555 = vmatpush1.bf16.msra.mxu0 %v3147
          %4556 = vmatprep.subr.bf16.mxu0 %v3160
          %4557 = vmatpush1.bf16.msra.mxu0 %v3159
          %4558 = vmatprep.subr.bf16.mxu0 %v3172
          %4559 = vmatpush1.bf16.msra.mxu0 %v3171
          %4560 = vmatprep.subr.bf16.mxu0 %v3184
          %4561 = vmatpush1.bf16.msra.mxu0 %v3183
          %4562 = vmatprep.subr.bf16.mxu0 %v3196
          %4563 = vmatpush1.bf16.msra.mxu0 %v3195
          %4564 = vmatprep.mubr.bf16.mxu0 %v314
          %4565 = vmatmul.mubr.bf16.gmra.mrb[0].mxu0 %v313
          %v4566 = vpop.f32.mrb[0].mxu0
          %v4567 = vadd.f32 %v4526, %v4566
          %v4568 = vpop.f32.mrb[0].mxu0
          %v4569 = vadd.f32 %v4528, %v4568
          %v4570 = vpop.f32.mrb[0].mxu0
          %v4571 = vpop.f32.mrb[0].mxu0
          %4572 = vdwg.mxu0
          %v4573 = vmul.f32 %v3952, 16.0
          %v4574 = vmul.f32 %v3954, 16.0
          %v4575 = vmul.f32 %v4075, 16.0
          %v4576 = vmul.f32 %v4077, 16.0
          %vm4577 = vcmask 1040384
          %v4578 = vsel %vm4577, %v4198, -inf
          %v4579 = vsel %vm4577, %v4200, -inf
          %v4580 = vsel %vm4577, %v4321, -inf
          %v4581 = vsel %vm4577, %v4323, -inf
          %v4582 = vmax.f32 %v4578, %v4579
          %v4583 = vmax.f32 %v4580, %v4581
          %v4584 = vmax.f32 %v4582, %v4583
          %4585 = vmax.xlane.f32.xlu0 %v4584
          %v4586 = vpop.xlane.xlu0 %4585
          %v4587 = vsel %vm4577, %v4198, inf
          %v4588 = vsel %vm4577, %v4200, inf
          %v4589 = vsel %vm4577, %v4321, inf
          %v4590 = vsel %vm4577, %v4323, inf
          %v4591 = vmin.f32 %v4587, %v4588
          %v4592 = vmin.f32 %v4589, %v4590
          %v4593 = vmin.f32 %v4591, %v4592
          %4594 = vmin.xlane.f32.xlu0 %v4593
          %v4595 = vpop.xlane.xlu0 %4594
          %vm4596 = vcmp.ge.f32.partialorder %v4573, 0.0
          %vm4597 = vcmp.ge.f32.partialorder %v4574, 0.0
          %vm4598 = vcmp.ge.f32.partialorder %v4575, 0.0
          %vm4599 = vcmp.ge.f32.partialorder %v4576, 0.0
          %v4600 = vmul.f32 %v4573, %v4586
          %v4601 = vmul.f32 %v4574, %v4586
          %v4602 = vmul.f32 %v4575, %v4586
          %v4603 = vmul.f32 %v4576, %v4586
          %v4604 = vmul.f32 %v4573, %v4595
          %v4605 = vmul.f32 %v4574, %v4595
          %v4606 = vmul.f32 %v4575, %v4595
          %v4607 = vmul.f32 %v4576, %v4595
          %v4608 = vsel %vm4596, %v4600, %v4604
          %v4609 = vsel %vm4597, %v4601, %v4605
          %v4610 = vsel %vm4598, %v4602, %v4606
          %v4611 = vsel %vm4599, %v4603, %v4607
          %v4616 = vcombine.low %v4573, %v4574
          %v4617 = vcombine.low %v4575, %v4576
          %v4619 = vunpack.c.l.s4 1966171168
          %v4620 = vunpack.c.0.s8 %v4619
          %v4621 = vlaneseq
          %v4622 = vshrl.u32 %v4621, 7
          %v4623 = vsub.s32 %v4620, %v4622
          %v4624 = vrot.slane %v4616, %v4623
          %v4626 = vunpack.c.l.s4 1966171168
          %v4627 = vunpack.c.0.s8 %v4626
          %v4628 = vlaneseq
          %v4629 = vshrl.u32 %v4628, 7
          %v4630 = vsub.s32 %v4627, %v4629
          %v4631 = vrot.slane %v4617, %v4630
          %v4632 = vcombine.low %v4624, %v4631
          %v4634 = vunpack.c.l.s4 1966171168
          %v4635 = vunpack.c.0.s8 %v4634
          %v4636 = vlaneseq
          %v4637 = vshrl.u32 %v4636, 7
          %v4638 = vsub.s32 %v4635, %v4637
          %v4639 = vrot.slane %v4632, %v4638
          %v4641 = vlaneseq
          %vm4642 = vcmp.ge.s32.totalorder %v4641, 0
          %vm4643 = vcmp.lt.s32.totalorder %v4641, 512
          %vm4644 = vmand %vm4642, %vm4643
          %4645 = vst.msk [vmem:[#allocation2] ss:$2 sm:$0xf] %vm4644, %v4639
          %v4646 = vsub.f32 0.0, %v4608
          %v4647 = vsub.f32 0.0, %v4609
          %v4648 = vsub.f32 0.0, %v4610
          %v4649 = vsub.f32 0.0, %v4611
          %v4654 = vcombine.low %v4646, %v4647
          %v4655 = vcombine.low %v4648, %v4649
          %v4657 = vunpack.c.l.s4 1966171168
          %v4658 = vunpack.c.0.s8 %v4657
          %v4659 = vlaneseq
          %v4660 = vshrl.u32 %v4659, 7
          %v4661 = vsub.s32 %v4658, %v4660
          %v4662 = vrot.slane %v4654, %v4661
          %v4664 = vunpack.c.l.s4 1966171168
          %v4665 = vunpack.c.0.s8 %v4664
          %v4666 = vlaneseq
          %v4667 = vshrl.u32 %v4666, 7
          %v4668 = vsub.s32 %v4665, %v4667
          %v4669 = vrot.slane %v4655, %v4668
          %v4670 = vcombine.low %v4662, %v4669
          %v4672 = vunpack.c.l.s4 1966171168
          %v4673 = vunpack.c.0.s8 %v4672
          %v4674 = vlaneseq
          %v4675 = vshrl.u32 %v4674, 7
          %v4676 = vsub.s32 %v4673, %v4675
          %v4677 = vrot.slane %v4670, %v4676
          %s4679 = scalar_lea.vmem [#allocation2], 1
          %4680 = vst.msk [vmem:[%s4679] ss:$2 sm:$0xf] %vm4644, %v4677
          %v4685 = vcombine.low %v4198, %v4200
          %v4686 = vcombine.low %v4321, %v4323
          %v4688 = vunpack.c.l.s4 1966171168
          %v4689 = vunpack.c.0.s8 %v4688
          %v4690 = vlaneseq
          %v4691 = vshrl.u32 %v4690, 7
          %v4692 = vsub.s32 %v4689, %v4691
          %v4693 = vrot.slane %v4685, %v4692
          %v4695 = vunpack.c.l.s4 1966171168
          %v4696 = vunpack.c.0.s8 %v4695
          %v4697 = vlaneseq
          %v4698 = vshrl.u32 %v4697, 7
          %v4699 = vsub.s32 %v4696, %v4698
          %v4700 = vrot.slane %v4686, %v4699
          %v4701 = vcombine.low %v4693, %v4700
          %v4703 = vunpack.c.l.s4 1966171168
          %v4704 = vunpack.c.0.s8 %v4703
          %v4705 = vlaneseq
          %v4706 = vshrl.u32 %v4705, 7
          %v4707 = vsub.s32 %v4704, %v4706
          %v4708 = vrot.slane %v4701, %v4707
          %4710 = vst.msk [vmem:[#allocation3] ss:$2 sm:$0xf] %vm4644, %v4708
          %s4711 = scalar_lea.vmem [#allocation3], 1
          %4712 = vst.msk [vmem:[%s4711] ss:$2 sm:$0xf] %vm4644, 1.0
          %v4717 = vcombine.low %v4444, %v4446
          %v4718 = vcombine.low %v4567, %v4569
          %v4720 = vunpack.c.l.s4 1966171168
          %v4721 = vunpack.c.0.s8 %v4720
          %v4722 = vlaneseq
          %v4723 = vshrl.u32 %v4722, 7
          %v4724 = vsub.s32 %v4721, %v4723
          %v4725 = vrot.slane %v4717, %v4724
          %v4727 = vunpack.c.l.s4 1966171168
          %v4728 = vunpack.c.0.s8 %v4727
          %v4729 = vlaneseq
          %v4730 = vshrl.u32 %v4729, 7
          %v4731 = vsub.s32 %v4728, %v4730
          %v4732 = vrot.slane %v4718, %v4731
          %v4733 = vcombine.low %v4725, %v4732
          %v4735 = vunpack.c.l.s4 1966171168
          %v4736 = vunpack.c.0.s8 %v4735
          %v4737 = vlaneseq
          %v4738 = vshrl.u32 %v4737, 7
          %v4739 = vsub.s32 %v4736, %v4738
          %v4740 = vrot.slane %v4733, %v4739
          %4742 = vst.msk [vmem:[#allocation4] ss:$2 sm:$0xf] %vm4644, %v4740
          %s4743 = scalar_lea.vmem [#allocation4], 1
          %4744 = vst.msk [vmem:[%s4743] ss:$2 sm:$0xf] %vm4644, 1.0
          %v4745 = vld [vmem:[%s4] sm:$0x3f]
          %vm4746 = vcmp.lt.s32.totalorder %v4641, 768
          %vm4747 = vmand %vm4642, %vm4746
          %4748 = vst.msk [vmem:[#allocation13] sm:$0x3f] %vm4747, %v4745
        $region60: #{model_forward.1} parent=39 // pred_fallthru
          _
        %s4749 = smul.u32 %s22, 256
        %s4750 = sshra.s32 %s4749, 7
        %s4751 = sand.u32 %s4749, 127
        %s4752 = smul.addr %s4750, 2
        %s4753 = scalar_lea.vmem [#allocation2], %s4752
        %v4754 = vld [vmem:[%s4753] sm:$0xf]
        %v4755 = vld [vmem:[#allocation3] sm:$0x3]
        %v4756 = vld [vmem:[#allocation4] sm:$0x3]
        %v4759 = vunpack.c.l.s4 1983009808
        %v4760 = vunpack.c.0.s8 %v4759
        %v4761 = vlaneseq
        %v4762 = vshrl.u32 %v4761, 7
        %v4763 = vsub.s32 %v4760, %v4762
        %v4764 = vrot.slane %v4754, %v4763
        %v4765 = vcombine.high %v4764, %v4764
        %4768 = vxpose.xlu0.b32.start [1/16] %v4764, 128
        %4769 = vxpose.xlu0.b32.cont [2/16] 0.0, 128
        %4770 = vxpose.xlu0.b32.cont [3/16] 0.0, 128
        %4771 = vxpose.xlu0.b32.cont [4/16] 0.0, 128
        %4772 = vxpose.xlu0.b32.cont [5/16] 0.0, 128
        %4773 = vxpose.xlu0.b32.cont [6/16] 0.0, 128
        %4774 = vxpose.xlu0.b32.cont [7/16] 0.0, 128
        %4775 = vxpose.xlu0.b32.cont [8/16] 0.0, 128
        %4776 = vxpose.xlu0.b32.cont [9/16] 0.0, 128
        %4777 = vxpose.xlu0.b32.cont [10/16] 0.0, 128
        %4778 = vxpose.xlu0.b32.cont [11/16] 0.0, 128
        %4779 = vxpose.xlu0.b32.cont [12/16] 0.0, 128
        %4780 = vxpose.xlu0.b32.cont [13/16] 0.0, 128
        %4781 = vxpose.xlu0.b32.cont [14/16] 0.0, 128
        %4782 = vxpose.xlu0.b32.cont [15/16] 0.0, 128
        %4783 = vxpose.xlu0.b32.end [16/16] 0.0, 128
        %v4784 = vpop.trf.xlu0
        %v4785 = vpop.trf.xlu0
        %v4786 = vpop.trf.xlu0
        %v4787 = vpop.trf.xlu0
        %v4788 = vpop.trf.xlu0
        %v4789 = vpop.trf.xlu0
        %v4790 = vpop.trf.xlu0
        %v4791 = vpop.trf.xlu0
        %v4792 = vpop.trf.xlu0
        %v4793 = vpop.trf.xlu0
        %v4794 = vpop.trf.xlu0
        %v4795 = vpop.trf.xlu0
        %v4796 = vpop.trf.xlu0
        %v4797 = vpop.trf.xlu0
        %v4798 = vpop.trf.xlu0
        %v4799 = vpop.trf.xlu0
        %4800 = vxpose.xlu0.b32.start [1/16] %v4765, 128
        %4801 = vxpose.xlu0.b32.cont [2/16] 0.0, 128
        %4802 = vxpose.xlu0.b32.cont [3/16] 0.0, 128
        %4803 = vxpose.xlu0.b32.cont [4/16] 0.0, 128
        %4804 = vxpose.xlu0.b32.cont [5/16] 0.0, 128
        %4805 = vxpose.xlu0.b32.cont [6/16] 0.0, 128
        %4806 = vxpose.xlu0.b32.cont [7/16] 0.0, 128
        %4807 = vxpose.xlu0.b32.cont [8/16] 0.0, 128
        %4808 = vxpose.xlu0.b32.cont [9/16] 0.0, 128
        %4809 = vxpose.xlu0.b32.cont [10/16] 0.0, 128
        %4810 = vxpose.xlu0.b32.cont [11/16] 0.0, 128
        %4811 = vxpose.xlu0.b32.cont [12/16] 0.0, 128
        %4812 = vxpose.xlu0.b32.cont [13/16] 0.0, 128
        %4813 = vxpose.xlu0.b32.cont [14/16] 0.0, 128
        %4814 = vxpose.xlu0.b32.cont [15/16] 0.0, 128
        %4815 = vxpose.xlu0.b32.end [16/16] 0.0, 128
        %v4816 = vpop.trf.xlu0
        %v4817 = vpop.trf.xlu0
        %v4818 = vpop.trf.xlu0
        %v4819 = vpop.trf.xlu0
        %v4820 = vpop.trf.xlu0
        %v4821 = vpop.trf.xlu0
        %v4822 = vpop.trf.xlu0
        %v4823 = vpop.trf.xlu0
        %v4824 = vpop.trf.xlu0
        %v4825 = vpop.trf.xlu0
        %v4826 = vpop.trf.xlu0
        %v4827 = vpop.trf.xlu0
        %v4828 = vpop.trf.xlu0
        %v4829 = vpop.trf.xlu0
        %v4830 = vpop.trf.xlu0
        %v4831 = vpop.trf.xlu0
        %vm4832 = vcmask 15360
        %v4834 = vsel %vm4832, %v4784, 0
        %v4837 = vsel %vm4832, %v4785, 0
        %v4840 = vsel %vm4832, %v4786, 0
        %v4843 = vsel %vm4832, %v4787, 0
        %v4846 = vsel %vm4832, %v4788, 0
        %v4849 = vsel %vm4832, %v4789, 0
        %v4852 = vsel %vm4832, %v4790, 0
        %v4855 = vsel %vm4832, %v4791, 0
        %v4858 = vsel %vm4832, %v4792, 0
        %v4861 = vsel %vm4832, %v4793, 0
        %v4864 = vsel %vm4832, %v4794, 0
        %v4867 = vsel %vm4832, %v4795, 0
        %v4870 = vsel %vm4832, %v4796, 0
        %v4873 = vsel %vm4832, %v4797, 0
        %v4876 = vsel %vm4832, %v4798, 0
        %v4879 = vsel %vm4832, %v4799, 0
        %v4882 = vsel %vm4832, %v4816, 0
        %v4885 = vsel %vm4832, %v4817, 0
        %v4888 = vsel %vm4832, %v4818, 0
        %v4891 = vsel %vm4832, %v4819, 0
        %v4894 = vsel %vm4832, %v4820, 0
        %v4897 = vsel %vm4832, %v4821, 0
        %v4900 = vsel %vm4832, %v4822, 0
        %v4903 = vsel %vm4832, %v4823, 0
        %v4906 = vsel %vm4832, %v4824, 0
        %v4909 = vsel %vm4832, %v4825, 0
        %v4912 = vsel %vm4832, %v4826, 0
        %v4915 = vsel %vm4832, %v4827, 0
        %v4918 = vsel %vm4832, %v4828, 0
        %v4921 = vsel %vm4832, %v4829, 0
        %v4924 = vsel %vm4832, %v4830, 0
        %v4927 = vsel %vm4832, %v4831, 0
        %vm4929 = vcmask 1041408
        %v4931 = vsel %vm4929, %v4755, 0
        %4933 = vmatprep.subr.mxu0 0.0
        %4934 = vmatpush1.msra.mxu0 %v4931
        %4935 = vmatprep.subr.mxu0 0.0
        %4936 = vmatpush1.msra.mxu0 0.0
        %4937 = vmatprep.subr.mxu0 0.0
        %4938 = vmatpush1.msra.mxu0 0.0
        %4939 = vmatprep.subr.mxu0 0.0
        %4940 = vmatpush1.msra.mxu0 0.0
        %4941 = vmatprep.subr.mxu0 0.0
        %4942 = vmatpush1.msra.mxu0 0.0
        %4943 = vmatprep.subr.mxu0 0.0
        %4944 = vmatpush1.msra.mxu0 0.0
        %4945 = vmatprep.subr.mxu0 0.0
        %4946 = vmatpush1.msra.mxu0 0.0
        %4947 = vmatprep.subr.mxu0 0.0
        %4948 = vmatpush1.msra.mxu0 0.0
        %4949 = vmatprep.subr.mxu0 0.0
        %4950 = vmatpush1.msra.mxu0 0.0
        %4951 = vmatprep.subr.mxu0 0.0
        %4952 = vmatpush1.msra.mxu0 0.0
        %4953 = vmatprep.subr.mxu0 0.0
        %4954 = vmatpush1.msra.mxu0 0.0
        %4955 = vmatprep.subr.mxu0 0.0
        %4956 = vmatpush1.msra.mxu0 0.0
        %4957 = vmatprep.subr.mxu0 0.0
        %4958 = vmatpush1.msra.mxu0 0.0
        %4959 = vmatprep.subr.mxu0 0.0
        %4960 = vmatpush1.msra.mxu0 0.0
        %4961 = vmatprep.subr.mxu0 0.0
        %4962 = vmatpush1.msra.mxu0 0.0
        %4963 = vmatprep.subr.mxu0 0.0
        %4964 = vmatpush1.msra.mxu0 0.0
        %4965 = vmatprep.subr.mxu0 0.0
        %4966 = vmatpush1.msra.mxu0 0.0
        %4967 = vmatprep.subr.mxu0 0.0
        %4968 = vmatpush1.msra.mxu0 0.0
        %4969 = vmatprep.subr.mxu0 0.0
        %4970 = vmatpush1.msra.mxu0 0.0
        %4971 = vmatprep.subr.mxu0 0.0
        %4972 = vmatpush1.msra.mxu0 0.0
        %4973 = vmatprep.subr.mxu0 0.0
        %4974 = vmatpush1.msra.mxu0 0.0
        %4975 = vmatprep.subr.mxu0 0.0
        %4976 = vmatpush1.msra.mxu0 0.0
        %4977 = vmatprep.subr.mxu0 0.0
        %4978 = vmatpush1.msra.mxu0 0.0
        %4979 = vmatprep.subr.mxu0 0.0
        %4980 = vmatpush1.msra.mxu0 0.0
        %4981 = vmatprep.subr.mxu0 0.0
        %4982 = vmatpush1.msra.mxu0 0.0
        %4983 = vmatprep.subr.mxu0 0.0
        %4984 = vmatpush1.msra.mxu0 0.0
        %4985 = vmatprep.subr.mxu0 0.0
        %4986 = vmatpush1.msra.mxu0 0.0
        %4987 = vmatprep.subr.mxu0 0.0
        %4988 = vmatpush1.msra.mxu0 0.0
        %4989 = vmatprep.subr.mxu0 0.0
        %4990 = vmatpush1.msra.mxu0 0.0
        %4991 = vmatprep.subr.mxu0 0.0
        %4992 = vmatpush1.msra.mxu0 0.0
        %4993 = vmatprep.subr.mxu0 0.0
        %4994 = vmatpush1.msra.mxu0 0.0
        %4995 = vmatprep.subr.mxu0 0.0
        %4996 = vmatpush1.msra.mxu0 0.0
        %4997 = vmatprep.mubr.f32.mxu0 0.0
        %4998 = vmatmul.mubr.f32.gmra.mrb[0].mxu0 %v4834
        %v4999 = vpop.f32.mrb[0].mxu0
        %v5000 = vadd.f32 0.0, %v4999
        %v5001 = vpop.f32.mrb[0].mxu0
        %5002 = vmatprep.mubr.f32.mxu0 0.0
        %5003 = vmatmul.mubr.f32.gmra.mrb[0].mxu0 %v4837
        %v5004 = vpop.f32.mrb[0].mxu0
        %v5005 = vadd.f32 0.0, %v5004
        %v5006 = vpop.f32.mrb[0].mxu0
        %5007 = vmatprep.mubr.f32.mxu0 0.0
        %5008 = vmatmul.mubr.f32.gmra.mrb[0].mxu0 %v4840
        %v5009 = vpop.f32.mrb[0].mxu0
        %v5010 = vadd.f32 0.0, %v5009
        %v5011 = vpop.f32.mrb[0].mxu0
        %5012 = vmatprep.mubr.f32.mxu0 0.0
        %5013 = vmatmul.mubr.f32.gmra.mrb[0].mxu0 %v4843
        %v5014 = vpop.f32.mrb[0].mxu0
        %v5015 = vadd.f32 0.0, %v5014
        %v5016 = vpop.f32.mrb[0].mxu0
        %5017 = vmatprep.mubr.f32.mxu0 0.0
        %5018 = vmatmul.mubr.f32.gmra.mrb[0].mxu0 %v4846
        %v5019 = vpop.f32.mrb[0].mxu0
        %v5020 = vadd.f32 0.0, %v5019
        %v5021 = vpop.f32.mrb[0].mxu0
        %5022 = vmatprep.mubr.f32.mxu0 0.0
        %5023 = vmatmul.mubr.f32.gmra.mrb[0].mxu0 %v4849
        %v5024 = vpop.f32.mrb[0].mxu0
        %v5025 = vadd.f32 0.0, %v5024
        %v5026 = vpop.f32.mrb[0].mxu0
        %5027 = vmatprep.mubr.f32.mxu0 0.0
        %5028 = vmatmul.mubr.f32.gmra.mrb[0].mxu0 %v4852
        %v5029 = vpop.f32.mrb[0].mxu0
        %v5030 = vadd.f32 0.0, %v5029
        %v5031 = vpop.f32.mrb[0].mxu0
        %5032 = vmatprep.mubr.f32.mxu0 0.0
        %5033 = vmatmul.mubr.f32.gmra.mrb[0].mxu0 %v4855
        %v5034 = vpop.f32.mrb[0].mxu0
        %v5035 = vadd.f32 0.0, %v5034
        %v5036 = vpop.f32.mrb[0].mxu0
        %5037 = vmatprep.mubr.f32.mxu0 0.0
        %5038 = vmatmul.mubr.f32.gmra.mrb[0].mxu0 %v4858
        %v5039 = vpop.f32.mrb[0].mxu0
        %v5040 = vadd.f32 0.0, %v5039
        %v5041 = vpop.f32.mrb[0].mxu0
        %5042 = vmatprep.mubr.f32.mxu0 0.0
        %5043 = vmatmul.mubr.f32.gmra.mrb[0].mxu0 %v4861
        %v5044 = vpop.f32.mrb[0].mxu0
        %v5045 = vadd.f32 0.0, %v5044
        %v5046 = vpop.f32.mrb[0].mxu0
        %5047 = vmatprep.mubr.f32.mxu0 0.0
        %5048 = vmatmul.mubr.f32.gmra.mrb[0].mxu0 %v4864
        %v5049 = vpop.f32.mrb[0].mxu0
        %v5050 = vadd.f32 0.0, %v5049
        %v5051 = vpop.f32.mrb[0].mxu0
        %5052 = vmatprep.mubr.f32.mxu0 0.0
        %5053 = vmatmul.mubr.f32.gmra.mrb[0].mxu0 %v4867
        %v5054 = vpop.f32.mrb[0].mxu0
        %v5055 = vadd.f32 0.0, %v5054
        %v5056 = vpop.f32.mrb[0].mxu0
        %5057 = vmatprep.mubr.f32.mxu0 0.0
        %5058 = vmatmul.mubr.f32.gmra.mrb[0].mxu0 %v4870
        %v5059 = vpop.f32.mrb[0].mxu0
        %v5060 = vadd.f32 0.0, %v5059
        %v5061 = vpop.f32.mrb[0].mxu0
        %5062 = vmatprep.mubr.f32.mxu0 0.0
        %5063 = vmatmul.mubr.f32.gmra.mrb[0].mxu0 %v4873
        %v5064 = vpop.f32.mrb[0].mxu0
        %v5065 = vadd.f32 0.0, %v5064
        %v5066 = vpop.f32.mrb[0].mxu0
        %5067 = vmatprep.mubr.f32.mxu0 0.0
        %5068 = vmatmul.mubr.f32.gmra.mrb[0].mxu0 %v4876
        %v5069 = vpop.f32.mrb[0].mxu0
        %v5070 = vadd.f32 0.0, %v5069
        %v5071 = vpop.f32.mrb[0].mxu0
        %5072 = vmatprep.mubr.f32.mxu0 0.0
        %5073 = vmatmul.mubr.f32.gmra.mrb[0].mxu0 %v4879
        %v5074 = vpop.f32.mrb[0].mxu0
        %v5075 = vadd.f32 0.0, %v5074
        %v5076 = vpop.f32.mrb[0].mxu0
        %5077 = vmatprep.mubr.f32.mxu0 0.0
        %5078 = vmatmul.mubr.f32.gmra.mrb[0].mxu0 %v4882
        %v5079 = vpop.f32.mrb[0].mxu0
        %v5080 = vadd.f32 0.0, %v5079
        %v5081 = vpop.f32.mrb[0].mxu0
        %5082 = vmatprep.mubr.f32.mxu0 0.0
        %5083 = vmatmul.mubr.f32.gmra.mrb[0].mxu0 %v4885
        %v5084 = vpop.f32.mrb[0].mxu0
        %v5085 = vadd.f32 0.0, %v5084
        %v5086 = vpop.f32.mrb[0].mxu0
        %5087 = vmatprep.mubr.f32.mxu0 0.0
        %5088 = vmatmul.mubr.f32.gmra.mrb[0].mxu0 %v4888
        %v5089 = vpop.f32.mrb[0].mxu0
        %v5090 = vadd.f32 0.0, %v5089
        %v5091 = vpop.f32.mrb[0].mxu0
        %5092 = vmatprep.mubr.f32.mxu0 0.0
        %5093 = vmatmul.mubr.f32.gmra.mrb[0].mxu0 %v4891
        %v5094 = vpop.f32.mrb[0].mxu0
        %v5095 = vadd.f32 0.0, %v5094
        %v5096 = vpop.f32.mrb[0].mxu0
        %5097 = vmatprep.mubr.f32.mxu0 0.0
        %5098 = vmatmul.mubr.f32.gmra.mrb[0].mxu0 %v4894
        %v5099 = vpop.f32.mrb[0].mxu0
        %v5100 = vadd.f32 0.0, %v5099
        %v5101 = vpop.f32.mrb[0].mxu0
        %5102 = vmatprep.mubr.f32.mxu0 0.0
        %5103 = vmatmul.mubr.f32.gmra.mrb[0].mxu0 %v4897
        %v5104 = vpop.f32.mrb[0].mxu0
        %v5105 = vadd.f32 0.0, %v5104
        %v5106 = vpop.f32.mrb[0].mxu0
        %5107 = vmatprep.mubr.f32.mxu0 0.0
        %5108 = vmatmul.mubr.f32.gmra.mrb[0].mxu0 %v4900
        %v5109 = vpop.f32.mrb[0].mxu0
        %v5110 = vadd.f32 0.0, %v5109
        %v5111 = vpop.f32.mrb[0].mxu0
        %5112 = vmatprep.mubr.f32.mxu0 0.0
        %5113 = vmatmul.mubr.f32.gmra.mrb[0].mxu0 %v4903
        %v5114 = vpop.f32.mrb[0].mxu0
        %v5115 = vadd.f32 0.0, %v5114
        %v5116 = vpop.f32.mrb[0].mxu0
        %5117 = vmatprep.mubr.f32.mxu0 0.0
        %5118 = vmatmul.mubr.f32.gmra.mrb[0].mxu0 %v4906
        %v5119 = vpop.f32.mrb[0].mxu0
        %v5120 = vadd.f32 0.0, %v5119
        %v5121 = vpop.f32.mrb[0].mxu0
        %5122 = vmatprep.mubr.f32.mxu0 0.0
        %5123 = vmatmul.mubr.f32.gmra.mrb[0].mxu0 %v4909
        %v5124 = vpop.f32.mrb[0].mxu0
        %v5125 = vadd.f32 0.0, %v5124
        %v5126 = vpop.f32.mrb[0].mxu0
        %5127 = vmatprep.mubr.f32.mxu0 0.0
        %5128 = vmatmul.mubr.f32.gmra.mrb[0].mxu0 %v4912
        %v5129 = vpop.f32.mrb[0].mxu0
        %v5130 = vadd.f32 0.0, %v5129
        %v5131 = vpop.f32.mrb[0].mxu0
        %5132 = vmatprep.mubr.f32.mxu0 0.0
        %5133 = vmatmul.mubr.f32.gmra.mrb[0].mxu0 %v4915
        %v5134 = vpop.f32.mrb[0].mxu0
        %v5135 = vadd.f32 0.0, %v5134
        %v5136 = vpop.f32.mrb[0].mxu0
        %5137 = vmatprep.mubr.f32.mxu0 0.0
        %5138 = vmatmul.mubr.f32.gmra.mrb[0].mxu0 %v4918
        %v5139 = vpop.f32.mrb[0].mxu0
        %v5140 = vadd.f32 0.0, %v5139
        %v5141 = vpop.f32.mrb[0].mxu0
        %5142 = vmatprep.mubr.f32.mxu0 0.0
        %5143 = vmatmul.mubr.f32.gmra.mrb[0].mxu0 %v4921
        %v5144 = vpop.f32.mrb[0].mxu0
        %v5145 = vadd.f32 0.0, %v5144
        %v5146 = vpop.f32.mrb[0].mxu0
        %5147 = vmatprep.mubr.f32.mxu0 0.0
        %5148 = vmatmul.mubr.f32.gmra.mrb[0].mxu0 %v4924
        %v5149 = vpop.f32.mrb[0].mxu0
        %v5150 = vadd.f32 0.0, %v5149
        %v5151 = vpop.f32.mrb[0].mxu0
        %5152 = vmatprep.mubr.f32.mxu0 0.0
        %5153 = vmatmul.mubr.f32.gmra.mrb[0].mxu0 %v4927
        %v5154 = vpop.f32.mrb[0].mxu0
        %v5155 = vadd.f32 0.0, %v5154
        %v5156 = vpop.f32.mrb[0].mxu0
        %5157 = vdwg.mxu0
        %v5158 = vmul.f32 %v5000, 1.442695
        %v5159 = vpow.pop %v5158
        %v5160 = vmul.f32 %v5005, 1.442695
        %v5161 = vpow.pop %v5160
        %v5162 = vmul.f32 %v5010, 1.442695
        %v5163 = vpow.pop %v5162
        %v5164 = vmul.f32 %v5015, 1.442695
        %v5165 = vpow.pop %v5164
        %v5166 = vmul.f32 %v5020, 1.442695
        %v5167 = vpow.pop %v5166
        %v5168 = vmul.f32 %v5025, 1.442695
        %v5169 = vpow.pop %v5168
        %v5170 = vmul.f32 %v5030, 1.442695
        %v5171 = vpow.pop %v5170
        %v5172 = vmul.f32 %v5035, 1.442695
        %v5173 = vpow.pop %v5172
        %v5174 = vmul.f32 %v5040, 1.442695
        %v5175 = vpow.pop %v5174
        %v5176 = vmul.f32 %v5045, 1.442695
        %v5177 = vpow.pop %v5176
        %v5178 = vmul.f32 %v5050, 1.442695
        %v5179 = vpow.pop %v5178
        %v5180 = vmul.f32 %v5055, 1.442695
        %v5181 = vpow.pop %v5180
        %v5182 = vmul.f32 %v5060, 1.442695
        %v5183 = vpow.pop %v5182
        %v5184 = vmul.f32 %v5065, 1.442695
        %v5185 = vpow.pop %v5184
        %v5186 = vmul.f32 %v5070, 1.442695
        %v5187 = vpow.pop %v5186
        %v5188 = vmul.f32 %v5075, 1.442695
        %v5189 = vpow.pop %v5188
        %v5190 = vmul.f32 %v5080, 1.442695
        %v5191 = vpow.pop %v5190
        %v5192 = vmul.f32 %v5085, 1.442695
        %v5193 = vpow.pop %v5192
        %v5194 = vmul.f32 %v5090, 1.442695
        %v5195 = vpow.pop %v5194
        %v5196 = vmul.f32 %v5095, 1.442695
        %v5197 = vpow.pop %v5196
        %v5198 = vmul.f32 %v5100, 1.442695
        %v5199 = vpow.pop %v5198
        %v5200 = vmul.f32 %v5105, 1.442695
        %v5201 = vpow.pop %v5200
        %v5202 = vmul.f32 %v5110, 1.442695
        %v5203 = vpow.pop %v5202
        %v5204 = vmul.f32 %v5115, 1.442695
        %v5205 = vpow.pop %v5204
        %v5206 = vmul.f32 %v5120, 1.442695
        %v5207 = vpow.pop %v5206
        %v5208 = vmul.f32 %v5125, 1.442695
        %v5209 = vpow.pop %v5208
        %v5210 = vmul.f32 %v5130, 1.442695
        %v5211 = vpow.pop %v5210
        %v5212 = vmul.f32 %v5135, 1.442695
        %v5213 = vpow.pop %v5212
        %v5214 = vmul.f32 %v5140, 1.442695
        %v5215 = vpow.pop %v5214
        %v5216 = vmul.f32 %v5145, 1.442695
        %v5217 = vpow.pop %v5216
        %v5218 = vmul.f32 %v5150, 1.442695
        %v5219 = vpow.pop %v5218
        %v5220 = vmul.f32 %v5155, 1.442695
        %v5221 = vpow.pop %v5220
        %v5222 = vld [vmem:[#allocation3 + $0x2] sm:$0x3]
        %v5223 = vld [vmem:[#allocation4 + $0x2] sm:$0x3]
        %v5225 = vsel %vm4929, %v5222, 0
        %5227 = vmatprep.subr.mxu0 0.0
        %5228 = vmatpush1.msra.mxu0 %v5225
        %5229 = vmatprep.subr.mxu0 0.0
        %5230 = vmatpush1.msra.mxu0 0.0
        %5231 = vmatprep.subr.mxu0 0.0
        %5232 = vmatpush1.msra.mxu0 0.0
        %5233 = vmatprep.subr.mxu0 0.0
        %5234 = vmatpush1.msra.mxu0 0.0
        %5235 = vmatprep.subr.mxu0 0.0
        %5236 = vmatpush1.msra.mxu0 0.0
        %5237 = vmatprep.subr.mxu0 0.0
        %5238 = vmatpush1.msra.mxu0 0.0
        %5239 = vmatprep.subr.mxu0 0.0
        %5240 = vmatpush1.msra.mxu0 0.0
        %5241 = vmatprep.subr.mxu0 0.0
        %5242 = vmatpush1.msra.mxu0 0.0
        %5243 = vmatprep.subr.mxu0 0.0
        %5244 = vmatpush1.msra.mxu0 0.0
        %5245 = vmatprep.subr.mxu0 0.0
        %5246 = vmatpush1.msra.mxu0 0.0
        %5247 = vmatprep.subr.mxu0 0.0
        %5248 = vmatpush1.msra.mxu0 0.0
        %5249 = vmatprep.subr.mxu0 0.0
        %5250 = vmatpush1.msra.mxu0 0.0
        %5251 = vmatprep.subr.mxu0 0.0
        %5252 = vmatpush1.msra.mxu0 0.0
        %5253 = vmatprep.subr.mxu0 0.0
        %5254 = vmatpush1.msra.mxu0 0.0
        %5255 = vmatprep.subr.mxu0 0.0
        %5256 = vmatpush1.msra.mxu0 0.0
        %5257 = vmatprep.subr.mxu0 0.0
        %5258 = vmatpush1.msra.mxu0 0.0
        %5259 = vmatprep.subr.mxu0 0.0
        %5260 = vmatpush1.msra.mxu0 0.0
        %5261 = vmatprep.subr.mxu0 0.0
        %5262 = vmatpush1.msra.mxu0 0.0
        %5263 = vmatprep.subr.mxu0 0.0
        %5264 = vmatpush1.msra.mxu0 0.0
        %5265 = vmatprep.subr.mxu0 0.0
        %5266 = vmatpush1.msra.mxu0 0.0
        %5267 = vmatprep.subr.mxu0 0.0
        %5268 = vmatpush1.msra.mxu0 0.0
        %5269 = vmatprep.subr.mxu0 0.0
        %5270 = vmatpush1.msra.mxu0 0.0
        %5271 = vmatprep.subr.mxu0 0.0
        %5272 = vmatpush1.msra.mxu0 0.0
        %5273 = vmatprep.subr.mxu0 0.0
        %5274 = vmatpush1.msra.mxu0 0.0
        %5275 = vmatprep.subr.mxu0 0.0
        %5276 = vmatpush1.msra.mxu0 0.0
        %5277 = vmatprep.subr.mxu0 0.0
        %5278 = vmatpush1.msra.mxu0 0.0
        %5279 = vmatprep.subr.mxu0 0.0
        %5280 = vmatpush1.msra.mxu0 0.0
        %5281 = vmatprep.subr.mxu0 0.0
        %5282 = vmatpush1.msra.mxu0 0.0
        %5283 = vmatprep.subr.mxu0 0.0
        %5284 = vmatpush1.msra.mxu0 0.0
        %5285 = vmatprep.subr.mxu0 0.0
        %5286 = vmatpush1.msra.mxu0 0.0
        %5287 = vmatprep.subr.mxu0 0.0
        %5288 = vmatpush1.msra.mxu0 0.0
        %5289 = vmatprep.subr.mxu0 0.0
        %5290 = vmatpush1.msra.mxu0 0.0
        %5291 = vmatprep.mubr.f32.mxu0 0.0
        %5292 = vmatmul.mubr.f32.gmra.mrb[0].mxu0 %v4834
        %v5293 = vpop.f32.mrb[0].mxu0
        %v5294 = vadd.f32 0.0, %v5293
        %v5295 = vpop.f32.mrb[0].mxu0
        %5296 = vmatprep.mubr.f32.mxu0 0.0
        %5297 = vmatmul.mubr.f32.gmra.mrb[0].mxu0 %v4837
        %v5298 = vpop.f32.mrb[0].mxu0
        %v5299 = vadd.f32 0.0, %v5298
        %v5300 = vpop.f32.mrb[0].mxu0
        %5301 = vmatprep.mubr.f32.mxu0 0.0
        %5302 = vmatmul.mubr.f32.gmra.mrb[0].mxu0 %v4840
        %v5303 = vpop.f32.mrb[0].mxu0
        %v5304 = vadd.f32 0.0, %v5303
        %v5305 = vpop.f32.mrb[0].mxu0
        %5306 = vmatprep.mubr.f32.mxu0 0.0
        %5307 = vmatmul.mubr.f32.gmra.mrb[0].mxu0 %v4843
        %v5308 = vpop.f32.mrb[0].mxu0
        %v5309 = vadd.f32 0.0, %v5308
        %v5310 = vpop.f32.mrb[0].mxu0
        %5311 = vmatprep.mubr.f32.mxu0 0.0
        %5312 = vmatmul.mubr.f32.gmra.mrb[0].mxu0 %v4846
        %v5313 = vpop.f32.mrb[0].mxu0
        %v5314 = vadd.f32 0.0, %v5313
        %v5315 = vpop.f32.mrb[0].mxu0
        %5316 = vmatprep.mubr.f32.mxu0 0.0
        %5317 = vmatmul.mubr.f32.gmra.mrb[0].mxu0 %v4849
        %v5318 = vpop.f32.mrb[0].mxu0
        %v5319 = vadd.f32 0.0, %v5318
        %v5320 = vpop.f32.mrb[0].mxu0
        %5321 = vmatprep.mubr.f32.mxu0 0.0
        %5322 = vmatmul.mubr.f32.gmra.mrb[0].mxu0 %v4852
        %v5323 = vpop.f32.mrb[0].mxu0
        %v5324 = vadd.f32 0.0, %v5323
        %v5325 = vpop.f32.mrb[0].mxu0
        %5326 = vmatprep.mubr.f32.mxu0 0.0
        %5327 = vmatmul.mubr.f32.gmra.mrb[0].mxu0 %v4855
        %v5328 = vpop.f32.mrb[0].mxu0
        %v5329 = vadd.f32 0.0, %v5328
        %v5330 = vpop.f32.mrb[0].mxu0
        %5331 = vmatprep.mubr.f32.mxu0 0.0
        %5332 = vmatmul.mubr.f32.gmra.mrb[0].mxu0 %v4858
        %v5333 = vpop.f32.mrb[0].mxu0
        %v5334 = vadd.f32 0.0, %v5333
        %v5335 = vpop.f32.mrb[0].mxu0
        %5336 = vmatprep.mubr.f32.mxu0 0.0
        %5337 = vmatmul.mubr.f32.gmra.mrb[0].mxu0 %v4861
        %v5338 = vpop.f32.mrb[0].mxu0
        %v5339 = vadd.f32 0.0, %v5338
        %v5340 = vpop.f32.mrb[0].mxu0
        %5341 = vmatprep.mubr.f32.mxu0 0.0
        %5342 = vmatmul.mubr.f32.gmra.mrb[0].mxu0 %v4864
        %v5343 = vpop.f32.mrb[0].mxu0
        %v5344 = vadd.f32 0.0, %v5343
        %v5345 = vpop.f32.mrb[0].mxu0
        %5346 = vmatprep.mubr.f32.mxu0 0.0
        %5347 = vmatmul.mubr.f32.gmra.mrb[0].mxu0 %v4867
        %v5348 = vpop.f32.mrb[0].mxu0
        %v5349 = vadd.f32 0.0, %v5348
        %v5350 = vpop.f32.mrb[0].mxu0
        %5351 = vmatprep.mubr.f32.mxu0 0.0
        %5352 = vmatmul.mubr.f32.gmra.mrb[0].mxu0 %v4870
        %v5353 = vpop.f32.mrb[0].mxu0
        %v5354 = vadd.f32 0.0, %v5353
        %v5355 = vpop.f32.mrb[0].mxu0
        %5356 = vmatprep.mubr.f32.mxu0 0.0
        %5357 = vmatmul.mubr.f32.gmra.mrb[0].mxu0 %v4873
        %v5358 = vpop.f32.mrb[0].mxu0
        %v5359 = vadd.f32 0.0, %v5358
        %v5360 = vpop.f32.mrb[0].mxu0
        %5361 = vmatprep.mubr.f32.mxu0 0.0
        %5362 = vmatmul.mubr.f32.gmra.mrb[0].mxu0 %v4876
        %v5363 = vpop.f32.mrb[0].mxu0
        %v5364 = vadd.f32 0.0, %v5363
        %v5365 = vpop.f32.mrb[0].mxu0
        %5366 = vmatprep.mubr.f32.mxu0 0.0
        %5367 = vmatmul.mubr.f32.gmra.mrb[0].mxu0 %v4879
        %v5368 = vpop.f32.mrb[0].mxu0
        %v5369 = vadd.f32 0.0, %v5368
        %v5370 = vpop.f32.mrb[0].mxu0
        %5371 = vmatprep.mubr.f32.mxu0 0.0
        %5372 = vmatmul.mubr.f32.gmra.mrb[0].mxu0 %v4882
        %v5373 = vpop.f32.mrb[0].mxu0
        %v5374 = vadd.f32 0.0, %v5373
        %v5375 = vpop.f32.mrb[0].mxu0
        %5376 = vmatprep.mubr.f32.mxu0 0.0
        %5377 = vmatmul.mubr.f32.gmra.mrb[0].mxu0 %v4885
        %v5378 = vpop.f32.mrb[0].mxu0
        %v5379 = vadd.f32 0.0, %v5378
        %v5380 = vpop.f32.mrb[0].mxu0
        %5381 = vmatprep.mubr.f32.mxu0 0.0
        %5382 = vmatmul.mubr.f32.gmra.mrb[0].mxu0 %v4888
        %v5383 = vpop.f32.mrb[0].mxu0
        %v5384 = vadd.f32 0.0, %v5383
        %v5385 = vpop.f32.mrb[0].mxu0
        %5386 = vmatprep.mubr.f32.mxu0 0.0
        %5387 = vmatmul.mubr.f32.gmra.mrb[0].mxu0 %v4891
        %v5388 = vpop.f32.mrb[0].mxu0
        %v5389 = vadd.f32 0.0, %v5388
        %v5390 = vpop.f32.mrb[0].mxu0
        %5391 = vmatprep.mubr.f32.mxu0 0.0
        %5392 = vmatmul.mubr.f32.gmra.mrb[0].mxu0 %v4894
        %v5393 = vpop.f32.mrb[0].mxu0
        %v5394 = vadd.f32 0.0, %v5393
        %v5395 = vpop.f32.mrb[0].mxu0
        %5396 = vmatprep.mubr.f32.mxu0 0.0
        %5397 = vmatmul.mubr.f32.gmra.mrb[0].mxu0 %v4897
        %v5398 = vpop.f32.mrb[0].mxu0
        %v5399 = vadd.f32 0.0, %v5398
        %v5400 = vpop.f32.mrb[0].mxu0
        %5401 = vmatprep.mubr.f32.mxu0 0.0
        %5402 = vmatmul.mubr.f32.gmra.mrb[0].mxu0 %v4900
        %v5403 = vpop.f32.mrb[0].mxu0
        %v5404 = vadd.f32 0.0, %v5403
        %v5405 = vpop.f32.mrb[0].mxu0
        %5406 = vmatprep.mubr.f32.mxu0 0.0
        %5407 = vmatmul.mubr.f32.gmra.mrb[0].mxu0 %v4903
        %v5408 = vpop.f32.mrb[0].mxu0
        %v5409 = vadd.f32 0.0, %v5408
        %v5410 = vpop.f32.mrb[0].mxu0
        %5411 = vmatprep.mubr.f32.mxu0 0.0
        %5412 = vmatmul.mubr.f32.gmra.mrb[0].mxu0 %v4906
        %v5413 = vpop.f32.mrb[0].mxu0
        %v5414 = vadd.f32 0.0, %v5413
        %v5415 = vpop.f32.mrb[0].mxu0
        %5416 = vmatprep.mubr.f32.mxu0 0.0
        %5417 = vmatmul.mubr.f32.gmra.mrb[0].mxu0 %v4909
        %v5418 = vpop.f32.mrb[0].mxu0
        %v5419 = vadd.f32 0.0, %v5418
        %v5420 = vpop.f32.mrb[0].mxu0
        %5421 = vmatprep.mubr.f32.mxu0 0.0
        %5422 = vmatmul.mubr.f32.gmra.mrb[0].mxu0 %v4912
        %v5423 = vpop.f32.mrb[0].mxu0
        %v5424 = vadd.f32 0.0, %v5423
        %v5425 = vpop.f32.mrb[0].mxu0
        %5426 = vmatprep.mubr.f32.mxu0 0.0
        %5427 = vmatmul.mubr.f32.gmra.mrb[0].mxu0 %v4915
        %v5428 = vpop.f32.mrb[0].mxu0
        %v5429 = vadd.f32 0.0, %v5428
        %v5430 = vpop.f32.mrb[0].mxu0
        %5431 = vmatprep.mubr.f32.mxu0 0.0
        %5432 = vmatmul.mubr.f32.gmra.mrb[0].mxu0 %v4918
        %v5433 = vpop.f32.mrb[0].mxu0
        %v5434 = vadd.f32 0.0, %v5433
        %v5435 = vpop.f32.mrb[0].mxu0
        %5436 = vmatprep.mubr.f32.mxu0 0.0
        %5437 = vmatmul.mubr.f32.gmra.mrb[0].mxu0 %v4921
        %v5438 = vpop.f32.mrb[0].mxu0
        %v5439 = vadd.f32 0.0, %v5438
        %v5440 = vpop.f32.mrb[0].mxu0
        %5441 = vmatprep.mubr.f32.mxu0 0.0
        %5442 = vmatmul.mubr.f32.gmra.mrb[0].mxu0 %v4924
        %v5443 = vpop.f32.mrb[0].mxu0
        %v5444 = vadd.f32 0.0, %v5443
        %v5445 = vpop.f32.mrb[0].mxu0
        %5446 = vmatprep.mubr.f32.mxu0 0.0
        %5447 = vmatmul.mubr.f32.gmra.mrb[0].mxu0 %v4927
        %v5448 = vpop.f32.mrb[0].mxu0
        %v5449 = vadd.f32 0.0, %v5448
        %v5450 = vpop.f32.mrb[0].mxu0
        %5451 = vdwg.mxu0
        %v5452 = vmul.f32 %v5294, 1.442695
        %v5453 = vpow.pop %v5452
        %v5454 = vmul.f32 %v5299, 1.442695
        %v5455 = vpow.pop %v5454
        %v5456 = vmul.f32 %v5304, 1.442695
        %v5457 = vpow.pop %v5456
        %v5458 = vmul.f32 %v5309, 1.442695
        %v5459 = vpow.pop %v5458
        %v5460 = vmul.f32 %v5314, 1.442695
        %v5461 = vpow.pop %v5460
        %v5462 = vmul.f32 %v5319, 1.442695
        %v5463 = vpow.pop %v5462
        %v5464 = vmul.f32 %v5324, 1.442695
        %v5465 = vpow.pop %v5464
        %v5466 = vmul.f32 %v5329, 1.442695
        %v5467 = vpow.pop %v5466
        %v5468 = vmul.f32 %v5334, 1.442695
        %v5469 = vpow.pop %v5468
        %v5470 = vmul.f32 %v5339, 1.442695
        %v5471 = vpow.pop %v5470
        %v5472 = vmul.f32 %v5344, 1.442695
        %v5473 = vpow.pop %v5472
        %v5474 = vmul.f32 %v5349, 1.442695
        %v5475 = vpow.pop %v5474
        %v5476 = vmul.f32 %v5354, 1.442695
        %v5477 = vpow.pop %v5476
        %v5478 = vmul.f32 %v5359, 1.442695
        %v5479 = vpow.pop %v5478
        %v5480 = vmul.f32 %v5364, 1.442695
        %v5481 = vpow.pop %v5480
        %v5482 = vmul.f32 %v5369, 1.442695
        %v5483 = vpow.pop %v5482
        %v5484 = vmul.f32 %v5374, 1.442695
        %v5485 = vpow.pop %v5484
        %v5486 = vmul.f32 %v5379, 1.442695
        %v5487 = vpow.pop %v5486
        %v5488 = vmul.f32 %v5384, 1.442695
        %v5489 = vpow.pop %v5488
        %v5490 = vmul.f32 %v5389, 1.442695
        %v5491 = vpow.pop %v5490
        %v5492 = vmul.f32 %v5394, 1.442695
        %v5493 = vpow.pop %v5492
        %v5494 = vmul.f32 %v5399, 1.442695
        %v5495 = vpow.pop %v5494
        %v5496 = vmul.f32 %v5404, 1.442695
        %v5497 = vpow.pop %v5496
        %v5498 = vmul.f32 %v5409, 1.442695
        %v5499 = vpow.pop %v5498
        %v5500 = vmul.f32 %v5414, 1.442695
        %v5501 = vpow.pop %v5500
        %v5502 = vmul.f32 %v5419, 1.442695
        %v5503 = vpow.pop %v5502
        %v5504 = vmul.f32 %v5424, 1.442695
        %v5505 = vpow.pop %v5504
        %v5506 = vmul.f32 %v5429, 1.442695
        %v5507 = vpow.pop %v5506
        %v5508 = vmul.f32 %v5434, 1.442695
        %v5509 = vpow.pop %v5508
        %v5510 = vmul.f32 %v5439, 1.442695
        %v5511 = vpow.pop %v5510
        %v5512 = vmul.f32 %v5444, 1.442695
        %v5513 = vpow.pop %v5512
        %v5514 = vmul.f32 %v5449, 1.442695
        %v5515 = vpow.pop %v5514
        %5516 = vmatprep.subr.mxu0 0.0
        %5517 = vmatpush1.xpose.msra.mxu0 %v5453
        %5518 = vmatprep.subr.mxu0 0.0
        %5519 = vmatpush1.xpose.msra.mxu0 %v5455
        %5520 = vmatprep.subr.mxu0 0.0
        %5521 = vmatpush1.xpose.msra.mxu0 %v5457
        %5522 = vmatprep.subr.mxu0 0.0
        %5523 = vmatpush1.xpose.msra.mxu0 %v5459
        %5524 = vmatprep.subr.mxu0 0.0
        %5525 = vmatpush1.xpose.msra.mxu0 %v5461
        %5526 = vmatprep.subr.mxu0 0.0
        %5527 = vmatpush1.xpose.msra.mxu0 %v5463
        %5528 = vmatprep.subr.mxu0 0.0
        %5529 = vmatpush1.xpose.msra.mxu0 %v5465
        %5530 = vmatprep.subr.mxu0 0.0
        %5531 = vmatpush1.xpose.msra.mxu0 %v5467
        %5532 = vmatprep.subr.mxu0 0.0
        %5533 = vmatpush1.xpose.msra.mxu0 %v5469
        %5534 = vmatprep.subr.mxu0 0.0
        %5535 = vmatpush1.xpose.msra.mxu0 %v5471
        %5536 = vmatprep.subr.mxu0 0.0
        %5537 = vmatpush1.xpose.msra.mxu0 %v5473
        %5538 = vmatprep.subr.mxu0 0.0
        %5539 = vmatpush1.xpose.msra.mxu0 %v5475
        %5540 = vmatprep.subr.mxu0 0.0
        %5541 = vmatpush1.xpose.msra.mxu0 %v5477
        %5542 = vmatprep.subr.mxu0 0.0
        %5543 = vmatpush1.xpose.msra.mxu0 %v5479
        %5544 = vmatprep.subr.mxu0 0.0
        %5545 = vmatpush1.xpose.msra.mxu0 %v5481
        %5546 = vmatprep.subr.mxu0 0.0
        %5547 = vmatpush1.xpose.msra.mxu0 %v5483
        %5548 = vmatprep.subr.mxu0 0.0
        %5549 = vmatpush1.xpose.msra.mxu0 %v5485
        %5550 = vmatprep.subr.mxu0 0.0
        %5551 = vmatpush1.xpose.msra.mxu0 %v5487
        %5552 = vmatprep.subr.mxu0 0.0
        %5553 = vmatpush1.xpose.msra.mxu0 %v5489
        %5554 = vmatprep.subr.mxu0 0.0
        %5555 = vmatpush1.xpose.msra.mxu0 %v5491
        %5556 = vmatprep.subr.mxu0 0.0
        %5557 = vmatpush1.xpose.msra.mxu0 %v5493
        %5558 = vmatprep.subr.mxu0 0.0
        %5559 = vmatpush1.xpose.msra.mxu0 %v5495
        %5560 = vmatprep.subr.mxu0 0.0
        %5561 = vmatpush1.xpose.msra.mxu0 %v5497
        %5562 = vmatprep.subr.mxu0 0.0
        %5563 = vmatpush1.xpose.msra.mxu0 %v5499
        %5564 = vmatprep.subr.mxu0 0.0
        %5565 = vmatpush1.xpose.msra.mxu0 %v5501
        %5566 = vmatprep.subr.mxu0 0.0
        %5567 = vmatpush1.xpose.msra.mxu0 %v5503
        %5568 = vmatprep.subr.mxu0 0.0
        %5569 = vmatpush1.xpose.msra.mxu0 %v5505
        %5570 = vmatprep.subr.mxu0 0.0
        %5571 = vmatpush1.xpose.msra.mxu0 %v5507
        %5572 = vmatprep.subr.mxu0 0.0
        %5573 = vmatpush1.xpose.msra.mxu0 %v5509
        %5574 = vmatprep.subr.mxu0 0.0
        %5575 = vmatpush1.xpose.msra.mxu0 %v5511
        %5576 = vmatprep.subr.mxu0 0.0
        %5577 = vmatpush1.xpose.msra.mxu0 %v5513
        %5578 = vmatprep.subr.mxu0 0.0
        %5579 = vmatpush1.xpose.msra.mxu0 %v5515
        %5580 = vmatprep.mubr.f32.mxu0 0.0
        %5581 = vmatmul.mubr.f32.gmra.mrb[0].mxu0 %v5223
        %v5582 = vpop.f32.mrb[0].mxu0
        %v5583 = vadd.f32 0.0, %v5582
        %v5584 = vpop.f32.mrb[0].mxu0
        %v5585 = vadd.f32 0.0, %v5584
        %5586 = vdwg.mxu0
        %5587 = vmatprep.subr.mxu0 0.0
        %5588 = vmatpush1.xpose.msra.mxu0 %v5159
        %5589 = vmatprep.subr.mxu0 0.0
        %5590 = vmatpush1.xpose.msra.mxu0 %v5161
        %5591 = vmatprep.subr.mxu0 0.0
        %5592 = vmatpush1.xpose.msra.mxu0 %v5163
        %5593 = vmatprep.subr.mxu0 0.0
        %5594 = vmatpush1.xpose.msra.mxu0 %v5165
        %5595 = vmatprep.subr.mxu0 0.0
        %5596 = vmatpush1.xpose.msra.mxu0 %v5167
        %5597 = vmatprep.subr.mxu0 0.0
        %5598 = vmatpush1.xpose.msra.mxu0 %v5169
        %5599 = vmatprep.subr.mxu0 0.0
        %5600 = vmatpush1.xpose.msra.mxu0 %v5171
        %5601 = vmatprep.subr.mxu0 0.0
        %5602 = vmatpush1.xpose.msra.mxu0 %v5173
        %5603 = vmatprep.subr.mxu0 0.0
        %5604 = vmatpush1.xpose.msra.mxu0 %v5175
        %5605 = vmatprep.subr.mxu0 0.0
        %5606 = vmatpush1.xpose.msra.mxu0 %v5177
        %5607 = vmatprep.subr.mxu0 0.0
        %5608 = vmatpush1.xpose.msra.mxu0 %v5179
        %5609 = vmatprep.subr.mxu0 0.0
        %5610 = vmatpush1.xpose.msra.mxu0 %v5181
        %5611 = vmatprep.subr.mxu0 0.0
        %5612 = vmatpush1.xpose.msra.mxu0 %v5183
        %5613 = vmatprep.subr.mxu0 0.0
        %5614 = vmatpush1.xpose.msra.mxu0 %v5185
        %5615 = vmatprep.subr.mxu0 0.0
        %5616 = vmatpush1.xpose.msra.mxu0 %v5187
        %5617 = vmatprep.subr.mxu0 0.0
        %5618 = vmatpush1.xpose.msra.mxu0 %v5189
        %5619 = vmatprep.subr.mxu0 0.0
        %5620 = vmatpush1.xpose.msra.mxu0 %v5191
        %5621 = vmatprep.subr.mxu0 0.0
        %5622 = vmatpush1.xpose.msra.mxu0 %v5193
        %5623 = vmatprep.subr.mxu0 0.0
        %5624 = vmatpush1.xpose.msra.mxu0 %v5195
        %5625 = vmatprep.subr.mxu0 0.0
        %5626 = vmatpush1.xpose.msra.mxu0 %v5197
        %5627 = vmatprep.subr.mxu0 0.0
        %5628 = vmatpush1.xpose.msra.mxu0 %v5199
        %5629 = vmatprep.subr.mxu0 0.0
        %5630 = vmatpush1.xpose.msra.mxu0 %v5201
        %5631 = vmatprep.subr.mxu0 0.0
        %5632 = vmatpush1.xpose.msra.mxu0 %v5203
        %5633 = vmatprep.subr.mxu0 0.0
        %5634 = vmatpush1.xpose.msra.mxu0 %v5205
        %5635 = vmatprep.subr.mxu0 0.0
        %5636 = vmatpush1.xpose.msra.mxu0 %v5207
        %5637 = vmatprep.subr.mxu0 0.0
        %5638 = vmatpush1.xpose.msra.mxu0 %v5209
        %5639 = vmatprep.subr.mxu0 0.0
        %5640 = vmatpush1.xpose.msra.mxu0 %v5211
        %5641 = vmatprep.subr.mxu0 0.0
        %5642 = vmatpush1.xpose.msra.mxu0 %v5213
        %5643 = vmatprep.subr.mxu0 0.0
        %5644 = vmatpush1.xpose.msra.mxu0 %v5215
        %5645 = vmatprep.subr.mxu0 0.0
        %5646 = vmatpush1.xpose.msra.mxu0 %v5217
        %5647 = vmatprep.subr.mxu0 0.0
        %5648 = vmatpush1.xpose.msra.mxu0 %v5219
        %5649 = vmatprep.subr.mxu0 0.0
        %5650 = vmatpush1.xpose.msra.mxu0 %v5221
        %5651 = vmatprep.mubr.f32.mxu0 0.0
        %5652 = vmatmul.mubr.f32.gmra.mrb[0].mxu0 %v4756
        %v5653 = vpop.f32.mrb[0].mxu0
        %v5654 = vadd.f32 %v5583, %v5653
        %v5655 = vpop.f32.mrb[0].mxu0
        %v5656 = vadd.f32 %v5585, %v5655
        %5657 = vdwg.mxu0
        %v5658 = vld [vmem:[#allocation3 + $0x4] sm:$0x3]
        %v5659 = vld [vmem:[#allocation4 + $0x4] sm:$0x3]
        %v5661 = vsel %vm4929, %v5658, 0
        %5663 = vmatprep.subr.mxu0 0.0
        %5664 = vmatpush1.msra.mxu0 %v5661
        %5665 = vmatprep.subr.mxu0 0.0
        %5666 = vmatpush1.msra.mxu0 0.0
        %5667 = vmatprep.subr.mxu0 0.0
        %5668 = vmatpush1.msra.mxu0 0.0
        %5669 = vmatprep.subr.mxu0 0.0
        %5670 = vmatpush1.msra.mxu0 0.0
        %5671 = vmatprep.subr.mxu0 0.0
        %5672 = vmatpush1.msra.mxu0 0.0
        %5673 = vmatprep.subr.mxu0 0.0
        %5674 = vmatpush1.msra.mxu0 0.0
        %5675 = vmatprep.subr.mxu0 0.0
        %5676 = vmatpush1.msra.mxu0 0.0
        %5677 = vmatprep.subr.mxu0 0.0
        %5678 = vmatpush1.msra.mxu0 0.0
        %5679 = vmatprep.subr.mxu0 0.0
        %5680 = vmatpush1.msra.mxu0 0.0
        %5681 = vmatprep.subr.mxu0 0.0
        %5682 = vmatpush1.msra.mxu0 0.0
        %5683 = vmatprep.subr.mxu0 0.0
        %5684 = vmatpush1.msra.mxu0 0.0
        %5685 = vmatprep.subr.mxu0 0.0
        %5686 = vmatpush1.msra.mxu0 0.0
        %5687 = vmatprep.subr.mxu0 0.0
        %5688 = vmatpush1.msra.mxu0 0.0
        %5689 = vmatprep.subr.mxu0 0.0
        %5690 = vmatpush1.msra.mxu0 0.0
        %5691 = vmatprep.subr.mxu0 0.0
        %5692 = vmatpush1.msra.mxu0 0.0
        %5693 = vmatprep.subr.mxu0 0.0
        %5694 = vmatpush1.msra.mxu0 0.0
        %5695 = vmatprep.subr.mxu0 0.0
        %5696 = vmatpush1.msra.mxu0 0.0
        %5697 = vmatprep.subr.mxu0 0.0
        %5698 = vmatpush1.msra.mxu0 0.0
        %5699 = vmatprep.subr.mxu0 0.0
        %5700 = vmatpush1.msra.mxu0 0.0
        %5701 = vmatprep.subr.mxu0 0.0
        %5702 = vmatpush1.msra.mxu0 0.0
        %5703 = vmatprep.subr.mxu0 0.0
        %5704 = vmatpush1.msra.mxu0 0.0
        %5705 = vmatprep.subr.mxu0 0.0
        %5706 = vmatpush1.msra.mxu0 0.0
        %5707 = vmatprep.subr.mxu0 0.0
        %5708 = vmatpush1.msra.mxu0 0.0
        %5709 = vmatprep.subr.mxu0 0.0
        %5710 = vmatpush1.msra.mxu0 0.0
        %5711 = vmatprep.subr.mxu0 0.0
        %5712 = vmatpush1.msra.mxu0 0.0
        %5713 = vmatprep.subr.mxu0 0.0
        %5714 = vmatpush1.msra.mxu0 0.0
        %5715 = vmatprep.subr.mxu0 0.0
        %5716 = vmatpush1.msra.mxu0 0.0
        %5717 = vmatprep.subr.mxu0 0.0
        %5718 = vmatpush1.msra.mxu0 0.0
        %5719 = vmatprep.subr.mxu0 0.0
        %5720 = vmatpush1.msra.mxu0 0.0
        %5721 = vmatprep.subr.mxu0 0.0
        %5722 = vmatpush1.msra.mxu0 0.0
        %5723 = vmatprep.subr.mxu0 0.0
        %5724 = vmatpush1.msra.mxu0 0.0
        %5725 = vmatprep.subr.mxu0 0.0
        %5726 = vmatpush1.msra.mxu0 0.0
        %5727 = vmatprep.mubr.f32.mxu0 0.0
        %5728 = vmatmul.mubr.f32.gmra.mrb[0].mxu0 %v4834
        %v5729 = vpop.f32.mrb[0].mxu0
        %v5730 = vadd.f32 0.0, %v5729
        %v5731 = vpop.f32.mrb[0].mxu0
        %5732 = vmatprep.mubr.f32.mxu0 0.0
        %5733 = vmatmul.mubr.f32.gmra.mrb[0].mxu0 %v4837
        %v5734 = vpop.f32.mrb[0].mxu0
        %v5735 = vadd.f32 0.0, %v5734
        %v5736 = vpop.f32.mrb[0].mxu0
        %5737 = vmatprep.mubr.f32.mxu0 0.0
        %5738 = vmatmul.mubr.f32.gmra.mrb[0].mxu0 %v4840
        %v5739 = vpop.f32.mrb[0].mxu0
        %v5740 = vadd.f32 0.0, %v5739
        %v5741 = vpop.f32.mrb[0].mxu0
        %5742 = vmatprep.mubr.f32.mxu0 0.0
        %5743 = vmatmul.mubr.f32.gmra.mrb[0].mxu0 %v4843
        %v5744 = vpop.f32.mrb[0].mxu0
        %v5745 = vadd.f32 0.0, %v5744
        %v5746 = vpop.f32.mrb[0].mxu0
        %5747 = vmatprep.mubr.f32.mxu0 0.0
        %5748 = vmatmul.mubr.f32.gmra.mrb[0].mxu0 %v4846
        %v5749 = vpop.f32.mrb[0].mxu0
        %v5750 = vadd.f32 0.0, %v5749
        %v5751 = vpop.f32.mrb[0].mxu0
        %5752 = vmatprep.mubr.f32.mxu0 0.0
        %5753 = vmatmul.mubr.f32.gmra.mrb[0].mxu0 %v4849
        %v5754 = vpop.f32.mrb[0].mxu0
        %v5755 = vadd.f32 0.0, %v5754
        %v5756 = vpop.f32.mrb[0].mxu0
        %5757 = vmatprep.mubr.f32.mxu0 0.0
        %5758 = vmatmul.mubr.f32.gmra.mrb[0].mxu0 %v4852
        %v5759 = vpop.f32.mrb[0].mxu0
        %v5760 = vadd.f32 0.0, %v5759
        %v5761 = vpop.f32.mrb[0].mxu0
        %5762 = vmatprep.mubr.f32.mxu0 0.0
        %5763 = vmatmul.mubr.f32.gmra.mrb[0].mxu0 %v4855
        %v5764 = vpop.f32.mrb[0].mxu0
        %v5765 = vadd.f32 0.0, %v5764
        %v5766 = vpop.f32.mrb[0].mxu0
        %5767 = vmatprep.mubr.f32.mxu0 0.0
        %5768 = vmatmul.mubr.f32.gmra.mrb[0].mxu0 %v4858
        %v5769 = vpop.f32.mrb[0].mxu0
        %v5770 = vadd.f32 0.0, %v5769
        %v5771 = vpop.f32.mrb[0].mxu0
        %5772 = vmatprep.mubr.f32.mxu0 0.0
        %5773 = vmatmul.mubr.f32.gmra.mrb[0].mxu0 %v4861
        %v5774 = vpop.f32.mrb[0].mxu0
        %v5775 = vadd.f32 0.0, %v5774
        %v5776 = vpop.f32.mrb[0].mxu0
        %5777 = vmatprep.mubr.f32.mxu0 0.0
        %5778 = vmatmul.mubr.f32.gmra.mrb[0].mxu0 %v4864
        %v5779 = vpop.f32.mrb[0].mxu0
        %v5780 = vadd.f32 0.0, %v5779
        %v5781 = vpop.f32.mrb[0].mxu0
        %5782 = vmatprep.mubr.f32.mxu0 0.0
        %5783 = vmatmul.mubr.f32.gmra.mrb[0].mxu0 %v4867
        %v5784 = vpop.f32.mrb[0].mxu0
        %v5785 = vadd.f32 0.0, %v5784
        %v5786 = vpop.f32.mrb[0].mxu0
        %5787 = vmatprep.mubr.f32.mxu0 0.0
        %5788 = vmatmul.mubr.f32.gmra.mrb[0].mxu0 %v4870
        %v5789 = vpop.f32.mrb[0].mxu0
        %v5790 = vadd.f32 0.0, %v5789
        %v5791 = vpop.f32.mrb[0].mxu0
        %5792 = vmatprep.mubr.f32.mxu0 0.0
        %5793 = vmatmul.mubr.f32.gmra.mrb[0].mxu0 %v4873
        %v5794 = vpop.f32.mrb[0].mxu0
        %v5795 = vadd.f32 0.0, %v5794
        %v5796 = vpop.f32.mrb[0].mxu0
        %5797 = vmatprep.mubr.f32.mxu0 0.0
        %5798 = vmatmul.mubr.f32.gmra.mrb[0].mxu0 %v4876
        %v5799 = vpop.f32.mrb[0].mxu0
        %v5800 = vadd.f32 0.0, %v5799
        %v5801 = vpop.f32.mrb[0].mxu0
        %5802 = vmatprep.mubr.f32.mxu0 0.0
        %5803 = vmatmul.mubr.f32.gmra.mrb[0].mxu0 %v4879
        %v5804 = vpop.f32.mrb[0].mxu0
        %v5805 = vadd.f32 0.0, %v5804
        %v5806 = vpop.f32.mrb[0].mxu0
        %5807 = vmatprep.mubr.f32.mxu0 0.0
        %5808 = vmatmul.mubr.f32.gmra.mrb[0].mxu0 %v4882
        %v5809 = vpop.f32.mrb[0].mxu0
        %v5810 = vadd.f32 0.0, %v5809
        %v5811 = vpop.f32.mrb[0].mxu0
        %5812 = vmatprep.mubr.f32.mxu0 0.0
        %5813 = vmatmul.mubr.f32.gmra.mrb[0].mxu0 %v4885
        %v5814 = vpop.f32.mrb[0].mxu0
        %v5815 = vadd.f32 0.0, %v5814
        %v5816 = vpop.f32.mrb[0].mxu0
        %5817 = vmatprep.mubr.f32.mxu0 0.0
        %5818 = vmatmul.mubr.f32.gmra.mrb[0].mxu0 %v4888
        %v5819 = vpop.f32.mrb[0].mxu0
        %v5820 = vadd.f32 0.0, %v5819
        %v5821 = vpop.f32.mrb[0].mxu0
        %5822 = vmatprep.mubr.f32.mxu0 0.0
        %5823 = vmatmul.mubr.f32.gmra.mrb[0].mxu0 %v4891
        %v5824 = vpop.f32.mrb[0].mxu0
        %v5825 = vadd.f32 0.0, %v5824
        %v5826 = vpop.f32.mrb[0].mxu0
        %5827 = vmatprep.mubr.f32.mxu0 0.0
        %5828 = vmatmul.mubr.f32.gmra.mrb[0].mxu0 %v4894
        %v5829 = vpop.f32.mrb[0].mxu0
        %v5830 = vadd.f32 0.0, %v5829
        %v5831 = vpop.f32.mrb[0].mxu0
        %5832 = vmatprep.mubr.f32.mxu0 0.0
        %5833 = vmatmul.mubr.f32.gmra.mrb[0].mxu0 %v4897
        %v5834 = vpop.f32.mrb[0].mxu0
        %v5835 = vadd.f32 0.0, %v5834
        %v5836 = vpop.f32.mrb[0].mxu0
        %5837 = vmatprep.mubr.f32.mxu0 0.0
        %5838 = vmatmul.mubr.f32.gmra.mrb[0].mxu0 %v4900
        %v5839 = vpop.f32.mrb[0].mxu0
        %v5840 = vadd.f32 0.0, %v5839
        %v5841 = vpop.f32.mrb[0].mxu0
        %5842 = vmatprep.mubr.f32.mxu0 0.0
        %5843 = vmatmul.mubr.f32.gmra.mrb[0].mxu0 %v4903
        %v5844 = vpop.f32.mrb[0].mxu0
        %v5845 = vadd.f32 0.0, %v5844
        %v5846 = vpop.f32.mrb[0].mxu0
        %5847 = vmatprep.mubr.f32.mxu0 0.0
        %5848 = vmatmul.mubr.f32.gmra.mrb[0].mxu0 %v4906
        %v5849 = vpop.f32.mrb[0].mxu0
        %v5850 = vadd.f32 0.0, %v5849
        %v5851 = vpop.f32.mrb[0].mxu0
        %5852 = vmatprep.mubr.f32.mxu0 0.0
        %5853 = vmatmul.mubr.f32.gmra.mrb[0].mxu0 %v4909
        %v5854 = vpop.f32.mrb[0].mxu0
        %v5855 = vadd.f32 0.0, %v5854
        %v5856 = vpop.f32.mrb[0].mxu0
        %5857 = vmatprep.mubr.f32.mxu0 0.0
        %5858 = vmatmul.mubr.f32.gmra.mrb[0].mxu0 %v4912
        %v5859 = vpop.f32.mrb[0].mxu0
        %v5860 = vadd.f32 0.0, %v5859
        %v5861 = vpop.f32.mrb[0].mxu0
        %5862 = vmatprep.mubr.f32.mxu0 0.0
        %5863 = vmatmul.mubr.f32.gmra.mrb[0].mxu0 %v4915
        %v5864 = vpop.f32.mrb[0].mxu0
        %v5865 = vadd.f32 0.0, %v5864
        %v5866 = vpop.f32.mrb[0].mxu0
        %5867 = vmatprep.mubr.f32.mxu0 0.0
        %5868 = vmatmul.mubr.f32.gmra.mrb[0].mxu0 %v4918
        %v5869 = vpop.f32.mrb[0].mxu0
        %v5870 = vadd.f32 0.0, %v5869
        %v5871 = vpop.f32.mrb[0].mxu0
        %5872 = vmatprep.mubr.f32.mxu0 0.0
        %5873 = vmatmul.mubr.f32.gmra.mrb[0].mxu0 %v4921
        %v5874 = vpop.f32.mrb[0].mxu0
        %v5875 = vadd.f32 0.0, %v5874
        %v5876 = vpop.f32.mrb[0].mxu0
        %5877 = vmatprep.mubr.f32.mxu0 0.0
        %5878 = vmatmul.mubr.f32.gmra.mrb[0].mxu0 %v4924
        %v5879 = vpop.f32.mrb[0].mxu0
        %v5880 = vadd.f32 0.0, %v5879
        %v5881 = vpop.f32.mrb[0].mxu0
        %5882 = vmatprep.mubr.f32.mxu0 0.0
        %5883 = vmatmul.mubr.f32.gmra.mrb[0].mxu0 %v4927
        %v5884 = vpop.f32.mrb[0].mxu0
        %v5885 = vadd.f32 0.0, %v5884
        %v5886 = vpop.f32.mrb[0].mxu0
        %5887 = vdwg.mxu0
        %v5888 = vmul.f32 %v5730, 1.442695
        %v5889 = vpow.pop %v5888
        %v5890 = vmul.f32 %v5735, 1.442695
        %v5891 = vpow.pop %v5890
        %v5892 = vmul.f32 %v5740, 1.442695
        %v5893 = vpow.pop %v5892
        %v5894 = vmul.f32 %v5745, 1.442695
        %v5895 = vpow.pop %v5894
        %v5896 = vmul.f32 %v5750, 1.442695
        %v5897 = vpow.pop %v5896
        %v5898 = vmul.f32 %v5755, 1.442695
        %v5899 = vpow.pop %v5898
        %v5900 = vmul.f32 %v5760, 1.442695
        %v5901 = vpow.pop %v5900
        %v5902 = vmul.f32 %v5765, 1.442695
        %v5903 = vpow.pop %v5902
        %v5904 = vmul.f32 %v5770, 1.442695
        %v5905 = vpow.pop %v5904
        %v5906 = vmul.f32 %v5775, 1.442695
        %v5907 = vpow.pop %v5906
        %v5908 = vmul.f32 %v5780, 1.442695
        %v5909 = vpow.pop %v5908
        %v5910 = vmul.f32 %v5785, 1.442695
        %v5911 = vpow.pop %v5910
        %v5912 = vmul.f32 %v5790, 1.442695
        %v5913 = vpow.pop %v5912
        %v5914 = vmul.f32 %v5795, 1.442695
        %v5915 = vpow.pop %v5914
        %v5916 = vmul.f32 %v5800, 1.442695
        %v5917 = vpow.pop %v5916
        %v5918 = vmul.f32 %v5805, 1.442695
        %v5919 = vpow.pop %v5918
        %v5920 = vmul.f32 %v5810, 1.442695
        %v5921 = vpow.pop %v5920
        %v5922 = vmul.f32 %v5815, 1.442695
        %v5923 = vpow.pop %v5922
        %v5924 = vmul.f32 %v5820, 1.442695
        %v5925 = vpow.pop %v5924
        %v5926 = vmul.f32 %v5825, 1.442695
        %v5927 = vpow.pop %v5926
        %v5928 = vmul.f32 %v5830, 1.442695
        %v5929 = vpow.pop %v5928
        %v5930 = vmul.f32 %v5835, 1.442695
        %v5931 = vpow.pop %v5930
        %v5932 = vmul.f32 %v5840, 1.442695
        %v5933 = vpow.pop %v5932
        %v5934 = vmul.f32 %v5845, 1.442695
        %v5935 = vpow.pop %v5934
        %v5936 = vmul.f32 %v5850, 1.442695
        %v5937 = vpow.pop %v5936
        %v5938 = vmul.f32 %v5855, 1.442695
        %v5939 = vpow.pop %v5938
        %v5940 = vmul.f32 %v5860, 1.442695
        %v5941 = vpow.pop %v5940
        %v5942 = vmul.f32 %v5865, 1.442695
        %v5943 = vpow.pop %v5942
        %v5944 = vmul.f32 %v5870, 1.442695
        %v5945 = vpow.pop %v5944
        %v5946 = vmul.f32 %v5875, 1.442695
        %v5947 = vpow.pop %v5946
        %v5948 = vmul.f32 %v5880, 1.442695
        %v5949 = vpow.pop %v5948
        %v5950 = vmul.f32 %v5885, 1.442695
        %v5951 = vpow.pop %v5950
        %5952 = vmatprep.subr.mxu0 0.0
        %5953 = vmatpush1.xpose.msra.mxu0 %v5889
        %5954 = vmatprep.subr.mxu0 0.0
        %5955 = vmatpush1.xpose.msra.mxu0 %v5891
        %5956 = vmatprep.subr.mxu0 0.0
        %5957 = vmatpush1.xpose.msra.mxu0 %v5893
        %5958 = vmatprep.subr.mxu0 0.0
        %5959 = vmatpush1.xpose.msra.mxu0 %v5895
        %5960 = vmatprep.subr.mxu0 0.0
        %5961 = vmatpush1.xpose.msra.mxu0 %v5897
        %5962 = vmatprep.subr.mxu0 0.0
        %5963 = vmatpush1.xpose.msra.mxu0 %v5899
        %5964 = vmatprep.subr.mxu0 0.0
        %5965 = vmatpush1.xpose.msra.mxu0 %v5901
        %5966 = vmatprep.subr.mxu0 0.0
        %5967 = vmatpush1.xpose.msra.mxu0 %v5903
        %5968 = vmatprep.subr.mxu0 0.0
        %5969 = vmatpush1.xpose.msra.mxu0 %v5905
        %5970 = vmatprep.subr.mxu0 0.0
        %5971 = vmatpush1.xpose.msra.mxu0 %v5907
        %5972 = vmatprep.subr.mxu0 0.0
        %5973 = vmatpush1.xpose.msra.mxu0 %v5909
        %5974 = vmatprep.subr.mxu0 0.0
        %5975 = vmatpush1.xpose.msra.mxu0 %v5911
        %5976 = vmatprep.subr.mxu0 0.0
        %5977 = vmatpush1.xpose.msra.mxu0 %v5913
        %5978 = vmatprep.subr.mxu0 0.0
        %5979 = vmatpush1.xpose.msra.mxu0 %v5915
        %5980 = vmatprep.subr.mxu0 0.0
        %5981 = vmatpush1.xpose.msra.mxu0 %v5917
        %5982 = vmatprep.subr.mxu0 0.0
        %5983 = vmatpush1.xpose.msra.mxu0 %v5919
        %5984 = vmatprep.subr.mxu0 0.0
        %5985 = vmatpush1.xpose.msra.mxu0 %v5921
        %5986 = vmatprep.subr.mxu0 0.0
        %5987 = vmatpush1.xpose.msra.mxu0 %v5923
        %5988 = vmatprep.subr.mxu0 0.0
        %5989 = vmatpush1.xpose.msra.mxu0 %v5925
        %5990 = vmatprep.subr.mxu0 0.0
        %5991 = vmatpush1.xpose.msra.mxu0 %v5927
        %5992 = vmatprep.subr.mxu0 0.0
        %5993 = vmatpush1.xpose.msra.mxu0 %v5929
        %5994 = vmatprep.subr.mxu0 0.0
        %5995 = vmatpush1.xpose.msra.mxu0 %v5931
        %5996 = vmatprep.subr.mxu0 0.0
        %5997 = vmatpush1.xpose.msra.mxu0 %v5933
        %5998 = vmatprep.subr.mxu0 0.0
        %5999 = vmatpush1.xpose.msra.mxu0 %v5935
        %6000 = vmatprep.subr.mxu0 0.0
        %6001 = vmatpush1.xpose.msra.mxu0 %v5937
        %6002 = vmatprep.subr.mxu0 0.0
        %6003 = vmatpush1.xpose.msra.mxu0 %v5939
        %6004 = vmatprep.subr.mxu0 0.0
        %6005 = vmatpush1.xpose.msra.mxu0 %v5941
        %6006 = vmatprep.subr.mxu0 0.0
        %6007 = vmatpush1.xpose.msra.mxu0 %v5943
        %6008 = vmatprep.subr.mxu0 0.0
        %6009 = vmatpush1.xpose.msra.mxu0 %v5945
        %6010 = vmatprep.subr.mxu0 0.0
        %6011 = vmatpush1.xpose.msra.mxu0 %v5947
        %6012 = vmatprep.subr.mxu0 0.0
        %6013 = vmatpush1.xpose.msra.mxu0 %v5949
        %6014 = vmatprep.subr.mxu0 0.0
        %6015 = vmatpush1.xpose.msra.mxu0 %v5951
        %6016 = vmatprep.mubr.f32.mxu0 0.0
        %6017 = vmatmul.mubr.f32.gmra.mrb[0].mxu0 %v5659
        %v6018 = vpop.f32.mrb[0].mxu0
        %v6019 = vadd.f32 0.0, %v6018
        %v6020 = vpop.f32.mrb[0].mxu0
        %v6021 = vadd.f32 0.0, %v6020
        %6022 = vdwg.mxu0
        %v6023 = vadd.f32 %v5654, %v6019
        %v6024 = vadd.f32 %v5656, %v6021
        %v6025 = vld [vmem:[#allocation3 + $0x6] sm:$0x3]
        %v6026 = vld [vmem:[#allocation4 + $0x6] sm:$0x3]
        %v6028 = vsel %vm4929, %v6025, 0
        %6030 = vmatprep.subr.mxu0 0.0
        %6031 = vmatpush1.msra.mxu0 %v6028
        %6032 = vmatprep.subr.mxu0 0.0
        %6033 = vmatpush1.msra.mxu0 0.0
        %6034 = vmatprep.subr.mxu0 0.0
        %6035 = vmatpush1.msra.mxu0 0.0
        %6036 = vmatprep.subr.mxu0 0.0
        %6037 = vmatpush1.msra.mxu0 0.0
        %6038 = vmatprep.subr.mxu0 0.0
        %6039 = vmatpush1.msra.mxu0 0.0
        %6040 = vmatprep.subr.mxu0 0.0
        %6041 = vmatpush1.msra.mxu0 0.0
        %6042 = vmatprep.subr.mxu0 0.0
        %6043 = vmatpush1.msra.mxu0 0.0
        %6044 = vmatprep.subr.mxu0 0.0
        %6045 = vmatpush1.msra.mxu0 0.0
        %6046 = vmatprep.subr.mxu0 0.0
        %6047 = vmatpush1.msra.mxu0 0.0
        %6048 = vmatprep.subr.mxu0 0.0
        %6049 = vmatpush1.msra.mxu0 0.0
        %6050 = vmatprep.subr.mxu0 0.0
        %6051 = vmatpush1.msra.mxu0 0.0
        %6052 = vmatprep.subr.mxu0 0.0
        %6053 = vmatpush1.msra.mxu0 0.0
        %6054 = vmatprep.subr.mxu0 0.0
        %6055 = vmatpush1.msra.mxu0 0.0
        %6056 = vmatprep.subr.mxu0 0.0
        %6057 = vmatpush1.msra.mxu0 0.0
        %6058 = vmatprep.subr.mxu0 0.0
        %6059 = vmatpush1.msra.mxu0 0.0
        %6060 = vmatprep.subr.mxu0 0.0
        %6061 = vmatpush1.msra.mxu0 0.0
        %6062 = vmatprep.subr.mxu0 0.0
        %6063 = vmatpush1.msra.mxu0 0.0
        %6064 = vmatprep.subr.mxu0 0.0
        %6065 = vmatpush1.msra.mxu0 0.0
        %6066 = vmatprep.subr.mxu0 0.0
        %6067 = vmatpush1.msra.mxu0 0.0
        %6068 = vmatprep.subr.mxu0 0.0
        %6069 = vmatpush1.msra.mxu0 0.0
        %6070 = vmatprep.subr.mxu0 0.0
        %6071 = vmatpush1.msra.mxu0 0.0
        %6072 = vmatprep.subr.mxu0 0.0
        %6073 = vmatpush1.msra.mxu0 0.0
        %6074 = vmatprep.subr.mxu0 0.0
        %6075 = vmatpush1.msra.mxu0 0.0
        %6076 = vmatprep.subr.mxu0 0.0
        %6077 = vmatpush1.msra.mxu0 0.0
        %6078 = vmatprep.subr.mxu0 0.0
        %6079 = vmatpush1.msra.mxu0 0.0
        %6080 = vmatprep.subr.mxu0 0.0
        %6081 = vmatpush1.msra.mxu0 0.0
        %6082 = vmatprep.subr.mxu0 0.0
        %6083 = vmatpush1.msra.mxu0 0.0
        %6084 = vmatprep.subr.mxu0 0.0
        %6085 = vmatpush1.msra.mxu0 0.0
        %6086 = vmatprep.subr.mxu0 0.0
        %6087 = vmatpush1.msra.mxu0 0.0
        %6088 = vmatprep.subr.mxu0 0.0
        %6089 = vmatpush1.msra.mxu0 0.0
        %6090 = vmatprep.subr.mxu0 0.0
        %6091 = vmatpush1.msra.mxu0 0.0
        %6092 = vmatprep.subr.mxu0 0.0
        %6093 = vmatpush1.msra.mxu0 0.0
        %6094 = vmatprep.mubr.f32.mxu0 0.0
        %6095 = vmatmul.mubr.f32.gmra.mrb[0].mxu0 %v4834
        %v6096 = vpop.f32.mrb[0].mxu0
        %v6097 = vadd.f32 0.0, %v6096
        %v6098 = vpop.f32.mrb[0].mxu0
        %6099 = vmatprep.mubr.f32.mxu0 0.0
        %6100 = vmatmul.mubr.f32.gmra.mrb[0].mxu0 %v4837
        %v6101 = vpop.f32.mrb[0].mxu0
        %v6102 = vadd.f32 0.0, %v6101
        %v6103 = vpop.f32.mrb[0].mxu0
        %6104 = vmatprep.mubr.f32.mxu0 0.0
        %6105 = vmatmul.mubr.f32.gmra.mrb[0].mxu0 %v4840
        %v6106 = vpop.f32.mrb[0].mxu0
        %v6107 = vadd.f32 0.0, %v6106
        %v6108 = vpop.f32.mrb[0].mxu0
        %6109 = vmatprep.mubr.f32.mxu0 0.0
        %6110 = vmatmul.mubr.f32.gmra.mrb[0].mxu0 %v4843
        %v6111 = vpop.f32.mrb[0].mxu0
        %v6112 = vadd.f32 0.0, %v6111
        %v6113 = vpop.f32.mrb[0].mxu0
        %6114 = vmatprep.mubr.f32.mxu0 0.0
        %6115 = vmatmul.mubr.f32.gmra.mrb[0].mxu0 %v4846
        %v6116 = vpop.f32.mrb[0].mxu0
        %v6117 = vadd.f32 0.0, %v6116
        %v6118 = vpop.f32.mrb[0].mxu0
        %6119 = vmatprep.mubr.f32.mxu0 0.0
        %6120 = vmatmul.mubr.f32.gmra.mrb[0].mxu0 %v4849
        %v6121 = vpop.f32.mrb[0].mxu0
        %v6122 = vadd.f32 0.0, %v6121
        %v6123 = vpop.f32.mrb[0].mxu0
        %6124 = vmatprep.mubr.f32.mxu0 0.0
        %6125 = vmatmul.mubr.f32.gmra.mrb[0].mxu0 %v4852
        %v6126 = vpop.f32.mrb[0].mxu0
        %v6127 = vadd.f32 0.0, %v6126
        %v6128 = vpop.f32.mrb[0].mxu0
        %6129 = vmatprep.mubr.f32.mxu0 0.0
        %6130 = vmatmul.mubr.f32.gmra.mrb[0].mxu0 %v4855
        %v6131 = vpop.f32.mrb[0].mxu0
        %v6132 = vadd.f32 0.0, %v6131
        %v6133 = vpop.f32.mrb[0].mxu0
        %6134 = vmatprep.mubr.f32.mxu0 0.0
        %6135 = vmatmul.mubr.f32.gmra.mrb[0].mxu0 %v4858
        %v6136 = vpop.f32.mrb[0].mxu0
        %v6137 = vadd.f32 0.0, %v6136
        %v6138 = vpop.f32.mrb[0].mxu0
        %6139 = vmatprep.mubr.f32.mxu0 0.0
        %6140 = vmatmul.mubr.f32.gmra.mrb[0].mxu0 %v4861
        %v6141 = vpop.f32.mrb[0].mxu0
        %v6142 = vadd.f32 0.0, %v6141
        %v6143 = vpop.f32.mrb[0].mxu0
        %6144 = vmatprep.mubr.f32.mxu0 0.0
        %6145 = vmatmul.mubr.f32.gmra.mrb[0].mxu0 %v4864
        %v6146 = vpop.f32.mrb[0].mxu0
        %v6147 = vadd.f32 0.0, %v6146
        %v6148 = vpop.f32.mrb[0].mxu0
        %6149 = vmatprep.mubr.f32.mxu0 0.0
        %6150 = vmatmul.mubr.f32.gmra.mrb[0].mxu0 %v4867
        %v6151 = vpop.f32.mrb[0].mxu0
        %v6152 = vadd.f32 0.0, %v6151
        %v6153 = vpop.f32.mrb[0].mxu0
        %6154 = vmatprep.mubr.f32.mxu0 0.0
        %6155 = vmatmul.mubr.f32.gmra.mrb[0].mxu0 %v4870
        %v6156 = vpop.f32.mrb[0].mxu0
        %v6157 = vadd.f32 0.0, %v6156
        %v6158 = vpop.f32.mrb[0].mxu0
        %6159 = vmatprep.mubr.f32.mxu0 0.0
        %6160 = vmatmul.mubr.f32.gmra.mrb[0].mxu0 %v4873
        %v6161 = vpop.f32.mrb[0].mxu0
        %v6162 = vadd.f32 0.0, %v6161
        %v6163 = vpop.f32.mrb[0].mxu0
        %6164 = vmatprep.mubr.f32.mxu0 0.0
        %6165 = vmatmul.mubr.f32.gmra.mrb[0].mxu0 %v4876
        %v6166 = vpop.f32.mrb[0].mxu0
        %v6167 = vadd.f32 0.0, %v6166
        %v6168 = vpop.f32.mrb[0].mxu0
        %6169 = vmatprep.mubr.f32.mxu0 0.0
        %6170 = vmatmul.mubr.f32.gmra.mrb[0].mxu0 %v4879
        %v6171 = vpop.f32.mrb[0].mxu0
        %v6172 = vadd.f32 0.0, %v6171
        %v6173 = vpop.f32.mrb[0].mxu0
        %6174 = vmatprep.mubr.f32.mxu0 0.0
        %6175 = vmatmul.mubr.f32.gmra.mrb[0].mxu0 %v4882
        %v6176 = vpop.f32.mrb[0].mxu0
        %v6177 = vadd.f32 0.0, %v6176
        %v6178 = vpop.f32.mrb[0].mxu0
        %6179 = vmatprep.mubr.f32.mxu0 0.0
        %6180 = vmatmul.mubr.f32.gmra.mrb[0].mxu0 %v4885
        %v6181 = vpop.f32.mrb[0].mxu0
        %v6182 = vadd.f32 0.0, %v6181
        %v6183 = vpop.f32.mrb[0].mxu0
        %6184 = vmatprep.mubr.f32.mxu0 0.0
        %6185 = vmatmul.mubr.f32.gmra.mrb[0].mxu0 %v4888
        %v6186 = vpop.f32.mrb[0].mxu0
        %v6187 = vadd.f32 0.0, %v6186
        %v6188 = vpop.f32.mrb[0].mxu0
        %6189 = vmatprep.mubr.f32.mxu0 0.0
        %6190 = vmatmul.mubr.f32.gmra.mrb[0].mxu0 %v4891
        %v6191 = vpop.f32.mrb[0].mxu0
        %v6192 = vadd.f32 0.0, %v6191
        %v6193 = vpop.f32.mrb[0].mxu0
        %6194 = vmatprep.mubr.f32.mxu0 0.0
        %6195 = vmatmul.mubr.f32.gmra.mrb[0].mxu0 %v4894
        %v6196 = vpop.f32.mrb[0].mxu0
        %v6197 = vadd.f32 0.0, %v6196
        %v6198 = vpop.f32.mrb[0].mxu0
        %6199 = vmatprep.mubr.f32.mxu0 0.0
        %6200 = vmatmul.mubr.f32.gmra.mrb[0].mxu0 %v4897
        %v6201 = vpop.f32.mrb[0].mxu0
        %v6202 = vadd.f32 0.0, %v6201
        %v6203 = vpop.f32.mrb[0].mxu0
        %6204 = vmatprep.mubr.f32.mxu0 0.0
        %6205 = vmatmul.mubr.f32.gmra.mrb[0].mxu0 %v4900
        %v6206 = vpop.f32.mrb[0].mxu0
        %v6207 = vadd.f32 0.0, %v6206
        %v6208 = vpop.f32.mrb[0].mxu0
        %6209 = vmatprep.mubr.f32.mxu0 0.0
        %6210 = vmatmul.mubr.f32.gmra.mrb[0].mxu0 %v4903
        %v6211 = vpop.f32.mrb[0].mxu0
        %v6212 = vadd.f32 0.0, %v6211
        %v6213 = vpop.f32.mrb[0].mxu0
        %6214 = vmatprep.mubr.f32.mxu0 0.0
        %6215 = vmatmul.mubr.f32.gmra.mrb[0].mxu0 %v4906
        %v6216 = vpop.f32.mrb[0].mxu0
        %v6217 = vadd.f32 0.0, %v6216
        %v6218 = vpop.f32.mrb[0].mxu0
        %6219 = vmatprep.mubr.f32.mxu0 0.0
        %6220 = vmatmul.mubr.f32.gmra.mrb[0].mxu0 %v4909
        %v6221 = vpop.f32.mrb[0].mxu0
        %v6222 = vadd.f32 0.0, %v6221
        %v6223 = vpop.f32.mrb[0].mxu0
        %6224 = vmatprep.mubr.f32.mxu0 0.0
        %6225 = vmatmul.mubr.f32.gmra.mrb[0].mxu0 %v4912
        %v6226 = vpop.f32.mrb[0].mxu0
        %v6227 = vadd.f32 0.0, %v6226
        %v6228 = vpop.f32.mrb[0].mxu0
        %6229 = vmatprep.mubr.f32.mxu0 0.0
        %6230 = vmatmul.mubr.f32.gmra.mrb[0].mxu0 %v4915
        %v6231 = vpop.f32.mrb[0].mxu0
        %v6232 = vadd.f32 0.0, %v6231
        %v6233 = vpop.f32.mrb[0].mxu0
        %6234 = vmatprep.mubr.f32.mxu0 0.0
        %6235 = vmatmul.mubr.f32.gmra.mrb[0].mxu0 %v4918
        %v6236 = vpop.f32.mrb[0].mxu0
        %v6237 = vadd.f32 0.0, %v6236
        %v6238 = vpop.f32.mrb[0].mxu0
        %6239 = vmatprep.mubr.f32.mxu0 0.0
        %6240 = vmatmul.mubr.f32.gmra.mrb[0].mxu0 %v4921
        %v6241 = vpop.f32.mrb[0].mxu0
        %v6242 = vadd.f32 0.0, %v6241
        %v6243 = vpop.f32.mrb[0].mxu0
        %6244 = vmatprep.mubr.f32.mxu0 0.0
        %6245 = vmatmul.mubr.f32.gmra.mrb[0].mxu0 %v4924
        %v6246 = vpop.f32.mrb[0].mxu0
        %v6247 = vadd.f32 0.0, %v6246
        %v6248 = vpop.f32.mrb[0].mxu0
        %6249 = vmatprep.mubr.f32.mxu0 0.0
        %6250 = vmatmul.mubr.f32.gmra.mrb[0].mxu0 %v4927
        %v6251 = vpop.f32.mrb[0].mxu0
        %v6252 = vadd.f32 0.0, %v6251
        %v6253 = vpop.f32.mrb[0].mxu0
        %6254 = vdwg.mxu0
        %v6255 = vmul.f32 %v6097, 1.442695
        %v6256 = vpow.pop %v6255
        %v6257 = vmul.f32 %v6102, 1.442695
        %v6258 = vpow.pop %v6257
        %v6259 = vmul.f32 %v6107, 1.442695
        %v6260 = vpow.pop %v6259
        %v6261 = vmul.f32 %v6112, 1.442695
        %v6262 = vpow.pop %v6261
        %v6263 = vmul.f32 %v6117, 1.442695
        %v6264 = vpow.pop %v6263
        %v6265 = vmul.f32 %v6122, 1.442695
        %v6266 = vpow.pop %v6265
        %v6267 = vmul.f32 %v6127, 1.442695
        %v6268 = vpow.pop %v6267
        %v6269 = vmul.f32 %v6132, 1.442695
        %v6270 = vpow.pop %v6269
        %v6271 = vmul.f32 %v6137, 1.442695
        %v6272 = vpow.pop %v6271
        %v6273 = vmul.f32 %v6142, 1.442695
        %v6274 = vpow.pop %v6273
        %v6275 = vmul.f32 %v6147, 1.442695
        %v6276 = vpow.pop %v6275
        %v6277 = vmul.f32 %v6152, 1.442695
        %v6278 = vpow.pop %v6277
        %v6279 = vmul.f32 %v6157, 1.442695
        %v6280 = vpow.pop %v6279
        %v6281 = vmul.f32 %v6162, 1.442695
        %v6282 = vpow.pop %v6281
        %v6283 = vmul.f32 %v6167, 1.442695
        %v6284 = vpow.pop %v6283
        %v6285 = vmul.f32 %v6172, 1.442695
        %v6286 = vpow.pop %v6285
        %v6287 = vmul.f32 %v6177, 1.442695
        %v6288 = vpow.pop %v6287
        %v6289 = vmul.f32 %v6182, 1.442695
        %v6290 = vpow.pop %v6289
        %v6291 = vmul.f32 %v6187, 1.442695
        %v6292 = vpow.pop %v6291
        %v6293 = vmul.f32 %v6192, 1.442695
        %v6294 = vpow.pop %v6293
        %v6295 = vmul.f32 %v6197, 1.442695
        %v6296 = vpow.pop %v6295
        %v6297 = vmul.f32 %v6202, 1.442695
        %v6298 = vpow.pop %v6297
        %v6299 = vmul.f32 %v6207, 1.442695
        %v6300 = vpow.pop %v6299
        %v6301 = vmul.f32 %v6212, 1.442695
        %v6302 = vpow.pop %v6301
        %v6303 = vmul.f32 %v6217, 1.442695
        %v6304 = vpow.pop %v6303
        %v6305 = vmul.f32 %v6222, 1.442695
        %v6306 = vpow.pop %v6305
        %v6307 = vmul.f32 %v6227, 1.442695
        %v6308 = vpow.pop %v6307
        %v6309 = vmul.f32 %v6232, 1.442695
        %v6310 = vpow.pop %v6309
        %v6311 = vmul.f32 %v6237, 1.442695
        %v6312 = vpow.pop %v6311
        %v6313 = vmul.f32 %v6242, 1.442695
        %v6314 = vpow.pop %v6313
        %v6315 = vmul.f32 %v6247, 1.442695
        %v6316 = vpow.pop %v6315
        %v6317 = vmul.f32 %v6252, 1.442695
        %v6318 = vpow.pop %v6317
        %6319 = vmatprep.subr.mxu0 0.0
        %6320 = vmatpush1.xpose.msra.mxu0 %v6256
        %6321 = vmatprep.subr.mxu0 0.0
        %6322 = vmatpush1.xpose.msra.mxu0 %v6258
        %6323 = vmatprep.subr.mxu0 0.0
        %6324 = vmatpush1.xpose.msra.mxu0 %v6260
        %6325 = vmatprep.subr.mxu0 0.0
        %6326 = vmatpush1.xpose.msra.mxu0 %v6262
        %6327 = vmatprep.subr.mxu0 0.0
        %6328 = vmatpush1.xpose.msra.mxu0 %v6264
        %6329 = vmatprep.subr.mxu0 0.0
        %6330 = vmatpush1.xpose.msra.mxu0 %v6266
        %6331 = vmatprep.subr.mxu0 0.0
        %6332 = vmatpush1.xpose.msra.mxu0 %v6268
        %6333 = vmatprep.subr.mxu0 0.0
        %6334 = vmatpush1.xpose.msra.mxu0 %v6270
        %6335 = vmatprep.subr.mxu0 0.0
        %6336 = vmatpush1.xpose.msra.mxu0 %v6272
        %6337 = vmatprep.subr.mxu0 0.0
        %6338 = vmatpush1.xpose.msra.mxu0 %v6274
        %6339 = vmatprep.subr.mxu0 0.0
        %6340 = vmatpush1.xpose.msra.mxu0 %v6276
        %6341 = vmatprep.subr.mxu0 0.0
        %6342 = vmatpush1.xpose.msra.mxu0 %v6278
        %6343 = vmatprep.subr.mxu0 0.0
        %6344 = vmatpush1.xpose.msra.mxu0 %v6280
        %6345 = vmatprep.subr.mxu0 0.0
        %6346 = vmatpush1.xpose.msra.mxu0 %v6282
        %6347 = vmatprep.subr.mxu0 0.0
        %6348 = vmatpush1.xpose.msra.mxu0 %v6284
        %6349 = vmatprep.subr.mxu0 0.0
        %6350 = vmatpush1.xpose.msra.mxu0 %v6286
        %6351 = vmatprep.subr.mxu0 0.0
        %6352 = vmatpush1.xpose.msra.mxu0 %v6288
        %6353 = vmatprep.subr.mxu0 0.0
        %6354 = vmatpush1.xpose.msra.mxu0 %v6290
        %6355 = vmatprep.subr.mxu0 0.0
        %6356 = vmatpush1.xpose.msra.mxu0 %v6292
        %6357 = vmatprep.subr.mxu0 0.0
        %6358 = vmatpush1.xpose.msra.mxu0 %v6294
        %6359 = vmatprep.subr.mxu0 0.0
        %6360 = vmatpush1.xpose.msra.mxu0 %v6296
        %6361 = vmatprep.subr.mxu0 0.0
        %6362 = vmatpush1.xpose.msra.mxu0 %v6298
        %6363 = vmatprep.subr.mxu0 0.0
        %6364 = vmatpush1.xpose.msra.mxu0 %v6300
        %6365 = vmatprep.subr.mxu0 0.0
        %6366 = vmatpush1.xpose.msra.mxu0 %v6302
        %6367 = vmatprep.subr.mxu0 0.0
        %6368 = vmatpush1.xpose.msra.mxu0 %v6304
        %6369 = vmatprep.subr.mxu0 0.0
        %6370 = vmatpush1.xpose.msra.mxu0 %v6306
        %6371 = vmatprep.subr.mxu0 0.0
        %6372 = vmatpush1.xpose.msra.mxu0 %v6308
        %6373 = vmatprep.subr.mxu0 0.0
        %6374 = vmatpush1.xpose.msra.mxu0 %v6310
        %6375 = vmatprep.subr.mxu0 0.0
        %6376 = vmatpush1.xpose.msra.mxu0 %v6312
        %6377 = vmatprep.subr.mxu0 0.0
        %6378 = vmatpush1.xpose.msra.mxu0 %v6314
        %6379 = vmatprep.subr.mxu0 0.0
        %6380 = vmatpush1.xpose.msra.mxu0 %v6316
        %6381 = vmatprep.subr.mxu0 0.0
        %6382 = vmatpush1.xpose.msra.mxu0 %v6318
        %6383 = vmatprep.mubr.f32.mxu0 0.0
        %6384 = vmatmul.mubr.f32.gmra.mrb[0].mxu0 %v6026
        %v6385 = vpop.f32.mrb[0].mxu0
        %v6386 = vadd.f32 0.0, %v6385
        %v6387 = vpop.f32.mrb[0].mxu0
        %v6388 = vadd.f32 0.0, %v6387
        %6389 = vdwg.mxu0
        %v6390 = vadd.f32 %v6023, %v6386
        %v6391 = vadd.f32 %v6024, %v6388
        %v6392 = vrcp.pop %v6390
        %v6393 = vrcp.pop %v6391
        %v6396 = vrot.slane %v6392, 1
        %v6397 = vrot.slane %v6393, 1
        %v6400 = vmul.f32 %v6390, %v6396
        %v6401 = vmul.f32 %v6391, %v6397
        %v6402 = vld [vmem:[#allocation13] sm:$0x3f]
        %v6403 = vpack.c.bf16 %v6400, %v6400
        %v6404 = vpack.c.bf16 %v6401, %v6401
        %v6405 = vld [vmem:[%s250] sm:$0xff]
        %v6406 = vld [vmem:[%s250 + $0x8] sm:$0xff]
        %v6407 = vld [vmem:[%s250 + $0x10] sm:$0xff]
        %v6408 = vld [vmem:[%s250 + $0x18] sm:$0xff]
        %v6409 = vld [vmem:[%s250 + $0x20] sm:$0xff]
        %v6410 = vld [vmem:[%s250 + $0x28] sm:$0xff]
        %v6411 = vld [vmem:[%s250 + $0x30] sm:$0xff]
        %v6412 = vld [vmem:[%s250 + $0x38] sm:$0xff]
        %v6413 = vld [vmem:[%s250 + $0x40] sm:$0xff]
        %v6414 = vld [vmem:[%s250 + $0x48] sm:$0xff]
        %v6415 = vld [vmem:[%s250 + $0x50] sm:$0xff]
        %v6416 = vld [vmem:[%s250 + $0x58] sm:$0xff]
        %v6417 = vld [vmem:[%s250 + $0x60] sm:$0xff]
        %v6418 = vld [vmem:[%s250 + $0x68] sm:$0xff]
        %v6419 = vld [vmem:[%s250 + $0x70] sm:$0xff]
        %v6420 = vld [vmem:[%s250 + $0x78] sm:$0xff]
        %v6421 = vld [vmem:[%s250 + $0x80] sm:$0xff]
        %v6422 = vld [vmem:[%s250 + $0x88] sm:$0xff]
        %v6423 = vld [vmem:[%s250 + $0x90] sm:$0xff]
        %v6424 = vld [vmem:[%s250 + $0x98] sm:$0xff]
        %v6425 = vld [vmem:[%s250 + $0xa0] sm:$0xff]
        %v6426 = vld [vmem:[%s250 + $0xa8] sm:$0xff]
        %v6427 = vld [vmem:[%s250 + $0xb0] sm:$0xff]
        %v6428 = vld [vmem:[%s250 + $0xb8] sm:$0xff]
        %v6429 = vld [vmem:[%s250 + $0xc0] sm:$0xff]
        %v6430 = vld [vmem:[%s250 + $0xc8] sm:$0xff]
        %v6431 = vld [vmem:[%s250 + $0xd0] sm:$0xff]
        %v6432 = vld [vmem:[%s250 + $0xd8] sm:$0xff]
        %v6433 = vld [vmem:[%s250 + $0xe0] sm:$0xff]
        %v6434 = vld [vmem:[%s250 + $0xe8] sm:$0xff]
        %v6435 = vld [vmem:[%s250 + $0xf0] sm:$0xff]
        %v6436 = vld [vmem:[%s250 + $0xf8] sm:$0xff]
        %v6437 = vld [vmem:[%s250 + $0x100] sm:$0xff]
        %v6438 = vld [vmem:[%s250 + $0x108] sm:$0xff]
        %v6439 = vld [vmem:[%s250 + $0x110] sm:$0xff]
        %v6440 = vld [vmem:[%s250 + $0x118] sm:$0xff]
        %v6441 = vld [vmem:[%s250 + $0x120] sm:$0xff]
        %v6442 = vld [vmem:[%s250 + $0x128] sm:$0xff]
        %v6443 = vld [vmem:[%s250 + $0x130] sm:$0xff]
        %v6444 = vld [vmem:[%s250 + $0x138] sm:$0xff]
        %v6445 = vld [vmem:[%s250 + $0x140] sm:$0xff]
        %v6446 = vld [vmem:[%s250 + $0x148] sm:$0xff]
        %v6447 = vld [vmem:[%s250 + $0x150] sm:$0xff]
        %v6448 = vld [vmem:[%s250 + $0x158] sm:$0xff]
        %v6449 = vld [vmem:[%s250 + $0x160] sm:$0xff]
        %v6450 = vld [vmem:[%s250 + $0x168] sm:$0xff]
        %v6451 = vld [vmem:[%s250 + $0x170] sm:$0xff]
        %v6452 = vld [vmem:[%s250 + $0x178] sm:$0xff]
        %v6453 = vld [vmem:[%s250 + $0x180] sm:$0xff]
        %v6454 = vld [vmem:[%s250 + $0x188] sm:$0xff]
        %v6455 = vld [vmem:[%s250 + $0x190] sm:$0xff]
        %v6456 = vld [vmem:[%s250 + $0x198] sm:$0xff]
        %v6457 = vld [vmem:[%s250 + $0x1a0] sm:$0xff]
        %v6458 = vld [vmem:[%s250 + $0x1a8] sm:$0xff]
        %v6459 = vld [vmem:[%s250 + $0x1b0] sm:$0xff]
        %v6460 = vld [vmem:[%s250 + $0x1b8] sm:$0xff]
        %v6461 = vld [vmem:[%s250 + $0x1c0] sm:$0xff]
        %v6462 = vld [vmem:[%s250 + $0x1c8] sm:$0xff]
        %v6463 = vld [vmem:[%s250 + $0x1d0] sm:$0xff]
        %v6464 = vld [vmem:[%s250 + $0x1d8] sm:$0xff]
        %v6465 = vld [vmem:[%s250 + $0x1e0] sm:$0xff]
        %v6466 = vld [vmem:[%s250 + $0x1e8] sm:$0xff]
        %v6467 = vld [vmem:[%s250 + $0x1f0] sm:$0xff]
        %v6468 = vld [vmem:[%s250 + $0x1f8] sm:$0xff]
        %v6469 = vld [vmem:[%s250 + $0x200] sm:$0xff]
        %v6470 = vld [vmem:[%s250 + $0x208] sm:$0xff]
        %v6471 = vld [vmem:[%s250 + $0x210] sm:$0xff]
        %v6472 = vld [vmem:[%s250 + $0x218] sm:$0xff]
        %v6473 = vld [vmem:[%s250 + $0x220] sm:$0xff]
        %v6474 = vld [vmem:[%s250 + $0x228] sm:$0xff]
        %v6475 = vld [vmem:[%s250 + $0x230] sm:$0xff]
        %v6476 = vld [vmem:[%s250 + $0x238] sm:$0xff]
        %v6477 = vld [vmem:[%s250 + $0x240] sm:$0xff]
        %v6478 = vld [vmem:[%s250 + $0x248] sm:$0xff]
        %v6479 = vld [vmem:[%s250 + $0x250] sm:$0xff]
        %v6480 = vld [vmem:[%s250 + $0x258] sm:$0xff]
        %v6481 = vld [vmem:[%s250 + $0x260] sm:$0xff]
        %v6482 = vld [vmem:[%s250 + $0x268] sm:$0xff]
        %v6483 = vld [vmem:[%s250 + $0x270] sm:$0xff]
        %v6484 = vld [vmem:[%s250 + $0x278] sm:$0xff]
        %v6485 = vld [vmem:[%s250 + $0x280] sm:$0xff]
        %v6486 = vld [vmem:[%s250 + $0x288] sm:$0xff]
        %v6487 = vld [vmem:[%s250 + $0x290] sm:$0xff]
        %v6488 = vld [vmem:[%s250 + $0x298] sm:$0xff]
        %v6489 = vld [vmem:[%s250 + $0x2a0] sm:$0xff]
        %v6490 = vld [vmem:[%s250 + $0x2a8] sm:$0xff]
        %v6491 = vld [vmem:[%s250 + $0x2b0] sm:$0xff]
        %v6492 = vld [vmem:[%s250 + $0x2b8] sm:$0xff]
        %v6493 = vld [vmem:[%s250 + $0x2c0] sm:$0xff]
        %v6494 = vld [vmem:[%s250 + $0x2c8] sm:$0xff]
        %v6495 = vld [vmem:[%s250 + $0x2d0] sm:$0xff]
        %v6496 = vld [vmem:[%s250 + $0x2d8] sm:$0xff]
        %v6497 = vld [vmem:[%s250 + $0x2e0] sm:$0xff]
        %v6498 = vld [vmem:[%s250 + $0x2e8] sm:$0xff]
        %v6499 = vld [vmem:[%s250 + $0x2f0] sm:$0xff]
        %v6500 = vld [vmem:[%s250 + $0x2f8] sm:$0xff]
        %v6597 = vunpack.c.l.b16 %v6405
        %v6598 = vunpack.c.h.b16 %v6405
        %v6599 = vunpack.c.l.b16 %v6406
        %v6600 = vunpack.c.h.b16 %v6406
        %v6601 = vunpack.c.l.b16 %v6407
        %v6602 = vunpack.c.h.b16 %v6407
        %v6603 = vunpack.c.l.b16 %v6408
        %v6604 = vunpack.c.h.b16 %v6408
        %v6605 = vunpack.c.l.b16 %v6409
        %v6606 = vunpack.c.h.b16 %v6409
        %v6607 = vunpack.c.l.b16 %v6410
        %v6608 = vunpack.c.h.b16 %v6410
        %v6609 = vunpack.c.l.b16 %v6411
        %v6610 = vunpack.c.h.b16 %v6411
        %v6611 = vunpack.c.l.b16 %v6412
        %v6612 = vunpack.c.h.b16 %v6412
        %v6613 = vunpack.c.l.b16 %v6413
        %v6614 = vunpack.c.h.b16 %v6413
        %v6615 = vunpack.c.l.b16 %v6414
        %v6616 = vunpack.c.h.b16 %v6414
        %v6617 = vunpack.c.l.b16 %v6415
        %v6618 = vunpack.c.h.b16 %v6415
        %v6619 = vunpack.c.l.b16 %v6416
        %v6620 = vunpack.c.h.b16 %v6416
        %v6621 = vunpack.c.l.b16 %v6417
        %v6622 = vunpack.c.h.b16 %v6417
        %v6623 = vunpack.c.l.b16 %v6418
        %v6624 = vunpack.c.h.b16 %v6418
        %v6625 = vunpack.c.l.b16 %v6419
        %v6626 = vunpack.c.h.b16 %v6419
        %v6627 = vunpack.c.l.b16 %v6420
        %v6628 = vunpack.c.h.b16 %v6420
        %v6629 = vunpack.c.l.b16 %v6421
        %v6630 = vunpack.c.h.b16 %v6421
        %v6631 = vunpack.c.l.b16 %v6422
        %v6632 = vunpack.c.h.b16 %v6422
        %v6633 = vunpack.c.l.b16 %v6423
        %v6634 = vunpack.c.h.b16 %v6423
        %v6635 = vunpack.c.l.b16 %v6424
        %v6636 = vunpack.c.h.b16 %v6424
        %v6637 = vunpack.c.l.b16 %v6425
        %v6638 = vunpack.c.h.b16 %v6425
        %v6639 = vunpack.c.l.b16 %v6426
        %v6640 = vunpack.c.h.b16 %v6426
        %v6641 = vunpack.c.l.b16 %v6427
        %v6642 = vunpack.c.h.b16 %v6427
        %v6643 = vunpack.c.l.b16 %v6428
        %v6644 = vunpack.c.h.b16 %v6428
        %v6645 = vunpack.c.l.b16 %v6429
        %v6646 = vunpack.c.h.b16 %v6429
        %v6647 = vunpack.c.l.b16 %v6430
        %v6648 = vunpack.c.h.b16 %v6430
        %v6649 = vunpack.c.l.b16 %v6431
        %v6650 = vunpack.c.h.b16 %v6431
        %v6651 = vunpack.c.l.b16 %v6432
        %v6652 = vunpack.c.h.b16 %v6432
        %v6653 = vunpack.c.l.b16 %v6433
        %v6654 = vunpack.c.h.b16 %v6433
        %v6655 = vunpack.c.l.b16 %v6434
        %v6656 = vunpack.c.h.b16 %v6434
        %v6657 = vunpack.c.l.b16 %v6435
        %v6658 = vunpack.c.h.b16 %v6435
        %v6659 = vunpack.c.l.b16 %v6436
        %v6660 = vunpack.c.h.b16 %v6436
        %v6661 = vunpack.c.l.b16 %v6437
        %v6662 = vunpack.c.h.b16 %v6437
        %v6663 = vunpack.c.l.b16 %v6438
        %v6664 = vunpack.c.h.b16 %v6438
        %v6665 = vunpack.c.l.b16 %v6439
        %v6666 = vunpack.c.h.b16 %v6439
        %v6667 = vunpack.c.l.b16 %v6440
        %v6668 = vunpack.c.h.b16 %v6440
        %v6669 = vunpack.c.l.b16 %v6441
        %v6670 = vunpack.c.h.b16 %v6441
        %v6671 = vunpack.c.l.b16 %v6442
        %v6672 = vunpack.c.h.b16 %v6442
        %v6673 = vunpack.c.l.b16 %v6443
        %v6674 = vunpack.c.h.b16 %v6443
        %v6675 = vunpack.c.l.b16 %v6444
        %v6676 = vunpack.c.h.b16 %v6444
        %v6677 = vunpack.c.l.b16 %v6445
        %v6678 = vunpack.c.h.b16 %v6445
        %v6679 = vunpack.c.l.b16 %v6446
        %v6680 = vunpack.c.h.b16 %v6446
        %v6681 = vunpack.c.l.b16 %v6447
        %v6682 = vunpack.c.h.b16 %v6447
        %v6683 = vunpack.c.l.b16 %v6448
        %v6684 = vunpack.c.h.b16 %v6448
        %v6685 = vunpack.c.l.b16 %v6449
        %v6686 = vunpack.c.h.b16 %v6449
        %v6687 = vunpack.c.l.b16 %v6450
        %v6688 = vunpack.c.h.b16 %v6450
        %v6689 = vunpack.c.l.b16 %v6451
        %v6690 = vunpack.c.h.b16 %v6451
        %v6691 = vunpack.c.l.b16 %v6452
        %v6692 = vunpack.c.h.b16 %v6452
        %v6693 = vunpack.c.l.b16 %v6453
        %v6694 = vunpack.c.h.b16 %v6453
        %v6695 = vunpack.c.l.b16 %v6454
        %v6696 = vunpack.c.h.b16 %v6454
        %v6697 = vunpack.c.l.b16 %v6455
        %v6698 = vunpack.c.h.b16 %v6455
        %v6699 = vunpack.c.l.b16 %v6456
        %v6700 = vunpack.c.h.b16 %v6456
        %v6701 = vunpack.c.l.b16 %v6457
        %v6702 = vunpack.c.h.b16 %v6457
        %v6703 = vunpack.c.l.b16 %v6458
        %v6704 = vunpack.c.h.b16 %v6458
        %v6705 = vunpack.c.l.b16 %v6459
        %v6706 = vunpack.c.h.b16 %v6459
        %v6707 = vunpack.c.l.b16 %v6460
        %v6708 = vunpack.c.h.b16 %v6460
        %v6709 = vunpack.c.l.b16 %v6461
        %v6710 = vunpack.c.h.b16 %v6461
        %v6711 = vunpack.c.l.b16 %v6462
        %v6712 = vunpack.c.h.b16 %v6462
        %v6713 = vunpack.c.l.b16 %v6463
        %v6714 = vunpack.c.h.b16 %v6463
        %v6715 = vunpack.c.l.b16 %v6464
        %v6716 = vunpack.c.h.b16 %v6464
        %v6717 = vunpack.c.l.b16 %v6465
        %v6718 = vunpack.c.h.b16 %v6465
        %v6719 = vunpack.c.l.b16 %v6466
        %v6720 = vunpack.c.h.b16 %v6466
        %v6721 = vunpack.c.l.b16 %v6467
        %v6722 = vunpack.c.h.b16 %v6467
        %v6723 = vunpack.c.l.b16 %v6468
        %v6724 = vunpack.c.h.b16 %v6468
        %v6725 = vunpack.c.l.b16 %v6469
        %v6726 = vunpack.c.h.b16 %v6469
        %v6727 = vunpack.c.l.b16 %v6470
        %v6728 = vunpack.c.h.b16 %v6470
        %v6729 = vunpack.c.l.b16 %v6471
        %v6730 = vunpack.c.h.b16 %v6471
        %v6731 = vunpack.c.l.b16 %v6472
        %v6732 = vunpack.c.h.b16 %v6472
        %v6733 = vunpack.c.l.b16 %v6473
        %v6734 = vunpack.c.h.b16 %v6473
        %v6735 = vunpack.c.l.b16 %v6474
        %v6736 = vunpack.c.h.b16 %v6474
        %v6737 = vunpack.c.l.b16 %v6475
        %v6738 = vunpack.c.h.b16 %v6475
        %v6739 = vunpack.c.l.b16 %v6476
        %v6740 = vunpack.c.h.b16 %v6476
        %v6741 = vunpack.c.l.b16 %v6477
        %v6742 = vunpack.c.h.b16 %v6477
        %v6743 = vunpack.c.l.b16 %v6478
        %v6744 = vunpack.c.h.b16 %v6478
        %v6745 = vunpack.c.l.b16 %v6479
        %v6746 = vunpack.c.h.b16 %v6479
        %v6747 = vunpack.c.l.b16 %v6480
        %v6748 = vunpack.c.h.b16 %v6480
        %v6749 = vunpack.c.l.b16 %v6481
        %v6750 = vunpack.c.h.b16 %v6481
        %v6751 = vunpack.c.l.b16 %v6482
        %v6752 = vunpack.c.h.b16 %v6482
        %v6753 = vunpack.c.l.b16 %v6483
        %v6754 = vunpack.c.h.b16 %v6483
        %v6755 = vunpack.c.l.b16 %v6484
        %v6756 = vunpack.c.h.b16 %v6484
        %v6757 = vunpack.c.l.b16 %v6485
        %v6758 = vunpack.c.h.b16 %v6485
        %v6759 = vunpack.c.l.b16 %v6486
        %v6760 = vunpack.c.h.b16 %v6486
        %v6761 = vunpack.c.l.b16 %v6487
        %v6762 = vunpack.c.h.b16 %v6487
        %v6763 = vunpack.c.l.b16 %v6488
        %v6764 = vunpack.c.h.b16 %v6488
        %v6765 = vunpack.c.l.b16 %v6489
        %v6766 = vunpack.c.h.b16 %v6489
        %v6767 = vunpack.c.l.b16 %v6490
        %v6768 = vunpack.c.h.b16 %v6490
        %v6769 = vunpack.c.l.b16 %v6491
        %v6770 = vunpack.c.h.b16 %v6491
        %v6771 = vunpack.c.l.b16 %v6492
        %v6772 = vunpack.c.h.b16 %v6492
        %v6773 = vunpack.c.l.b16 %v6493
        %v6774 = vunpack.c.h.b16 %v6493
        %v6775 = vunpack.c.l.b16 %v6494
        %v6776 = vunpack.c.h.b16 %v6494
        %v6777 = vunpack.c.l.b16 %v6495
        %v6778 = vunpack.c.h.b16 %v6495
        %v6779 = vunpack.c.l.b16 %v6496
        %v6780 = vunpack.c.h.b16 %v6496
        %v6781 = vunpack.c.l.b16 %v6497
        %v6782 = vunpack.c.h.b16 %v6497
        %v6783 = vunpack.c.l.b16 %v6498
        %v6784 = vunpack.c.h.b16 %v6498
        %v6785 = vunpack.c.l.b16 %v6499
        %v6786 = vunpack.c.h.b16 %v6499
        %v6787 = vunpack.c.l.b16 %v6500
        %v6788 = vunpack.c.h.b16 %v6500
        %v6789 = vpack.c.b16 %v6603, %v6597
        %v6790 = vpack.c.b16 %v6604, %v6598
        %v6791 = vpack.c.b16 %v6605, %v6599
        %v6792 = vpack.c.b16 %v6606, %v6600
        %v6793 = vpack.c.b16 %v6607, %v6601
        %v6794 = vpack.c.b16 %v6608, %v6602
        %v6795 = vpack.c.b16 %v6615, %v6609
        %v6796 = vpack.c.b16 %v6616, %v6610
        %v6797 = vpack.c.b16 %v6617, %v6611
        %v6798 = vpack.c.b16 %v6618, %v6612
        %v6799 = vpack.c.b16 %v6619, %v6613
        %v6800 = vpack.c.b16 %v6620, %v6614
        %v6801 = vpack.c.b16 %v6627, %v6621
        %v6802 = vpack.c.b16 %v6628, %v6622
        %v6803 = vpack.c.b16 %v6629, %v6623
        %v6804 = vpack.c.b16 %v6630, %v6624
        %v6805 = vpack.c.b16 %v6631, %v6625
        %v6806 = vpack.c.b16 %v6632, %v6626
        %v6807 = vpack.c.b16 %v6639, %v6633
        %v6808 = vpack.c.b16 %v6640, %v6634
        %v6809 = vpack.c.b16 %v6641, %v6635
        %v6810 = vpack.c.b16 %v6642, %v6636
        %v6811 = vpack.c.b16 %v6643, %v6637
        %v6812 = vpack.c.b16 %v6644, %v6638
        %v6813 = vpack.c.b16 %v6651, %v6645
        %v6814 = vpack.c.b16 %v6652, %v6646
        %v6815 = vpack.c.b16 %v6653, %v6647
        %v6816 = vpack.c.b16 %v6654, %v6648
        %v6817 = vpack.c.b16 %v6655, %v6649
        %v6818 = vpack.c.b16 %v6656, %v6650
        %v6819 = vpack.c.b16 %v6663, %v6657
        %v6820 = vpack.c.b16 %v6664, %v6658
        %v6821 = vpack.c.b16 %v6665, %v6659
        %v6822 = vpack.c.b16 %v6666, %v6660
        %v6823 = vpack.c.b16 %v6667, %v6661
        %v6824 = vpack.c.b16 %v6668, %v6662
        %v6825 = vpack.c.b16 %v6675, %v6669
        %v6826 = vpack.c.b16 %v6676, %v6670
        %v6827 = vpack.c.b16 %v6677, %v6671
        %v6828 = vpack.c.b16 %v6678, %v6672
        %v6829 = vpack.c.b16 %v6679, %v6673
        %v6830 = vpack.c.b16 %v6680, %v6674
        %v6831 = vpack.c.b16 %v6687, %v6681
        %v6832 = vpack.c.b16 %v6688, %v6682
        %v6833 = vpack.c.b16 %v6689, %v6683
        %v6834 = vpack.c.b16 %v6690, %v6684
        %v6835 = vpack.c.b16 %v6691, %v6685
        %v6836 = vpack.c.b16 %v6692, %v6686
        %v6837 = vpack.c.b16 %v6699, %v6693
        %v6838 = vpack.c.b16 %v6700, %v6694
        %v6839 = vpack.c.b16 %v6701, %v6695
        %v6840 = vpack.c.b16 %v6702, %v6696
        %v6841 = vpack.c.b16 %v6703, %v6697
        %v6842 = vpack.c.b16 %v6704, %v6698
        %v6843 = vpack.c.b16 %v6711, %v6705
        %v6844 = vpack.c.b16 %v6712, %v6706
        %v6845 = vpack.c.b16 %v6713, %v6707
        %v6846 = vpack.c.b16 %v6714, %v6708
        %v6847 = vpack.c.b16 %v6715, %v6709
        %v6848 = vpack.c.b16 %v6716, %v6710
        %v6849 = vpack.c.b16 %v6723, %v6717
        %v6850 = vpack.c.b16 %v6724, %v6718
        %v6851 = vpack.c.b16 %v6725, %v6719
        %v6852 = vpack.c.b16 %v6726, %v6720
        %v6853 = vpack.c.b16 %v6727, %v6721
        %v6854 = vpack.c.b16 %v6728, %v6722
        %v6855 = vpack.c.b16 %v6735, %v6729
        %v6856 = vpack.c.b16 %v6736, %v6730
        %v6857 = vpack.c.b16 %v6737, %v6731
        %v6858 = vpack.c.b16 %v6738, %v6732
        %v6859 = vpack.c.b16 %v6739, %v6733
        %v6860 = vpack.c.b16 %v6740, %v6734
        %v6861 = vpack.c.b16 %v6747, %v6741
        %v6862 = vpack.c.b16 %v6748, %v6742
        %v6863 = vpack.c.b16 %v6749, %v6743
        %v6864 = vpack.c.b16 %v6750, %v6744
        %v6865 = vpack.c.b16 %v6751, %v6745
        %v6866 = vpack.c.b16 %v6752, %v6746
        %v6867 = vpack.c.b16 %v6759, %v6753
        %v6868 = vpack.c.b16 %v6760, %v6754
        %v6869 = vpack.c.b16 %v6761, %v6755
        %v6870 = vpack.c.b16 %v6762, %v6756
        %v6871 = vpack.c.b16 %v6763, %v6757
        %v6872 = vpack.c.b16 %v6764, %v6758
        %v6873 = vpack.c.b16 %v6771, %v6765
        %v6874 = vpack.c.b16 %v6772, %v6766
        %v6875 = vpack.c.b16 %v6773, %v6767
        %v6876 = vpack.c.b16 %v6774, %v6768
        %v6877 = vpack.c.b16 %v6775, %v6769
        %v6878 = vpack.c.b16 %v6776, %v6770
        %v6879 = vpack.c.b16 %v6783, %v6777
        %v6880 = vpack.c.b16 %v6784, %v6778
        %v6881 = vpack.c.b16 %v6785, %v6779
        %v6882 = vpack.c.b16 %v6786, %v6780
        %v6883 = vpack.c.b16 %v6787, %v6781
        %v6884 = vpack.c.b16 %v6788, %v6782
        %6981 = vmatprep.subr.bf16.mxu0 %v6790
        %6982 = vmatpush1.bf16.msra.mxu0 %v6789
        %6983 = vmatprep.subr.bf16.mxu0 %v6796
        %6984 = vmatpush1.bf16.msra.mxu0 %v6795
        %6985 = vmatprep.subr.bf16.mxu0 %v6802
        %6986 = vmatpush1.bf16.msra.mxu0 %v6801
        %6987 = vmatprep.subr.bf16.mxu0 %v6808
        %6988 = vmatpush1.bf16.msra.mxu0 %v6807
        %6989 = vmatprep.subr.bf16.mxu0 %v6814
        %6990 = vmatpush1.bf16.msra.mxu0 %v6813
        %6991 = vmatprep.subr.bf16.mxu0 %v6820
        %6992 = vmatpush1.bf16.msra.mxu0 %v6819
        %6993 = vmatprep.subr.bf16.mxu0 %v6826
        %6994 = vmatpush1.bf16.msra.mxu0 %v6825
        %6995 = vmatprep.subr.bf16.mxu0 %v6832
        %6996 = vmatpush1.bf16.msra.mxu0 %v6831
        %6997 = vmatprep.subr.bf16.mxu0 %v6838
        %6998 = vmatpush1.bf16.msra.mxu0 %v6837
        %6999 = vmatprep.subr.bf16.mxu0 %v6844
        %7000 = vmatpush1.bf16.msra.mxu0 %v6843
        %7001 = vmatprep.subr.bf16.mxu0 %v6850
        %7002 = vmatpush1.bf16.msra.mxu0 %v6849
        %7003 = vmatprep.subr.bf16.mxu0 %v6856
        %7004 = vmatpush1.bf16.msra.mxu0 %v6855
        %7005 = vmatprep.subr.bf16.mxu0 %v6862
        %7006 = vmatpush1.bf16.msra.mxu0 %v6861
        %7007 = vmatprep.subr.bf16.mxu0 %v6868
        %7008 = vmatpush1.bf16.msra.mxu0 %v6867
        %7009 = vmatprep.subr.bf16.mxu0 %v6874
        %7010 = vmatpush1.bf16.msra.mxu0 %v6873
        %7011 = vmatprep.subr.bf16.mxu0 %v6880
        %7012 = vmatpush1.bf16.msra.mxu0 %v6879
        %7013 = vmatprep.mubr.bf16.mxu0 %v6404
        %7014 = vmatmul.mubr.bf16.gmra.mrb[0].mxu0 %v6403
        %v7015 = vpop.f32.mrb[0].mxu0
        %v7016 = vadd.f32 0.0, %v7015
        %v7017 = vpop.f32.mrb[0].mxu0
        %v7018 = vadd.f32 0.0, %v7017
        %v7019 = vpop.f32.mrb[0].mxu0
        %v7020 = vpop.f32.mrb[0].mxu0
        %7021 = vdwg.mxu0
        %7022 = vmatprep.subr.bf16.mxu0 %v6792
        %7023 = vmatpush1.bf16.msra.mxu0 %v6791
        %7024 = vmatprep.subr.bf16.mxu0 %v6798
        %7025 = vmatpush1.bf16.msra.mxu0 %v6797
        %7026 = vmatprep.subr.bf16.mxu0 %v6804
        %7027 = vmatpush1.bf16.msra.mxu0 %v6803
        %7028 = vmatprep.subr.bf16.mxu0 %v6810
        %7029 = vmatpush1.bf16.msra.mxu0 %v6809
        %7030 = vmatprep.subr.bf16.mxu0 %v6816
        %7031 = vmatpush1.bf16.msra.mxu0 %v6815
        %7032 = vmatprep.subr.bf16.mxu0 %v6822
        %7033 = vmatpush1.bf16.msra.mxu0 %v6821
        %7034 = vmatprep.subr.bf16.mxu0 %v6828
        %7035 = vmatpush1.bf16.msra.mxu0 %v6827
        %7036 = vmatprep.subr.bf16.mxu0 %v6834
        %7037 = vmatpush1.bf16.msra.mxu0 %v6833
        %7038 = vmatprep.subr.bf16.mxu0 %v6840
        %7039 = vmatpush1.bf16.msra.mxu0 %v6839
        %7040 = vmatprep.subr.bf16.mxu0 %v6846
        %7041 = vmatpush1.bf16.msra.mxu0 %v6845
        %7042 = vmatprep.subr.bf16.mxu0 %v6852
        %7043 = vmatpush1.bf16.msra.mxu0 %v6851
        %7044 = vmatprep.subr.bf16.mxu0 %v6858
        %7045 = vmatpush1.bf16.msra.mxu0 %v6857
        %7046 = vmatprep.subr.bf16.mxu0 %v6864
        %7047 = vmatpush1.bf16.msra.mxu0 %v6863
        %7048 = vmatprep.subr.bf16.mxu0 %v6870
        %7049 = vmatpush1.bf16.msra.mxu0 %v6869
        %7050 = vmatprep.subr.bf16.mxu0 %v6876
        %7051 = vmatpush1.bf16.msra.mxu0 %v6875
        %7052 = vmatprep.subr.bf16.mxu0 %v6882
        %7053 = vmatpush1.bf16.msra.mxu0 %v6881
        %7054 = vmatprep.mubr.bf16.mxu0 %v6404
        %7055 = vmatmul.mubr.bf16.gmra.mrb[0].mxu0 %v6403
        %v7056 = vpop.f32.mrb[0].mxu0
        %v7057 = vadd.f32 0.0, %v7056
        %v7058 = vpop.f32.mrb[0].mxu0
        %v7059 = vadd.f32 0.0, %v7058
        %v7060 = vpop.f32.mrb[0].mxu0
        %v7061 = vpop.f32.mrb[0].mxu0
        %7062 = vdwg.mxu0
        %7063 = vmatprep.subr.bf16.mxu0 %v6794
        %7064 = vmatpush1.bf16.msra.mxu0 %v6793
        %7065 = vmatprep.subr.bf16.mxu0 %v6800
        %7066 = vmatpush1.bf16.msra.mxu0 %v6799
        %7067 = vmatprep.subr.bf16.mxu0 %v6806
        %7068 = vmatpush1.bf16.msra.mxu0 %v6805
        %7069 = vmatprep.subr.bf16.mxu0 %v6812
        %7070 = vmatpush1.bf16.msra.mxu0 %v6811
        %7071 = vmatprep.subr.bf16.mxu0 %v6818
        %7072 = vmatpush1.bf16.msra.mxu0 %v6817
        %7073 = vmatprep.subr.bf16.mxu0 %v6824
        %7074 = vmatpush1.bf16.msra.mxu0 %v6823
        %7075 = vmatprep.subr.bf16.mxu0 %v6830
        %7076 = vmatpush1.bf16.msra.mxu0 %v6829
        %7077 = vmatprep.subr.bf16.mxu0 %v6836
        %7078 = vmatpush1.bf16.msra.mxu0 %v6835
        %7079 = vmatprep.subr.bf16.mxu0 %v6842
        %7080 = vmatpush1.bf16.msra.mxu0 %v6841
        %7081 = vmatprep.subr.bf16.mxu0 %v6848
        %7082 = vmatpush1.bf16.msra.mxu0 %v6847
        %7083 = vmatprep.subr.bf16.mxu0 %v6854
        %7084 = vmatpush1.bf16.msra.mxu0 %v6853
        %7085 = vmatprep.subr.bf16.mxu0 %v6860
        %7086 = vmatpush1.bf16.msra.mxu0 %v6859
        %7087 = vmatprep.subr.bf16.mxu0 %v6866
        %7088 = vmatpush1.bf16.msra.mxu0 %v6865
        %7089 = vmatprep.subr.bf16.mxu0 %v6872
        %7090 = vmatpush1.bf16.msra.mxu0 %v6871
        %7091 = vmatprep.subr.bf16.mxu0 %v6878
        %7092 = vmatpush1.bf16.msra.mxu0 %v6877
        %7093 = vmatprep.subr.bf16.mxu0 %v6884
        %7094 = vmatpush1.bf16.msra.mxu0 %v6883
        %7095 = vmatprep.mubr.bf16.mxu0 %v6404
        %7096 = vmatmul.mubr.bf16.gmra.mrb[0].mxu0 %v6403
        %v7097 = vpop.f32.mrb[0].mxu0
        %v7098 = vadd.f32 0.0, %v7097
        %v7099 = vpop.f32.mrb[0].mxu0
        %v7100 = vadd.f32 0.0, %v7099
        %v7101 = vpop.f32.mrb[0].mxu0
        %v7102 = vpop.f32.mrb[0].mxu0
        %7103 = vdwg.mxu0
        %v7110 = vcombine.low %v7016, %v7018
        %v7111 = vcombine.low %v7057, %v7059
        %v7112 = vcombine.low %v7098, %v7100
        %v7114 = vunpack.c.l.s4 1966171168
        %v7115 = vunpack.c.0.s8 %v7114
        %v7116 = vlaneseq
        %v7117 = vshrl.u32 %v7116, 7
        %v7118 = vsub.s32 %v7115, %v7117
        %v7119 = vrot.slane %v7110, %v7118
        %v7121 = vunpack.c.l.s4 1966171168
        %v7122 = vunpack.c.0.s8 %v7121
        %v7123 = vlaneseq
        %v7124 = vshrl.u32 %v7123, 7
        %v7125 = vsub.s32 %v7122, %v7124
        %v7126 = vrot.slane %v7111, %v7125
        %v7128 = vunpack.c.l.s4 1966171168
        %v7129 = vunpack.c.0.s8 %v7128
        %v7130 = vlaneseq
        %v7131 = vshrl.u32 %v7130, 7
        %v7132 = vsub.s32 %v7129, %v7131
        %v7133 = vrot.slane %v7112, %v7132
        %v7134 = vcombine.low %v7119, %v7126
        %v7136 = vunpack.c.l.s4 1966171168
        %v7137 = vunpack.c.0.s8 %v7136
        %v7138 = vlaneseq
        %v7139 = vshrl.u32 %v7138, 7
        %v7140 = vsub.s32 %v7137, %v7139
        %v7141 = vrot.slane %v7134, %v7140
        %v7143 = vunpack.c.l.s4 1966171168
        %v7144 = vunpack.c.0.s8 %v7143
        %v7145 = vlaneseq
        %v7146 = vshrl.u32 %v7145, 7
        %v7147 = vsub.s32 %v7144, %v7146
        %v7148 = vrot.slane %v7133, %v7147
        %v7149 = vcombine.low %v7141, %v7148
        %v7151 = vadd.f32 %v6402, %v7149
        %v7152 = vlaneseq
        %vm7153 = vcmp.ge.s32.totalorder %v7152, 0
        %vm7154 = vcmp.lt.s32.totalorder %v7152, 768
        %vm7155 = vmand %vm7153, %vm7154
        %7156 = vst.msk [vmem:[#allocation13] sm:$0x3f] %vm7155, %v7151
        // Predicated region
        $region61: #{model_forward.1} parent=39 // pred_check
          %p7157 = pneg %p145
        $region62: #{model_forward.1} parent=39 // pred_check_branch
          %7159 = sbr.rel (%p7157) target = $region64
        $region63: #{model_forward.1} parent=39 // pred_region
          %s7161 = ssub.s32 96, 96
          %7162 = vsyncadd [#allocation7], %s7161
          %s7164 = sshll.u32 [#allocation13], 4
          %s7165 = int_to_ptr.vmem [resolvable:$true] %s7164
          %7167 = dma.vmem_to_hbm [thread:$0]  %s7165, 96, %s5, [#allocation7]
        $region64: #{model_forward.1} parent=39 // pred_fallthru
          _
        // Predicated region
        $region65: #{model_forward.1} parent=39 // pred_check
          %p7168 = pneg %p145
        $region66: #{model_forward.1} parent=39 // pred_check_branch
          %7170 = sbr.rel (%p7168) target = $region68
        $region67: #{model_forward.1} parent=39 // pred_region
          %7171 = dma.done [#allocation7], 96
        $region68: #{model_forward.1} parent=39 // pred_fallthru
          _
      $region40: #{model_forward.1} parent=5 // pred_fallthru
        _
      %p7172 = scmp.le.s32.totalorder 2, %s17
      // Predicated region
      $region69: #{model_forward.1} parent=5 // pred_check
        %p7173 = pneg %p7172
      $region70: #{model_forward.1} parent=5 // pred_check_branch
        %7175 = sbr.rel (%p7173) target = $region72
      $region71: #{model_forward.1} parent=5 // pred_region
        %s7176 = ssub.s32 %s17, 2
      $region72: #{model_forward.1} parent=5 // pred_fallthru
        _
    $region6: #{model_forward.1} parent=1 // loop_footer
      %s21 = sadd.s32 1, %s17
    $region7: #{model_forward.1} parent=1 // loop_footer_branch
      %16 = sbr.rel target = $region3
    $region8: #{model_forward.1} parent=1 // loop_exit
      _
    %7177 = vsyncpa [#allocation6], 1
    %s7178 = scalar_lea.sflag [#allocation6], 1
    %7179 = vsyncpa %s7178, 1
    %7180 = vsyncpa [#allocation9], 1
    %7181 = vsyncpa [#allocation12], 1
    %s7182 = scalar_lea.sflag [#allocation12], 1
    %7183 = vsyncpa %s7182, 1
    %7184 = vsyncpa [#allocation7], 1
    %s7185 = scalar_lea.sflag [#allocation7], 1
    %7186 = vsyncpa %s7185, 1

</llo_original>
